<compile_context>
chip_gen: v7x
topology: tpu7x:2x2x1
jax: 0.10.0
libtpu: 0.0.40
codegen_flags: <defaults>
</compile_context>

<pallas_src>
import math

import jax
import jax.numpy as jnp
import numpy as np
from jax.experimental import pallas as pl
from jax.experimental.pallas import tpu as pltpu

PREC = jax.lax.Precision.HIGHEST  # reference only


# --------------------------------------------------------------------------- #
# Kernel
# --------------------------------------------------------------------------- #
def make_lstm_classifier_kernel(BP, T, in_size, H, num_layers, num_labels):
    """Single-invocation (gridless) kernel.  BP = batch padded to a multiple of 8."""
    H2 = 2 * H
    H8 = 8 * H

    def kernel(*refs):
        # ---- unpack refs --------------------------------------------------
        x0_ref = refs[0]        # VMEM (T*BP, in_size) bf16 : forward-time row blocks
        slen_ref = refs[1]      # VMEM (BP, 1) f32 : clamped seqlen (pad rows = 0)
        idx = 2
        layer_w = []
        for _ in range(num_layers):
            # (W_ih_stack (D_l, 8H) bf16, W_hh_stack (2H, 8H) f32, bias (1, 8H) f32)
            layer_w.append((refs[idx], refs[idx + 1], refs[idx + 2]))
            idx += 3
        fcw_ref = refs[idx]          # VMEM (2H, num_labels) f32
        fcb_ref = refs[idx + 1]      # VMEM (1, num_labels) f32
        out_ref = refs[idx + 2]      # VMEM (BP, num_labels) f32
        gih_ref = refs[idx + 3]      # VMEM scratch (T*BP, 8H) f32 (hoisted projections)
        bufs = [refs[idx + 4], refs[idx + 5]] if num_layers > 1 else []

        # ---- hoisted constants (never on the recurrent critical path) -----
        # gate columns are interleaved [i_f i_b | f_f f_b | o_f o_b | g_f g_b]
        col8 = jax.lax.broadcasted_iota(jnp.int32, (BP, H8), 1)
        fwd_col8 = (col8 % H2) < H            # bool: column belongs to forward dir
        col2 = jax.lax.broadcasted_iota(jnp.int32, (BP, H2), 1)
        is_f_col = col2 < H                   # bool over the [h_fwd | h_bwd] layout
        slen = jnp.broadcast_to(slen_ref[...], (BP, H2))   # f32 seqlen per row/col
        slen_m1 = slen - 1.0

        last = jnp.zeros((BP, H2), jnp.float32)   # [last_fwd | last_bwd] at t = seqlen-1

        for l in range(num_layers):
            wih_ref, whh_ref, b_ref = layer_w[l]

            # ---- hoisted bulk input projection (bias folded), fwd-time order ----
            # ONE dense bf16 MXU matmul over all T timesteps (no zero-padded K).
            if l == 0:
                xin = x0_ref[...]                                   # already bf16
            else:
                xin = bufs[(l - 1) % 2][...].astype(jnp.bfloat16)   # (T*BP, 2H)
            gih_ref[...] = jnp.dot(xin, wih_ref[...],
                                   preferred_element_type=jnp.float32) + b_ref[...]

            whh = whh_ref[...]                       # (2H, 8H) f32, live across steps
            h = jnp.zeros((BP, H2), jnp.float32)     # [h_fwd | h_bwd]
            c = jnp.zeros((BP, H2), jnp.float32)     # [c_fwd | c_bwd]
            is_last_layer = (l == num_layers - 1)
            out_buf = None if is_last_layer else bufs[l % 2]

            # ---- fused bidirectional recurrence (static -> fully unrolled) ----
            # (T is small; for large T switch to lax.fori_loop with partial unroll.)
            for i in range(T):
                r0 = i * BP                # forward direction processes t = i
                r1 = (T - 1 - i) * BP      # backward direction processes t = T-1-i

                # input-projection gates: fwd columns from row block r0, bwd from r1
                g_in = jnp.where(fwd_col8,
                                 gih_ref[r0:r0 + BP, :],
                                 gih_ref[r1:r1 + BP, :])             # (BP, 8H)
                # f32 recurrent matmul: no per-step bf16 cast on the critical path
                gates = g_in + jnp.dot(h, whh,
                                       preferred_element_type=jnp.float32)

                # columns: [i_f i_b | f_f f_b | o_f o_b | g_f g_b]
                sig = jax.nn.sigmoid(gates[:, 0:3 * H2])      # contiguous sigmoid region
                i_g = sig[:, 0:H2]
                f_g = sig[:, H2:2 * H2]
                o_g = sig[:, 2 * H2:3 * H2]
                g_g = jnp.tanh(gates[:, 3 * H2:4 * H2])
                c_new = f_g * c + i_g * g_g
                h_new = o_g * jnp.tanh(c_new)

                # per-step validity computed from seqlen (no mask arrays in VMEM)
                t_here = jnp.where(is_f_col, float(i), float(T - 1 - i))
                valid = t_here < slen
                h = jnp.where(valid, h_new, h)       # freeze state outside valid range
                c = jnp.where(valid, c_new, c)

                if is_last_layer:
                    # online last-step capture: t == seqlen-1 per direction
                    last = jnp.where(t_here == slen_m1, h_new, last)
                else:
                    # next-layer input buffer in forward-time order [h_fwd(t) | h_bwd(t)]
                    h_out = jnp.where(valid, h_new, 0.0)   # padded positions -> 0
                    out_buf[r0:r0 + BP, 0:H] = h_out[:, 0:H]
                    out_buf[r1:r1 + BP, H:H2] = h_out[:, H:H2]

        # ---- FCN: Linear(2H -> num_labels) --------------------------------
        out_ref[...] = jnp.dot(last, fcw_ref[...],
                               preferred_element_type=jnp.float32) + fcb_ref[...]

    return kernel


# --------------------------------------------------------------------------- #
# Weight packing helpers (wrapper-side layout plumbing)
# --------------------------------------------------------------------------- #
_GATE_ORDER = (0, 1, 3, 2)   # PyTorch gate blocks (i, f, g, o) -> kernel order (i, f, o, g)


def _stack_ih(wf, wb, H):
    """wf, wb: (D, 4H) transposed per-direction input weights (PyTorch gate order i,f,g,o).
    Returns dense (D, 8H): cols [2pH:(2p+1)H] = gate p fwd, [(2p+1)H:(2p+2)H] = gate p bwd,
    with p over kernel gate order (i, f, o, g).  No zero padding."""
    d = wf.shape[0]
    out = jnp.zeros((d, 8 * H), jnp.float32)
    for p, g in enumerate(_GATE_ORDER):
        out = out.at[:, (2 * p) * H:(2 * p + 1) * H].set(wf[:, g * H:(g + 1) * H])
        out = out.at[:, (2 * p + 1) * H:(2 * p + 2) * H].set(wb[:, g * H:(g + 1) * H])
    return out


def _stack_hh(whf, whb, H):
    """whf, whb: (H, 4H) transposed recurrent weights.  Returns (2H, 8H) block-diagonal
    by direction: rows [0:H] (h_fwd) feed fwd columns, rows [H:2H] (h_bwd) feed bwd cols."""
    out = jnp.zeros((2 * H, 8 * H), jnp.float32)
    for p, g in enumerate(_GATE_ORDER):
        out = out.at[0:H, (2 * p) * H:(2 * p + 1) * H].set(whf[:, g * H:(g + 1) * H])
        out = out.at[H:2 * H, (2 * p + 1) * H:(2 * p + 2) * H].set(whb[:, g * H:(g + 1) * H])
    return out


def _stack_bias(bf, bb, H):
    """bf, bb: (4H,) per-direction biases (b_ih + b_hh).  Returns (1, 8H) interleaved."""
    parts = []
    for g in _GATE_ORDER:
        parts.append(bf[g * H:(g + 1) * H])
        parts.append(bb[g * H:(g + 1) * H])
    return jnp.concatenate(parts)[None, :]


def init_params(key, in_size, H, num_layers, num_labels):
    """Deterministic synthetic params, PyTorch-style uniform(-1/sqrt(H), 1/sqrt(H))."""
    std = 1.0 / math.sqrt(H)
    layers = []
    for l in range(num_layers):
        d_in = in_size if l == 0 else 2 * H
        dirs = []
        for _d in range(2):
            key, k1, k2, k3, k4 = jax.random.split(key, 5)
            w_ih = jax.random.uniform(k1, (4 * H, d_in), jnp.float32, -std, std)
            w_hh = jax.random.uniform(k2, (4 * H, H), jnp.float32, -std, std)
            b_ih = jax.random.uniform(k3, (4 * H,), jnp.float32, -std, std)
            b_hh = jax.random.uniform(k4, (4 * H,), jnp.float32, -std, std)
            dirs.append((w_ih, w_hh, b_ih, b_hh))
        layers.append(dirs)
    key, k1, k2 = jax.random.split(key, 3)
    bound = 1.0 / math.sqrt(2 * H)
    fc_w = jax.random.uniform(k1, (num_labels, 2 * H), jnp.float32, -bound, bound)
    fc_b = jax.random.uniform(k2, (num_labels,), jnp.float32, -bound, bound)
    return {"layers": layers, "fc_w": fc_w, "fc_b": fc_b}


# --------------------------------------------------------------------------- #
# Wrapper
# --------------------------------------------------------------------------- #
def lstm_classifier_forward(features, seqlen, params, H, num_layers, num_labels):
    """features: (B, in_size, T) f32 (PyTorch NCT); seqlen: (B,) int."""
    B, in_size, T = features.shape
    BP = ((B + 7) // 8) * 8                          # pad batch to full sublane tile
    x = jnp.transpose(features, (0, 2, 1)).astype(jnp.float32)       # (B, T, in_size)
    seqlen = jnp.minimum(seqlen.astype(jnp.int32), T)                 # torch.clamp(max=T)

    xp = jnp.zeros((BP, T, in_size), jnp.float32).at[:B].set(x)
    sp = jnp.zeros((BP,), jnp.int32).at[:B].set(seqlen)               # pad rows: seqlen=0

    # time-major flattening: row block t*BP..t*BP+BP-1 = timestep t (single fwd copy,
    # already bf16 -> no in-kernel cast for layer 0)
    xf = jnp.transpose(xp, (1, 0, 2)).reshape(T * BP, in_size).astype(jnp.bfloat16)
    slen = sp.astype(jnp.float32)[:, None]                            # (BP, 1)

    flat_inputs = [xf, slen]
    for dirs in params["layers"]:
        wih_f, whh_f, bih_f, bhh_f = dirs[0]
        wih_b, whh_b, bih_b, bhh_b = dirs[1]
        flat_inputs.append(_stack_ih(wih_f.T, wih_b.T, H).astype(jnp.bfloat16))
        flat_inputs.append(_stack_hh(whh_f.T, whh_b.T, H).astype(jnp.float32))
        flat_inputs.append(_stack_bias(bih_f + bhh_f, bih_b + bhh_b, H).astype(jnp.float32))
    flat_inputs.append(params["fc_w"].T.astype(jnp.float32))
    flat_inputs.append(params["fc_b"][None, :].astype(jnp.float32))

    kernel = make_lstm_classifier_kernel(BP, T, in_size, H, num_layers, num_labels)

    scratch_shapes = [pltpu.VMEM((T * BP, 8 * H), jnp.float32)]       # hoisted gate proj
    if num_layers > 1:
        scratch_shapes += [pltpu.VMEM((T * BP, 2 * H), jnp.float32)] * 2  # layer outputs

    # Explicit VMEM limit: scoped defaults are only 16 MiB (v5e) / 32 MiB (v6e, v7x).
    need = sum(a.size * a.dtype.itemsize for a in flat_inputs)
    need += BP * num_labels * 4
    need += T * BP * 8 * H * 4
    if num_layers > 1:
        need += 2 * T * BP * 2 * H * 4
    vmem_limit = int(min(max(2 * need + (2 << 20), 8 << 20), 48 << 20))

    out = pl.pallas_call(
        kernel,
        out_shape=jax.ShapeDtypeStruct((BP, num_labels), jnp.float32),
        in_specs=[pl.BlockSpec(memory_space=pltpu.MemorySpace.VMEM)] * len(flat_inputs),
        out_specs=pl.BlockSpec(memory_space=pltpu.MemorySpace.VMEM),
        scratch_shapes=scratch_shapes,
        compiler_params=pltpu.CompilerParams(vmem_limit_bytes=vmem_limit),
    )(*flat_inputs)

    # drop batch padding; match PyTorch final permute((0, 2, 1)) -> (B, num_labels, 1)
    return out[:B, :, None]


# --------------------------------------------------------------------------- #
# Pure-JAX reference (f32, mirrors PyTorch packed-LSTM semantics)
# --------------------------------------------------------------------------- #
def reference_forward(features, seqlen, params, H, num_layers, num_labels):
    B, in_size, T = features.shape
    x = jnp.transpose(features, (0, 2, 1)).astype(jnp.float32)
    seqlen = jnp.minimum(seqlen.astype(jnp.int32), T)

    def dot(a, b):
        return jnp.dot(a, b, precision=PREC, preferred_element_type=jnp.float32)

    inp = x
    for dirs in params["layers"]:
        outs = []
        for d, (w_ih, w_hh, b_ih, b_hh) in enumerate(dirs):
            wih, whh, bias = w_ih.T, w_hh.T, (b_ih + b_hh)[None, :]
            h = jnp.zeros((B, H), jnp.float32)
            c = jnp.zeros((B, H), jnp.float32)
            out = jnp.zeros((B, T, H), jnp.float32)
            t_order = range(T) if d == 0 else range(T - 1, -1, -1)
            for t in t_order:
                gates = dot(inp[:, t, :], wih) + dot(h, whh) + bias
                i_g = jax.nn.sigmoid(gates[:, 0:H])
                f_g = jax.nn.sigmoid(gates[:, H:2 * H])
                g_g = jnp.tanh(gates[:, 2 * H:3 * H])
                o_g = jax.nn.sigmoid(gates[:, 3 * H:4 * H])
                c_new = f_g * c + i_g * g_g
                h_new = o_g * jnp.tanh(c_new)
                valid = (t < seqlen)[:, None]
                out = out.at[:, t, :].set(jnp.where(valid, h_new, 0.0))
                h = jnp.where(valid, h_new, h)
                c = jnp.where(valid, c_new, c)
            outs.append(out)
        inp = jnp.concatenate(outs, axis=-1)

    last = inp[jnp.arange(B), seqlen - 1, :]
    logits = dot(last, params["fc_w"].T) + params["fc_b"][None, :]
    return logits[:, :, None]


if __name__ == "__main__":
    # Small shapes consistent with the module: batch=2, in_size=16, T=8, hidden=32,
    # 2 stacked bidirectional layers, 2 labels.
    B, in_size, T = 2, 16, 8
    H, num_layers, num_labels = 32, 2, 2

    key = jax.random.PRNGKey(0)
    kp, kx = jax.random.split(key)
    params = init_params(kp, in_size, H, num_layers, num_labels)

    features = jax.random.normal(kx, (B, in_size, T), jnp.float32)   # PyTorch NCT layout
    seqlen = jnp.array([8, 5], dtype=jnp.int32)

    out = lstm_classifier_forward(features, seqlen, params, H, num_layers, num_labels)
    out = jax.block_until_ready(out)

    ref = reference_forward(features, seqlen, params, H, num_layers, num_labels)
    # bf16 input projections (f32 accumulation, f32 recurrence) vs f32 HIGHEST reference.
    np.testing.assert_allclose(np.asarray(out), np.asarray(ref), atol=3e-2, rtol=3e-2)
    assert out.shape == (B, num_labels, 1)

    print("KERNEL_OK")
</pallas_src>

<mosaic_0001>
module attributes {stable_mosaic.version = 11 : i64} {
  func.func @kernel(%arg0: memref<64x16xbf16, #tpu.memory_space<vmem>>, %arg1: memref<8x1xf32, #tpu.memory_space<vmem>>, %arg2: memref<16x256xbf16, #tpu.memory_space<vmem>>, %arg3: memref<64x256xf32, #tpu.memory_space<vmem>>, %arg4: memref<1x256xf32, #tpu.memory_space<vmem>>, %arg5: memref<64x256xbf16, #tpu.memory_space<vmem>>, %arg6: memref<64x256xf32, #tpu.memory_space<vmem>>, %arg7: memref<1x256xf32, #tpu.memory_space<vmem>>, %arg8: memref<64x2xf32, #tpu.memory_space<vmem>>, %arg9: memref<1x2xf32, #tpu.memory_space<vmem>>, %arg10: memref<8x2xf32, #tpu.memory_space<vmem>>, %arg11: memref<64x256xf32, #tpu.memory_space<vmem>>, %arg12: memref<64x64xf32, #tpu.memory_space<vmem>>, %arg13: memref<64x64xf32, #tpu.memory_space<vmem>>) attributes {dimension_semantics = [], scalar_prefetch = 0 : i64, scratch_operands = 3 : i64, tpu.core_type = #tpu.core_type<tc>} {
    %0 = tpu.iota {dimensions = array<i32: 1>} : vector<8x256xi32>
    %c64_i32 = arith.constant 64 : i32
    %c0_i32 = arith.constant 0 : i32
    %1 = arith.cmpi eq, %c64_i32, %c0_i32 : i32
    %c1_i32 = arith.constant 1 : i32
    %2 = arith.select %1, %c1_i32, %c64_i32 : i32
    %3 = vector.broadcast %2 : i32 to vector<8x256xi32>
    %4 = arith.remsi %0, %3 : vector<8x256xi32>
    %c0_i32_0 = arith.constant 0 : i32
    %5 = vector.broadcast %c0_i32_0 : i32 to vector<8x256xi32>
    %6 = arith.cmpi ne, %4, %5 : vector<8x256xi32>
    %c0_i32_1 = arith.constant 0 : i32
    %7 = vector.broadcast %c0_i32_1 : i32 to vector<8x256xi32>
    %8 = arith.cmpi slt, %4, %7 : vector<8x256xi32>
    %c0_i32_2 = arith.constant 0 : i32
    %9 = arith.cmpi slt, %2, %c0_i32_2 : i32
    %10 = vector.broadcast %9 : i1 to vector<8x256xi1>
    %11 = vector.broadcast %10 : vector<8x256xi1> to vector<8x256xi1>
    %12 = arith.xori %8, %11 : vector<8x256xi1>
    %13 = arith.andi %12, %6 : vector<8x256xi1>
    %14 = vector.broadcast %2 : i32 to vector<8x256xi32>
    %15 = arith.addi %4, %14 : vector<8x256xi32>
    %16 = arith.select %13, %15, %4 : vector<8x256xi1>, vector<8x256xi32>
    %c32_i32 = arith.constant 32 : i32
    %17 = vector.broadcast %c32_i32 : i32 to vector<8x256xi32>
    %18 = arith.cmpi slt, %16, %17 : vector<8x256xi32>
    %19 = tpu.iota {dimensions = array<i32: 1>} : vector<8x64xi32>
    %c32_i32_3 = arith.constant 32 : i32
    %20 = vector.broadcast %c32_i32_3 : i32 to vector<8x64xi32>
    %21 = arith.cmpi slt, %19, %20 : vector<8x64xi32>
    %c0 = arith.constant 0 : index
    %c0_4 = arith.constant 0 : index
    %22 = vector.load %arg1[%c0, %c0_4] : memref<8x1xf32, #tpu.memory_space<vmem>>, vector<8x1xf32>
    %23 = vector.shape_cast %22 : vector<8x1xf32> to vector<8x1xf32>
    %24 = vector.broadcast %23 : vector<8x1xf32> to vector<8x64xf32>
    %cst = arith.constant 1.000000e+00 : f32
    %25 = vector.broadcast %cst : f32 to vector<8x64xf32>
    %26 = arith.subf %24, %25 : vector<8x64xf32>
    %cst_5 = arith.constant 0.000000e+00 : f32
    %27 = vector.broadcast %cst_5 : f32 to vector<8x64xf32>
    %c0_6 = arith.constant 0 : index
    %c0_7 = arith.constant 0 : index
    %28 = vector.load %arg0[%c0_6, %c0_7] : memref<64x16xbf16, #tpu.memory_space<vmem>>, vector<64x16xbf16>
    %c0_8 = arith.constant 0 : index
    %c0_9 = arith.constant 0 : index
    %29 = vector.load %arg2[%c0_8, %c0_9] : memref<16x256xbf16, #tpu.memory_space<vmem>>, vector<16x256xbf16>
    %cst_10 = arith.constant dense<0.000000e+00> : vector<64x256xf32>
    %30 = tpu.matmul %28, %29, %cst_10 {dimension_numbers = #tpu.dot_dimension_numbers<[1], [0], [0], [1], [0, 0, 1, 1], [], []>} : vector<64x16xbf16>, vector<16x256xbf16>, vector<64x256xf32> -> vector<64x256xf32>
    %c0_11 = arith.constant 0 : index
    %c0_12 = arith.constant 0 : index
    %31 = vector.load %arg4[%c0_11, %c0_12] : memref<1x256xf32, #tpu.memory_space<vmem>>, vector<1x256xf32>
    %32 = vector.broadcast %31 : vector<1x256xf32> to vector<64x256xf32>
    %33 = arith.addf %30, %32 : vector<64x256xf32>
    %c0_13 = arith.constant 0 : index
    %c0_14 = arith.constant 0 : index
    %34 = vector.load %arg11[%c0_13, %c0_14] : memref<64x256xf32, #tpu.memory_space<vmem>>, vector<64x256xf32>
    tpu.vector_store %arg11[%c0_13, %c0_14], %33 {strides = array<i32>} : memref<64x256xf32, #tpu.memory_space<vmem>>, vector<64x256xf32>,
    %c0_15 = arith.constant 0 : index
    %c0_16 = arith.constant 0 : index
    %35 = vector.load %arg3[%c0_15, %c0_16] : memref<64x256xf32, #tpu.memory_space<vmem>>, vector<64x256xf32>
    %cst_17 = arith.constant 0.000000e+00 : f32
    %36 = vector.broadcast %cst_17 : f32 to vector<8x64xf32>
    %cst_18 = arith.constant 0.000000e+00 : f32
    %37 = vector.broadcast %cst_18 : f32 to vector<8x64xf32>
    %c0_19 = arith.constant 0 : index
    %c0_20 = arith.constant 0 : index
    %38 = vector.load %arg11[%c0_19, %c0_20] : memref<64x256xf32, #tpu.memory_space<vmem>>, vector<8x256xf32>
    %c56 = arith.constant 56 : index
    %c0_21 = arith.constant 0 : index
    %39 = vector.load %arg11[%c56, %c0_21] : memref<64x256xf32, #tpu.memory_space<vmem>>, vector<8x256xf32>
    %40 = arith.select %18, %38, %39 : vector<8x256xi1>, vector<8x256xf32>
    %cst_22 = arith.constant dense<0.000000e+00> : vector<8x256xf32>
    %41 = tpu.matmul %36, %35, %cst_22 {dimension_numbers = #tpu.dot_dimension_numbers<[1], [0], [0], [1], [0, 0, 1, 1], [], []>} : vector<8x64xf32>, vector<64x256xf32>, vector<8x256xf32> -> vector<8x256xf32>
    %42 = arith.addf %40, %41 : vector<8x256xf32>
    %43 = vector.extract_strided_slice %42 {offsets = [0, 0], sizes = [8, 192], strides = [1, 1]} : vector<8x256xf32> to vector<8x192xf32>
    %44 = arith.negf %43 : vector<8x192xf32>
    %45 = math.exp %44 : vector<8x192xf32>
    %cst_23 = arith.constant 1.000000e+00 : f32
    %46 = vector.broadcast %cst_23 : f32 to vector<8x192xf32>
    %47 = arith.addf %46, %45 : vector<8x192xf32>
    %48 = arith.divf %46, %47 : vector<8x192xf32>
    %49 = vector.extract_strided_slice %48 {offsets = [0, 0], sizes = [8, 64], strides = [1, 1]} : vector<8x192xf32> to vector<8x64xf32>
    %50 = vector.extract_strided_slice %48 {offsets = [0, 64], sizes = [8, 64], strides = [1, 1]} : vector<8x192xf32> to vector<8x64xf32>
    %51 = vector.extract_strided_slice %48 {offsets = [0, 128], sizes = [8, 64], strides = [1, 1]} : vector<8x192xf32> to vector<8x64xf32>
    %52 = vector.extract_strided_slice %42 {offsets = [0, 192], sizes = [8, 64], strides = [1, 1]} : vector<8x256xf32> to vector<8x64xf32>
    %53 = math.tanh %52 : vector<8x64xf32>
    %54 = arith.mulf %50, %37 : vector<8x64xf32>
    %55 = arith.mulf %49, %53 : vector<8x64xf32>
    %56 = arith.addf %54, %55 : vector<8x64xf32>
    %57 = math.tanh %56 : vector<8x64xf32>
    %58 = arith.mulf %51, %57 : vector<8x64xf32>
    %cst_24 = arith.constant 0.000000e+00 : f32
    %cst_25 = arith.constant 7.000000e+00 : f32
    %59 = vector.broadcast %cst_24 : f32 to vector<8x64xf32>
    %60 = vector.broadcast %cst_25 : f32 to vector<8x64xf32>
    %61 = arith.select %21, %59, %60 : vector<8x64xi1>, vector<8x64xf32>
    %62 = arith.cmpf olt, %61, %24 : vector<8x64xf32>
    %63 = arith.select %62, %58, %36 : vector<8x64xi1>, vector<8x64xf32>
    %64 = arith.select %62, %56, %37 : vector<8x64xi1>, vector<8x64xf32>
    %cst_26 = arith.constant 0.000000e+00 : f32
    %65 = vector.broadcast %cst_26 : f32 to vector<8x64xf32>
    %66 = arith.select %62, %58, %65 : vector<8x64xi1>, vector<8x64xf32>
    %67 = vector.extract_strided_slice %66 {offsets = [0, 0], sizes = [8, 32], strides = [1, 1]} : vector<8x64xf32> to vector<8x32xf32>
    %c0_27 = arith.constant 0 : index
    %c0_28 = arith.constant 0 : index
    %68 = vector.load %arg12[%c0_27, %c0_28] : memref<64x64xf32, #tpu.memory_space<vmem>>, vector<8x32xf32>
    tpu.vector_store %arg12[%c0_27, %c0_28], %67 {strides = array<i32>} : memref<64x64xf32, #tpu.memory_space<vmem>>, vector<8x32xf32>,
    %69 = vector.extract_strided_slice %66 {offsets = [0, 32], sizes = [8, 32], strides = [1, 1]} : vector<8x64xf32> to vector<8x32xf32>
    %c56_29 = arith.constant 56 : index
    %c32 = arith.constant 32 : index
    %70 = vector.load %arg12[%c56_29, %c32] : memref<64x64xf32, #tpu.memory_space<vmem>>, vector<8x32xf32>
    tpu.vector_store %arg12[%c56_29, %c32], %69 {strides = array<i32>} : memref<64x64xf32, #tpu.memory_space<vmem>>, vector<8x32xf32>,
    %c8 = arith.constant 8 : index
    %c0_30 = arith.constant 0 : index
    %71 = vector.load %arg11[%c8, %c0_30] : memref<64x256xf32, #tpu.memory_space<vmem>>, vector<8x256xf32>
    %c48 = arith.constant 48 : index
    %c0_31 = arith.constant 0 : index
    %72 = vector.load %arg11[%c48, %c0_31] : memref<64x256xf32, #tpu.memory_space<vmem>>, vector<8x256xf32>
    %73 = arith.select %18, %71, %72 : vector<8x256xi1>, vector<8x256xf32>
    %cst_32 = arith.constant dense<0.000000e+00> : vector<8x256xf32>
    %74 = tpu.matmul %63, %35, %cst_32 {dimension_numbers = #tpu.dot_dimension_numbers<[1], [0], [0], [1], [0, 0, 1, 1], [], []>} : vector<8x64xf32>, vector<64x256xf32>, vector<8x256xf32> -> vector<8x256xf32>
    %75 = arith.addf %73, %74 : vector<8x256xf32>
    %76 = vector.extract_strided_slice %75 {offsets = [0, 0], sizes = [8, 192], strides = [1, 1]} : vector<8x256xf32> to vector<8x192xf32>
    %77 = arith.negf %76 : vector<8x192xf32>
    %78 = math.exp %77 : vector<8x192xf32>
    %cst_33 = arith.constant 1.000000e+00 : f32
    %79 = vector.broadcast %cst_33 : f32 to vector<8x192xf32>
    %80 = arith.addf %79, %78 : vector<8x192xf32>
    %81 = arith.divf %79, %80 : vector<8x192xf32>
    %82 = vector.extract_strided_slice %81 {offsets = [0, 0], sizes = [8, 64], strides = [1, 1]} : vector<8x192xf32> to vector<8x64xf32>
    %83 = vector.extract_strided_slice %81 {offsets = [0, 64], sizes = [8, 64], strides = [1, 1]} : vector<8x192xf32> to vector<8x64xf32>
    %84 = vector.extract_strided_slice %81 {offsets = [0, 128], sizes = [8, 64], strides = [1, 1]} : vector<8x192xf32> to vector<8x64xf32>
    %85 = vector.extract_strided_slice %75 {offsets = [0, 192], sizes = [8, 64], strides = [1, 1]} : vector<8x256xf32> to vector<8x64xf32>
    %86 = math.tanh %85 : vector<8x64xf32>
    %87 = arith.mulf %83, %64 : vector<8x64xf32>
    %88 = arith.mulf %82, %86 : vector<8x64xf32>
    %89 = arith.addf %87, %88 : vector<8x64xf32>
    %90 = math.tanh %89 : vector<8x64xf32>
    %91 = arith.mulf %84, %90 : vector<8x64xf32>
    %cst_34 = arith.constant 1.000000e+00 : f32
    %cst_35 = arith.constant 6.000000e+00 : f32
    %92 = vector.broadcast %cst_34 : f32 to vector<8x64xf32>
    %93 = vector.broadcast %cst_35 : f32 to vector<8x64xf32>
    %94 = arith.select %21, %92, %93 : vector<8x64xi1>, vector<8x64xf32>
    %95 = arith.cmpf olt, %94, %24 : vector<8x64xf32>
    %96 = arith.select %95, %91, %63 : vector<8x64xi1>, vector<8x64xf32>
    %97 = arith.select %95, %89, %64 : vector<8x64xi1>, vector<8x64xf32>
    %cst_36 = arith.constant 0.000000e+00 : f32
    %98 = vector.broadcast %cst_36 : f32 to vector<8x64xf32>
    %99 = arith.select %95, %91, %98 : vector<8x64xi1>, vector<8x64xf32>
    %100 = vector.extract_strided_slice %99 {offsets = [0, 0], sizes = [8, 32], strides = [1, 1]} : vector<8x64xf32> to vector<8x32xf32>
    %c8_37 = arith.constant 8 : index
    %c0_38 = arith.constant 0 : index
    %101 = vector.load %arg12[%c8_37, %c0_38] : memref<64x64xf32, #tpu.memory_space<vmem>>, vector<8x32xf32>
    tpu.vector_store %arg12[%c8_37, %c0_38], %100 {strides = array<i32>} : memref<64x64xf32, #tpu.memory_space<vmem>>, vector<8x32xf32>,
    %102 = vector.extract_strided_slice %99 {offsets = [0, 32], sizes = [8, 32], strides = [1, 1]} : vector<8x64xf32> to vector<8x32xf32>
    %c48_39 = arith.constant 48 : index
    %c32_40 = arith.constant 32 : index
    %103 = vector.load %arg12[%c48_39, %c32_40] : memref<64x64xf32, #tpu.memory_space<vmem>>, vector<8x32xf32>
    tpu.vector_store %arg12[%c48_39, %c32_40], %102 {strides = array<i32>} : memref<64x64xf32, #tpu.memory_space<vmem>>, vector<8x32xf32>,
    %c16 = arith.constant 16 : index
    %c0_41 = arith.constant 0 : index
    %104 = vector.load %arg11[%c16, %c0_41] : memref<64x256xf32, #tpu.memory_space<vmem>>, vector<8x256xf32>
    %c40 = arith.constant 40 : index
    %c0_42 = arith.constant 0 : index
    %105 = vector.load %arg11[%c40, %c0_42] : memref<64x256xf32, #tpu.memory_space<vmem>>, vector<8x256xf32>
    %106 = arith.select %18, %104, %105 : vector<8x256xi1>, vector<8x256xf32>
    %cst_43 = arith.constant dense<0.000000e+00> : vector<8x256xf32>
    %107 = tpu.matmul %96, %35, %cst_43 {dimension_numbers = #tpu.dot_dimension_numbers<[1], [0], [0], [1], [0, 0, 1, 1], [], []>} : vector<8x64xf32>, vector<64x256xf32>, vector<8x256xf32> -> vector<8x256xf32>
    %108 = arith.addf %106, %107 : vector<8x256xf32>
    %109 = vector.extract_strided_slice %108 {offsets = [0, 0], sizes = [8, 192], strides = [1, 1]} : vector<8x256xf32> to vector<8x192xf32>
    %110 = arith.negf %109 : vector<8x192xf32>
    %111 = math.exp %110 : vector<8x192xf32>
    %cst_44 = arith.constant 1.000000e+00 : f32
    %112 = vector.broadcast %cst_44 : f32 to vector<8x192xf32>
    %113 = arith.addf %112, %111 : vector<8x192xf32>
    %114 = arith.divf %112, %113 : vector<8x192xf32>
    %115 = vector.extract_strided_slice %114 {offsets = [0, 0], sizes = [8, 64], strides = [1, 1]} : vector<8x192xf32> to vector<8x64xf32>
    %116 = vector.extract_strided_slice %114 {offsets = [0, 64], sizes = [8, 64], strides = [1, 1]} : vector<8x192xf32> to vector<8x64xf32>
    %117 = vector.extract_strided_slice %114 {offsets = [0, 128], sizes = [8, 64], strides = [1, 1]} : vector<8x192xf32> to vector<8x64xf32>
    %118 = vector.extract_strided_slice %108 {offsets = [0, 192], sizes = [8, 64], strides = [1, 1]} : vector<8x256xf32> to vector<8x64xf32>
    %119 = math.tanh %118 : vector<8x64xf32>
    %120 = arith.mulf %116, %97 : vector<8x64xf32>
    %121 = arith.mulf %115, %119 : vector<8x64xf32>
    %122 = arith.addf %120, %121 : vector<8x64xf32>
    %123 = math.tanh %122 : vector<8x64xf32>
    %124 = arith.mulf %117, %123 : vector<8x64xf32>
    %cst_45 = arith.constant 2.000000e+00 : f32
    %cst_46 = arith.constant 5.000000e+00 : f32
    %125 = vector.broadcast %cst_45 : f32 to vector<8x64xf32>
    %126 = vector.broadcast %cst_46 : f32 to vector<8x64xf32>
    %127 = arith.select %21, %125, %126 : vector<8x64xi1>, vector<8x64xf32>
    %128 = arith.cmpf olt, %127, %24 : vector<8x64xf32>
    %129 = arith.select %128, %124, %96 : vector<8x64xi1>, vector<8x64xf32>
    %130 = arith.select %128, %122, %97 : vector<8x64xi1>, vector<8x64xf32>
    %cst_47 = arith.constant 0.000000e+00 : f32
    %131 = vector.broadcast %cst_47 : f32 to vector<8x64xf32>
    %132 = arith.select %128, %124, %131 : vector<8x64xi1>, vector<8x64xf32>
    %133 = vector.extract_strided_slice %132 {offsets = [0, 0], sizes = [8, 32], strides = [1, 1]} : vector<8x64xf32> to vector<8x32xf32>
    %c16_48 = arith.constant 16 : index
    %c0_49 = arith.constant 0 : index
    %134 = vector.load %arg12[%c16_48, %c0_49] : memref<64x64xf32, #tpu.memory_space<vmem>>, vector<8x32xf32>
    tpu.vector_store %arg12[%c16_48, %c0_49], %133 {strides = array<i32>} : memref<64x64xf32, #tpu.memory_space<vmem>>, vector<8x32xf32>,
    %135 = vector.extract_strided_slice %132 {offsets = [0, 32], sizes = [8, 32], strides = [1, 1]} : vector<8x64xf32> to vector<8x32xf32>
    %c40_50 = arith.constant 40 : index
    %c32_51 = arith.constant 32 : index
    %136 = vector.load %arg12[%c40_50, %c32_51] : memref<64x64xf32, #tpu.memory_space<vmem>>, vector<8x32xf32>
    tpu.vector_store %arg12[%c40_50, %c32_51], %135 {strides = array<i32>} : memref<64x64xf32, #tpu.memory_space<vmem>>, vector<8x32xf32>,
    %c24 = arith.constant 24 : index
    %c0_52 = arith.constant 0 : index
    %137 = vector.load %arg11[%c24, %c0_52] : memref<64x256xf32, #tpu.memory_space<vmem>>, vector<8x256xf32>
    %c32_53 = arith.constant 32 : index
    %c0_54 = arith.constant 0 : index
    %138 = vector.load %arg11[%c32_53, %c0_54] : memref<64x256xf32, #tpu.memory_space<vmem>>, vector<8x256xf32>
    %139 = arith.select %18, %137, %138 : vector<8x256xi1>, vector<8x256xf32>
    %cst_55 = arith.constant dense<0.000000e+00> : vector<8x256xf32>
    %140 = tpu.matmul %129, %35, %cst_55 {dimension_numbers = #tpu.dot_dimension_numbers<[1], [0], [0], [1], [0, 0, 1, 1], [], []>} : vector<8x64xf32>, vector<64x256xf32>, vector<8x256xf32> -> vector<8x256xf32>
    %141 = arith.addf %139, %140 : vector<8x256xf32>
    %142 = vector.extract_strided_slice %141 {offsets = [0, 0], sizes = [8, 192], strides = [1, 1]} : vector<8x256xf32> to vector<8x192xf32>
    %143 = arith.negf %142 : vector<8x192xf32>
    %144 = math.exp %143 : vector<8x192xf32>
    %cst_56 = arith.constant 1.000000e+00 : f32
    %145 = vector.broadcast %cst_56 : f32 to vector<8x192xf32>
    %146 = arith.addf %145, %144 : vector<8x192xf32>
    %147 = arith.divf %145, %146 : vector<8x192xf32>
    %148 = vector.extract_strided_slice %147 {offsets = [0, 0], sizes = [8, 64], strides = [1, 1]} : vector<8x192xf32> to vector<8x64xf32>
    %149 = vector.extract_strided_slice %147 {offsets = [0, 64], sizes = [8, 64], strides = [1, 1]} : vector<8x192xf32> to vector<8x64xf32>
    %150 = vector.extract_strided_slice %147 {offsets = [0, 128], sizes = [8, 64], strides = [1, 1]} : vector<8x192xf32> to vector<8x64xf32>
    %151 = vector.extract_strided_slice %141 {offsets = [0, 192], sizes = [8, 64], strides = [1, 1]} : vector<8x256xf32> to vector<8x64xf32>
    %152 = math.tanh %151 : vector<8x64xf32>
    %153 = arith.mulf %149, %130 : vector<8x64xf32>
    %154 = arith.mulf %148, %152 : vector<8x64xf32>
    %155 = arith.addf %153, %154 : vector<8x64xf32>
    %156 = math.tanh %155 : vector<8x64xf32>
    %157 = arith.mulf %150, %156 : vector<8x64xf32>
    %cst_57 = arith.constant 3.000000e+00 : f32
    %cst_58 = arith.constant 4.000000e+00 : f32
    %158 = vector.broadcast %cst_57 : f32 to vector<8x64xf32>
    %159 = vector.broadcast %cst_58 : f32 to vector<8x64xf32>
    %160 = arith.select %21, %158, %159 : vector<8x64xi1>, vector<8x64xf32>
    %161 = arith.cmpf olt, %160, %24 : vector<8x64xf32>
    %162 = arith.select %161, %157, %129 : vector<8x64xi1>, vector<8x64xf32>
    %163 = arith.select %161, %155, %130 : vector<8x64xi1>, vector<8x64xf32>
    %cst_59 = arith.constant 0.000000e+00 : f32
    %164 = vector.broadcast %cst_59 : f32 to vector<8x64xf32>
    %165 = arith.select %161, %157, %164 : vector<8x64xi1>, vector<8x64xf32>
    %166 = vector.extract_strided_slice %165 {offsets = [0, 0], sizes = [8, 32], strides = [1, 1]} : vector<8x64xf32> to vector<8x32xf32>
    %c24_60 = arith.constant 24 : index
    %c0_61 = arith.constant 0 : index
    %167 = vector.load %arg12[%c24_60, %c0_61] : memref<64x64xf32, #tpu.memory_space<vmem>>, vector<8x32xf32>
    tpu.vector_store %arg12[%c24_60, %c0_61], %166 {strides = array<i32>} : memref<64x64xf32, #tpu.memory_space<vmem>>, vector<8x32xf32>,
    %168 = vector.extract_strided_slice %165 {offsets = [0, 32], sizes = [8, 32], strides = [1, 1]} : vector<8x64xf32> to vector<8x32xf32>
    %c32_62 = arith.constant 32 : index
    %c32_63 = arith.constant 32 : index
    %169 = vector.load %arg12[%c32_62, %c32_63] : memref<64x64xf32, #tpu.memory_space<vmem>>, vector<8x32xf32>
    tpu.vector_store %arg12[%c32_62, %c32_63], %168 {strides = array<i32>} : memref<64x64xf32, #tpu.memory_space<vmem>>, vector<8x32xf32>,
    %c32_64 = arith.constant 32 : index
    %c0_65 = arith.constant 0 : index
    %170 = vector.load %arg11[%c32_64, %c0_65] : memref<64x256xf32, #tpu.memory_space<vmem>>, vector<8x256xf32>
    %c24_66 = arith.constant 24 : index
    %c0_67 = arith.constant 0 : index
    %171 = vector.load %arg11[%c24_66, %c0_67] : memref<64x256xf32, #tpu.memory_space<vmem>>, vector<8x256xf32>
    %172 = arith.select %18, %170, %171 : vector<8x256xi1>, vector<8x256xf32>
    %cst_68 = arith.constant dense<0.000000e+00> : vector<8x256xf32>
    %173 = tpu.matmul %162, %35, %cst_68 {dimension_numbers = #tpu.dot_dimension_numbers<[1], [0], [0], [1], [0, 0, 1, 1], [], []>} : vector<8x64xf32>, vector<64x256xf32>, vector<8x256xf32> -> vector<8x256xf32>
    %174 = arith.addf %172, %173 : vector<8x256xf32>
    %175 = vector.extract_strided_slice %174 {offsets = [0, 0], sizes = [8, 192], strides = [1, 1]} : vector<8x256xf32> to vector<8x192xf32>
    %176 = arith.negf %175 : vector<8x192xf32>
    %177 = math.exp %176 : vector<8x192xf32>
    %cst_69 = arith.constant 1.000000e+00 : f32
    %178 = vector.broadcast %cst_69 : f32 to vector<8x192xf32>
    %179 = arith.addf %178, %177 : vector<8x192xf32>
    %180 = arith.divf %178, %179 : vector<8x192xf32>
    %181 = vector.extract_strided_slice %180 {offsets = [0, 0], sizes = [8, 64], strides = [1, 1]} : vector<8x192xf32> to vector<8x64xf32>
    %182 = vector.extract_strided_slice %180 {offsets = [0, 64], sizes = [8, 64], strides = [1, 1]} : vector<8x192xf32> to vector<8x64xf32>
    %183 = vector.extract_strided_slice %180 {offsets = [0, 128], sizes = [8, 64], strides = [1, 1]} : vector<8x192xf32> to vector<8x64xf32>
    %184 = vector.extract_strided_slice %174 {offsets = [0, 192], sizes = [8, 64], strides = [1, 1]} : vector<8x256xf32> to vector<8x64xf32>
    %185 = math.tanh %184 : vector<8x64xf32>
    %186 = arith.mulf %182, %163 : vector<8x64xf32>
    %187 = arith.mulf %181, %185 : vector<8x64xf32>
    %188 = arith.addf %186, %187 : vector<8x64xf32>
    %189 = math.tanh %188 : vector<8x64xf32>
    %190 = arith.mulf %183, %189 : vector<8x64xf32>
    %cst_70 = arith.constant 4.000000e+00 : f32
    %cst_71 = arith.constant 3.000000e+00 : f32
    %191 = vector.broadcast %cst_70 : f32 to vector<8x64xf32>
    %192 = vector.broadcast %cst_71 : f32 to vector<8x64xf32>
    %193 = arith.select %21, %191, %192 : vector<8x64xi1>, vector<8x64xf32>
    %194 = arith.cmpf olt, %193, %24 : vector<8x64xf32>
    %195 = arith.select %194, %190, %162 : vector<8x64xi1>, vector<8x64xf32>
    %196 = arith.select %194, %188, %163 : vector<8x64xi1>, vector<8x64xf32>
    %cst_72 = arith.constant 0.000000e+00 : f32
    %197 = vector.broadcast %cst_72 : f32 to vector<8x64xf32>
    %198 = arith.select %194, %190, %197 : vector<8x64xi1>, vector<8x64xf32>
    %199 = vector.extract_strided_slice %198 {offsets = [0, 0], sizes = [8, 32], strides = [1, 1]} : vector<8x64xf32> to vector<8x32xf32>
    %c32_73 = arith.constant 32 : index
    %c0_74 = arith.constant 0 : index
    %200 = vector.load %arg12[%c32_73, %c0_74] : memref<64x64xf32, #tpu.memory_space<vmem>>, vector<8x32xf32>
    tpu.vector_store %arg12[%c32_73, %c0_74], %199 {strides = array<i32>} : memref<64x64xf32, #tpu.memory_space<vmem>>, vector<8x32xf32>,
    %201 = vector.extract_strided_slice %198 {offsets = [0, 32], sizes = [8, 32], strides = [1, 1]} : vector<8x64xf32> to vector<8x32xf32>
    %c24_75 = arith.constant 24 : index
    %c32_76 = arith.constant 32 : index
    %202 = vector.load %arg12[%c24_75, %c32_76] : memref<64x64xf32, #tpu.memory_space<vmem>>, vector<8x32xf32>
    tpu.vector_store %arg12[%c24_75, %c32_76], %201 {strides = array<i32>} : memref<64x64xf32, #tpu.memory_space<vmem>>, vector<8x32xf32>,
    %c40_77 = arith.constant 40 : index
    %c0_78 = arith.constant 0 : index
    %203 = vector.load %arg11[%c40_77, %c0_78] : memref<64x256xf32, #tpu.memory_space<vmem>>, vector<8x256xf32>
    %c16_79 = arith.constant 16 : index
    %c0_80 = arith.constant 0 : index
    %204 = vector.load %arg11[%c16_79, %c0_80] : memref<64x256xf32, #tpu.memory_space<vmem>>, vector<8x256xf32>
    %205 = arith.select %18, %203, %204 : vector<8x256xi1>, vector<8x256xf32>
    %cst_81 = arith.constant dense<0.000000e+00> : vector<8x256xf32>
    %206 = tpu.matmul %195, %35, %cst_81 {dimension_numbers = #tpu.dot_dimension_numbers<[1], [0], [0], [1], [0, 0, 1, 1], [], []>} : vector<8x64xf32>, vector<64x256xf32>, vector<8x256xf32> -> vector<8x256xf32>
    %207 = arith.addf %205, %206 : vector<8x256xf32>
    %208 = vector.extract_strided_slice %207 {offsets = [0, 0], sizes = [8, 192], strides = [1, 1]} : vector<8x256xf32> to vector<8x192xf32>
    %209 = arith.negf %208 : vector<8x192xf32>
    %210 = math.exp %209 : vector<8x192xf32>
    %cst_82 = arith.constant 1.000000e+00 : f32
    %211 = vector.broadcast %cst_82 : f32 to vector<8x192xf32>
    %212 = arith.addf %211, %210 : vector<8x192xf32>
    %213 = arith.divf %211, %212 : vector<8x192xf32>
    %214 = vector.extract_strided_slice %213 {offsets = [0, 0], sizes = [8, 64], strides = [1, 1]} : vector<8x192xf32> to vector<8x64xf32>
    %215 = vector.extract_strided_slice %213 {offsets = [0, 64], sizes = [8, 64], strides = [1, 1]} : vector<8x192xf32> to vector<8x64xf32>
    %216 = vector.extract_strided_slice %213 {offsets = [0, 128], sizes = [8, 64], strides = [1, 1]} : vector<8x192xf32> to vector<8x64xf32>
    %217 = vector.extract_strided_slice %207 {offsets = [0, 192], sizes = [8, 64], strides = [1, 1]} : vector<8x256xf32> to vector<8x64xf32>
    %218 = math.tanh %217 : vector<8x64xf32>
    %219 = arith.mulf %215, %196 : vector<8x64xf32>
    %220 = arith.mulf %214, %218 : vector<8x64xf32>
    %221 = arith.addf %219, %220 : vector<8x64xf32>
    %222 = math.tanh %221 : vector<8x64xf32>
    %223 = arith.mulf %216, %222 : vector<8x64xf32>
    %cst_83 = arith.constant 5.000000e+00 : f32
    %cst_84 = arith.constant 2.000000e+00 : f32
    %224 = vector.broadcast %cst_83 : f32 to vector<8x64xf32>
    %225 = vector.broadcast %cst_84 : f32 to vector<8x64xf32>
    %226 = arith.select %21, %224, %225 : vector<8x64xi1>, vector<8x64xf32>
    %227 = arith.cmpf olt, %226, %24 : vector<8x64xf32>
    %228 = arith.select %227, %223, %195 : vector<8x64xi1>, vector<8x64xf32>
    %229 = arith.select %227, %221, %196 : vector<8x64xi1>, vector<8x64xf32>
    %cst_85 = arith.constant 0.000000e+00 : f32
    %230 = vector.broadcast %cst_85 : f32 to vector<8x64xf32>
    %231 = arith.select %227, %223, %230 : vector<8x64xi1>, vector<8x64xf32>
    %232 = vector.extract_strided_slice %231 {offsets = [0, 0], sizes = [8, 32], strides = [1, 1]} : vector<8x64xf32> to vector<8x32xf32>
    %c40_86 = arith.constant 40 : index
    %c0_87 = arith.constant 0 : index
    %233 = vector.load %arg12[%c40_86, %c0_87] : memref<64x64xf32, #tpu.memory_space<vmem>>, vector<8x32xf32>
    tpu.vector_store %arg12[%c40_86, %c0_87], %232 {strides = array<i32>} : memref<64x64xf32, #tpu.memory_space<vmem>>, vector<8x32xf32>,
    %234 = vector.extract_strided_slice %231 {offsets = [0, 32], sizes = [8, 32], strides = [1, 1]} : vector<8x64xf32> to vector<8x32xf32>
    %c16_88 = arith.constant 16 : index
    %c32_89 = arith.constant 32 : index
    %235 = vector.load %arg12[%c16_88, %c32_89] : memref<64x64xf32, #tpu.memory_space<vmem>>, vector<8x32xf32>
    tpu.vector_store %arg12[%c16_88, %c32_89], %234 {strides = array<i32>} : memref<64x64xf32, #tpu.memory_space<vmem>>, vector<8x32xf32>,
    %c48_90 = arith.constant 48 : index
    %c0_91 = arith.constant 0 : index
    %236 = vector.load %arg11[%c48_90, %c0_91] : memref<64x256xf32, #tpu.memory_space<vmem>>, vector<8x256xf32>
    %c8_92 = arith.constant 8 : index
    %c0_93 = arith.constant 0 : index
    %237 = vector.load %arg11[%c8_92, %c0_93] : memref<64x256xf32, #tpu.memory_space<vmem>>, vector<8x256xf32>
    %238 = arith.select %18, %236, %237 : vector<8x256xi1>, vector<8x256xf32>
    %cst_94 = arith.constant dense<0.000000e+00> : vector<8x256xf32>
    %239 = tpu.matmul %228, %35, %cst_94 {dimension_numbers = #tpu.dot_dimension_numbers<[1], [0], [0], [1], [0, 0, 1, 1], [], []>} : vector<8x64xf32>, vector<64x256xf32>, vector<8x256xf32> -> vector<8x256xf32>
    %240 = arith.addf %238, %239 : vector<8x256xf32>
    %241 = vector.extract_strided_slice %240 {offsets = [0, 0], sizes = [8, 192], strides = [1, 1]} : vector<8x256xf32> to vector<8x192xf32>
    %242 = arith.negf %241 : vector<8x192xf32>
    %243 = math.exp %242 : vector<8x192xf32>
    %cst_95 = arith.constant 1.000000e+00 : f32
    %244 = vector.broadcast %cst_95 : f32 to vector<8x192xf32>
    %245 = arith.addf %244, %243 : vector<8x192xf32>
    %246 = arith.divf %244, %245 : vector<8x192xf32>
    %247 = vector.extract_strided_slice %246 {offsets = [0, 0], sizes = [8, 64], strides = [1, 1]} : vector<8x192xf32> to vector<8x64xf32>
    %248 = vector.extract_strided_slice %246 {offsets = [0, 64], sizes = [8, 64], strides = [1, 1]} : vector<8x192xf32> to vector<8x64xf32>
    %249 = vector.extract_strided_slice %246 {offsets = [0, 128], sizes = [8, 64], strides = [1, 1]} : vector<8x192xf32> to vector<8x64xf32>
    %250 = vector.extract_strided_slice %240 {offsets = [0, 192], sizes = [8, 64], strides = [1, 1]} : vector<8x256xf32> to vector<8x64xf32>
    %251 = math.tanh %250 : vector<8x64xf32>
    %252 = arith.mulf %248, %229 : vector<8x64xf32>
    %253 = arith.mulf %247, %251 : vector<8x64xf32>
    %254 = arith.addf %252, %253 : vector<8x64xf32>
    %255 = math.tanh %254 : vector<8x64xf32>
    %256 = arith.mulf %249, %255 : vector<8x64xf32>
    %cst_96 = arith.constant 6.000000e+00 : f32
    %cst_97 = arith.constant 1.000000e+00 : f32
    %257 = vector.broadcast %cst_96 : f32 to vector<8x64xf32>
    %258 = vector.broadcast %cst_97 : f32 to vector<8x64xf32>
    %259 = arith.select %21, %257, %258 : vector<8x64xi1>, vector<8x64xf32>
    %260 = arith.cmpf olt, %259, %24 : vector<8x64xf32>
    %261 = arith.select %260, %256, %228 : vector<8x64xi1>, vector<8x64xf32>
    %262 = arith.select %260, %254, %229 : vector<8x64xi1>, vector<8x64xf32>
    %cst_98 = arith.constant 0.000000e+00 : f32
    %263 = vector.broadcast %cst_98 : f32 to vector<8x64xf32>
    %264 = arith.select %260, %256, %263 : vector<8x64xi1>, vector<8x64xf32>
    %265 = vector.extract_strided_slice %264 {offsets = [0, 0], sizes = [8, 32], strides = [1, 1]} : vector<8x64xf32> to vector<8x32xf32>
    %c48_99 = arith.constant 48 : index
    %c0_100 = arith.constant 0 : index
    %266 = vector.load %arg12[%c48_99, %c0_100] : memref<64x64xf32, #tpu.memory_space<vmem>>, vector<8x32xf32>
    tpu.vector_store %arg12[%c48_99, %c0_100], %265 {strides = array<i32>} : memref<64x64xf32, #tpu.memory_space<vmem>>, vector<8x32xf32>,
    %267 = vector.extract_strided_slice %264 {offsets = [0, 32], sizes = [8, 32], strides = [1, 1]} : vector<8x64xf32> to vector<8x32xf32>
    %c8_101 = arith.constant 8 : index
    %c32_102 = arith.constant 32 : index
    %268 = vector.load %arg12[%c8_101, %c32_102] : memref<64x64xf32, #tpu.memory_space<vmem>>, vector<8x32xf32>
    tpu.vector_store %arg12[%c8_101, %c32_102], %267 {strides = array<i32>} : memref<64x64xf32, #tpu.memory_space<vmem>>, vector<8x32xf32>,
    %c56_103 = arith.constant 56 : index
    %c0_104 = arith.constant 0 : index
    %269 = vector.load %arg11[%c56_103, %c0_104] : memref<64x256xf32, #tpu.memory_space<vmem>>, vector<8x256xf32>
    %c0_105 = arith.constant 0 : index
    %c0_106 = arith.constant 0 : index
    %270 = vector.load %arg11[%c0_105, %c0_106] : memref<64x256xf32, #tpu.memory_space<vmem>>, vector<8x256xf32>
    %271 = arith.select %18, %269, %270 : vector<8x256xi1>, vector<8x256xf32>
    %cst_107 = arith.constant dense<0.000000e+00> : vector<8x256xf32>
    %272 = tpu.matmul %261, %35, %cst_107 {dimension_numbers = #tpu.dot_dimension_numbers<[1], [0], [0], [1], [0, 0, 1, 1], [], []>} : vector<8x64xf32>, vector<64x256xf32>, vector<8x256xf32> -> vector<8x256xf32>
    %273 = arith.addf %271, %272 : vector<8x256xf32>
    %274 = vector.extract_strided_slice %273 {offsets = [0, 0], sizes = [8, 192], strides = [1, 1]} : vector<8x256xf32> to vector<8x192xf32>
    %275 = arith.negf %274 : vector<8x192xf32>
    %276 = math.exp %275 : vector<8x192xf32>
    %cst_108 = arith.constant 1.000000e+00 : f32
    %277 = vector.broadcast %cst_108 : f32 to vector<8x192xf32>
    %278 = arith.addf %277, %276 : vector<8x192xf32>
    %279 = arith.divf %277, %278 : vector<8x192xf32>
    %280 = vector.extract_strided_slice %279 {offsets = [0, 0], sizes = [8, 64], strides = [1, 1]} : vector<8x192xf32> to vector<8x64xf32>
    %281 = vector.extract_strided_slice %279 {offsets = [0, 64], sizes = [8, 64], strides = [1, 1]} : vector<8x192xf32> to vector<8x64xf32>
    %282 = vector.extract_strided_slice %279 {offsets = [0, 128], sizes = [8, 64], strides = [1, 1]} : vector<8x192xf32> to vector<8x64xf32>
    %283 = vector.extract_strided_slice %273 {offsets = [0, 192], sizes = [8, 64], strides = [1, 1]} : vector<8x256xf32> to vector<8x64xf32>
    %284 = math.tanh %283 : vector<8x64xf32>
    %285 = arith.mulf %281, %262 : vector<8x64xf32>
    %286 = arith.mulf %280, %284 : vector<8x64xf32>
    %287 = arith.addf %285, %286 : vector<8x64xf32>
    %288 = math.tanh %287 : vector<8x64xf32>
    %289 = arith.mulf %282, %288 : vector<8x64xf32>
    %cst_109 = arith.constant 7.000000e+00 : f32
    %cst_110 = arith.constant 0.000000e+00 : f32
    %290 = vector.broadcast %cst_109 : f32 to vector<8x64xf32>
    %291 = vector.broadcast %cst_110 : f32 to vector<8x64xf32>
    %292 = arith.select %21, %290, %291 : vector<8x64xi1>, vector<8x64xf32>
    %293 = arith.cmpf olt, %292, %24 : vector<8x64xf32>
    %cst_111 = arith.constant 0.000000e+00 : f32
    %294 = vector.broadcast %cst_111 : f32 to vector<8x64xf32>
    %295 = arith.select %293, %289, %294 : vector<8x64xi1>, vector<8x64xf32>
    %296 = vector.extract_strided_slice %295 {offsets = [0, 0], sizes = [8, 32], strides = [1, 1]} : vector<8x64xf32> to vector<8x32xf32>
    %c56_112 = arith.constant 56 : index
    %c0_113 = arith.constant 0 : index
    %297 = vector.load %arg12[%c56_112, %c0_113] : memref<64x64xf32, #tpu.memory_space<vmem>>, vector<8x32xf32>
    tpu.vector_store %arg12[%c56_112, %c0_113], %296 {strides = array<i32>} : memref<64x64xf32, #tpu.memory_space<vmem>>, vector<8x32xf32>,
    %298 = vector.extract_strided_slice %295 {offsets = [0, 32], sizes = [8, 32], strides = [1, 1]} : vector<8x64xf32> to vector<8x32xf32>
    %c0_114 = arith.constant 0 : index
    %c32_115 = arith.constant 32 : index
    %299 = vector.load %arg12[%c0_114, %c32_115] : memref<64x64xf32, #tpu.memory_space<vmem>>, vector<8x32xf32>
    tpu.vector_store %arg12[%c0_114, %c32_115], %298 {strides = array<i32>} : memref<64x64xf32, #tpu.memory_space<vmem>>, vector<8x32xf32>,
    %c0_116 = arith.constant 0 : index
    %c0_117 = arith.constant 0 : index
    %300 = vector.load %arg12[%c0_116, %c0_117] : memref<64x64xf32, #tpu.memory_space<vmem>>, vector<64x64xf32>
    %301 = arith.truncf %300 : vector<64x64xf32> to vector<64x64xbf16>
    %c0_118 = arith.constant 0 : index
    %c0_119 = arith.constant 0 : index
    %302 = vector.load %arg5[%c0_118, %c0_119] : memref<64x256xbf16, #tpu.memory_space<vmem>>, vector<64x256xbf16>
    %cst_120 = arith.constant dense<0.000000e+00> : vector<64x256xf32>
    %303 = tpu.matmul %301, %302, %cst_120 {dimension_numbers = #tpu.dot_dimension_numbers<[1], [0], [0], [1], [0, 0, 1, 1], [], []>} : vector<64x64xbf16>, vector<64x256xbf16>, vector<64x256xf32> -> vector<64x256xf32>
    %c0_121 = arith.constant 0 : index
    %c0_122 = arith.constant 0 : index
    %304 = vector.load %arg7[%c0_121, %c0_122] : memref<1x256xf32, #tpu.memory_space<vmem>>, vector<1x256xf32>
    %305 = vector.broadcast %304 : vector<1x256xf32> to vector<64x256xf32>
    %306 = arith.addf %303, %305 : vector<64x256xf32>
    %c0_123 = arith.constant 0 : index
    %c0_124 = arith.constant 0 : index
    %307 = vector.load %arg11[%c0_123, %c0_124] : memref<64x256xf32, #tpu.memory_space<vmem>>, vector<64x256xf32>
    tpu.vector_store %arg11[%c0_123, %c0_124], %306 {strides = array<i32>} : memref<64x256xf32, #tpu.memory_space<vmem>>, vector<64x256xf32>,
    %c0_125 = arith.constant 0 : index
    %c0_126 = arith.constant 0 : index
    %308 = vector.load %arg6[%c0_125, %c0_126] : memref<64x256xf32, #tpu.memory_space<vmem>>, vector<64x256xf32>
    %cst_127 = arith.constant 0.000000e+00 : f32
    %309 = vector.broadcast %cst_127 : f32 to vector<8x64xf32>
    %cst_128 = arith.constant 0.000000e+00 : f32
    %310 = vector.broadcast %cst_128 : f32 to vector<8x64xf32>
    %c0_129 = arith.constant 0 : index
    %c0_130 = arith.constant 0 : index
    %311 = vector.load %arg11[%c0_129, %c0_130] : memref<64x256xf32, #tpu.memory_space<vmem>>, vector<8x256xf32>
    %c56_131 = arith.constant 56 : index
    %c0_132 = arith.constant 0 : index
    %312 = vector.load %arg11[%c56_131, %c0_132] : memref<64x256xf32, #tpu.memory_space<vmem>>, vector<8x256xf32>
    %313 = arith.select %18, %311, %312 : vector<8x256xi1>, vector<8x256xf32>
    %cst_133 = arith.constant dense<0.000000e+00> : vector<8x256xf32>
    %314 = tpu.matmul %309, %308, %cst_133 {dimension_numbers = #tpu.dot_dimension_numbers<[1], [0], [0], [1], [0, 0, 1, 1], [], []>} : vector<8x64xf32>, vector<64x256xf32>, vector<8x256xf32> -> vector<8x256xf32>
    %315 = arith.addf %313, %314 : vector<8x256xf32>
    %316 = vector.extract_strided_slice %315 {offsets = [0, 0], sizes = [8, 192], strides = [1, 1]} : vector<8x256xf32> to vector<8x192xf32>
    %317 = arith.negf %316 : vector<8x192xf32>
    %318 = math.exp %317 : vector<8x192xf32>
    %cst_134 = arith.constant 1.000000e+00 : f32
    %319 = vector.broadcast %cst_134 : f32 to vector<8x192xf32>
    %320 = arith.addf %319, %318 : vector<8x192xf32>
    %321 = arith.divf %319, %320 : vector<8x192xf32>
    %322 = vector.extract_strided_slice %321 {offsets = [0, 0], sizes = [8, 64], strides = [1, 1]} : vector<8x192xf32> to vector<8x64xf32>
    %323 = vector.extract_strided_slice %321 {offsets = [0, 64], sizes = [8, 64], strides = [1, 1]} : vector<8x192xf32> to vector<8x64xf32>
    %324 = vector.extract_strided_slice %321 {offsets = [0, 128], sizes = [8, 64], strides = [1, 1]} : vector<8x192xf32> to vector<8x64xf32>
    %325 = vector.extract_strided_slice %315 {offsets = [0, 192], sizes = [8, 64], strides = [1, 1]} : vector<8x256xf32> to vector<8x64xf32>
    %326 = math.tanh %325 : vector<8x64xf32>
    %327 = arith.mulf %323, %310 : vector<8x64xf32>
    %328 = arith.mulf %322, %326 : vector<8x64xf32>
    %329 = arith.addf %327, %328 : vector<8x64xf32>
    %330 = math.tanh %329 : vector<8x64xf32>
    %331 = arith.mulf %324, %330 : vector<8x64xf32>
    %cst_135 = arith.constant 0.000000e+00 : f32
    %cst_136 = arith.constant 7.000000e+00 : f32
    %332 = vector.broadcast %cst_135 : f32 to vector<8x64xf32>
    %333 = vector.broadcast %cst_136 : f32 to vector<8x64xf32>
    %334 = arith.select %21, %332, %333 : vector<8x64xi1>, vector<8x64xf32>
    %335 = arith.cmpf olt, %334, %24 : vector<8x64xf32>
    %336 = arith.select %335, %331, %309 : vector<8x64xi1>, vector<8x64xf32>
    %337 = arith.select %335, %329, %310 : vector<8x64xi1>, vector<8x64xf32>
    %338 = arith.cmpf oeq, %334, %26 : vector<8x64xf32>
    %339 = arith.select %338, %331, %27 : vector<8x64xi1>, vector<8x64xf32>
    %c8_137 = arith.constant 8 : index
    %c0_138 = arith.constant 0 : index
    %340 = vector.load %arg11[%c8_137, %c0_138] : memref<64x256xf32, #tpu.memory_space<vmem>>, vector<8x256xf32>
    %c48_139 = arith.constant 48 : index
    %c0_140 = arith.constant 0 : index
    %341 = vector.load %arg11[%c48_139, %c0_140] : memref<64x256xf32, #tpu.memory_space<vmem>>, vector<8x256xf32>
    %342 = arith.select %18, %340, %341 : vector<8x256xi1>, vector<8x256xf32>
    %cst_141 = arith.constant dense<0.000000e+00> : vector<8x256xf32>
    %343 = tpu.matmul %336, %308, %cst_141 {dimension_numbers = #tpu.dot_dimension_numbers<[1], [0], [0], [1], [0, 0, 1, 1], [], []>} : vector<8x64xf32>, vector<64x256xf32>, vector<8x256xf32> -> vector<8x256xf32>
    %344 = arith.addf %342, %343 : vector<8x256xf32>
    %345 = vector.extract_strided_slice %344 {offsets = [0, 0], sizes = [8, 192], strides = [1, 1]} : vector<8x256xf32> to vector<8x192xf32>
    %346 = arith.negf %345 : vector<8x192xf32>
    %347 = math.exp %346 : vector<8x192xf32>
    %cst_142 = arith.constant 1.000000e+00 : f32
    %348 = vector.broadcast %cst_142 : f32 to vector<8x192xf32>
    %349 = arith.addf %348, %347 : vector<8x192xf32>
    %350 = arith.divf %348, %349 : vector<8x192xf32>
    %351 = vector.extract_strided_slice %350 {offsets = [0, 0], sizes = [8, 64], strides = [1, 1]} : vector<8x192xf32> to vector<8x64xf32>
    %352 = vector.extract_strided_slice %350 {offsets = [0, 64], sizes = [8, 64], strides = [1, 1]} : vector<8x192xf32> to vector<8x64xf32>
    %353 = vector.extract_strided_slice %350 {offsets = [0, 128], sizes = [8, 64], strides = [1, 1]} : vector<8x192xf32> to vector<8x64xf32>
    %354 = vector.extract_strided_slice %344 {offsets = [0, 192], sizes = [8, 64], strides = [1, 1]} : vector<8x256xf32> to vector<8x64xf32>
    %355 = math.tanh %354 : vector<8x64xf32>
    %356 = arith.mulf %352, %337 : vector<8x64xf32>
    %357 = arith.mulf %351, %355 : vector<8x64xf32>
    %358 = arith.addf %356, %357 : vector<8x64xf32>
    %359 = math.tanh %358 : vector<8x64xf32>
    %360 = arith.mulf %353, %359 : vector<8x64xf32>
    %cst_143 = arith.constant 1.000000e+00 : f32
    %cst_144 = arith.constant 6.000000e+00 : f32
    %361 = vector.broadcast %cst_143 : f32 to vector<8x64xf32>
    %362 = vector.broadcast %cst_144 : f32 to vector<8x64xf32>
    %363 = arith.select %21, %361, %362 : vector<8x64xi1>, vector<8x64xf32>
    %364 = arith.cmpf olt, %363, %24 : vector<8x64xf32>
    %365 = arith.select %364, %360, %336 : vector<8x64xi1>, vector<8x64xf32>
    %366 = arith.select %364, %358, %337 : vector<8x64xi1>, vector<8x64xf32>
    %367 = arith.cmpf oeq, %363, %26 : vector<8x64xf32>
    %368 = arith.select %367, %360, %339 : vector<8x64xi1>, vector<8x64xf32>
    %c16_145 = arith.constant 16 : index
    %c0_146 = arith.constant 0 : index
    %369 = vector.load %arg11[%c16_145, %c0_146] : memref<64x256xf32, #tpu.memory_space<vmem>>, vector<8x256xf32>
    %c40_147 = arith.constant 40 : index
    %c0_148 = arith.constant 0 : index
    %370 = vector.load %arg11[%c40_147, %c0_148] : memref<64x256xf32, #tpu.memory_space<vmem>>, vector<8x256xf32>
    %371 = arith.select %18, %369, %370 : vector<8x256xi1>, vector<8x256xf32>
    %cst_149 = arith.constant dense<0.000000e+00> : vector<8x256xf32>
    %372 = tpu.matmul %365, %308, %cst_149 {dimension_numbers = #tpu.dot_dimension_numbers<[1], [0], [0], [1], [0, 0, 1, 1], [], []>} : vector<8x64xf32>, vector<64x256xf32>, vector<8x256xf32> -> vector<8x256xf32>
    %373 = arith.addf %371, %372 : vector<8x256xf32>
    %374 = vector.extract_strided_slice %373 {offsets = [0, 0], sizes = [8, 192], strides = [1, 1]} : vector<8x256xf32> to vector<8x192xf32>
    %375 = arith.negf %374 : vector<8x192xf32>
    %376 = math.exp %375 : vector<8x192xf32>
    %cst_150 = arith.constant 1.000000e+00 : f32
    %377 = vector.broadcast %cst_150 : f32 to vector<8x192xf32>
    %378 = arith.addf %377, %376 : vector<8x192xf32>
    %379 = arith.divf %377, %378 : vector<8x192xf32>
    %380 = vector.extract_strided_slice %379 {offsets = [0, 0], sizes = [8, 64], strides = [1, 1]} : vector<8x192xf32> to vector<8x64xf32>
    %381 = vector.extract_strided_slice %379 {offsets = [0, 64], sizes = [8, 64], strides = [1, 1]} : vector<8x192xf32> to vector<8x64xf32>
    %382 = vector.extract_strided_slice %379 {offsets = [0, 128], sizes = [8, 64], strides = [1, 1]} : vector<8x192xf32> to vector<8x64xf32>
    %383 = vector.extract_strided_slice %373 {offsets = [0, 192], sizes = [8, 64], strides = [1, 1]} : vector<8x256xf32> to vector<8x64xf32>
    %384 = math.tanh %383 : vector<8x64xf32>
    %385 = arith.mulf %381, %366 : vector<8x64xf32>
    %386 = arith.mulf %380, %384 : vector<8x64xf32>
    %387 = arith.addf %385, %386 : vector<8x64xf32>
    %388 = math.tanh %387 : vector<8x64xf32>
    %389 = arith.mulf %382, %388 : vector<8x64xf32>
    %cst_151 = arith.constant 2.000000e+00 : f32
    %cst_152 = arith.constant 5.000000e+00 : f32
    %390 = vector.broadcast %cst_151 : f32 to vector<8x64xf32>
    %391 = vector.broadcast %cst_152 : f32 to vector<8x64xf32>
    %392 = arith.select %21, %390, %391 : vector<8x64xi1>, vector<8x64xf32>
    %393 = arith.cmpf olt, %392, %24 : vector<8x64xf32>
    %394 = arith.select %393, %389, %365 : vector<8x64xi1>, vector<8x64xf32>
    %395 = arith.select %393, %387, %366 : vector<8x64xi1>, vector<8x64xf32>
    %396 = arith.cmpf oeq, %392, %26 : vector<8x64xf32>
    %397 = arith.select %396, %389, %368 : vector<8x64xi1>, vector<8x64xf32>
    %c24_153 = arith.constant 24 : index
    %c0_154 = arith.constant 0 : index
    %398 = vector.load %arg11[%c24_153, %c0_154] : memref<64x256xf32, #tpu.memory_space<vmem>>, vector<8x256xf32>
    %c32_155 = arith.constant 32 : index
    %c0_156 = arith.constant 0 : index
    %399 = vector.load %arg11[%c32_155, %c0_156] : memref<64x256xf32, #tpu.memory_space<vmem>>, vector<8x256xf32>
    %400 = arith.select %18, %398, %399 : vector<8x256xi1>, vector<8x256xf32>
    %cst_157 = arith.constant dense<0.000000e+00> : vector<8x256xf32>
    %401 = tpu.matmul %394, %308, %cst_157 {dimension_numbers = #tpu.dot_dimension_numbers<[1], [0], [0], [1], [0, 0, 1, 1], [], []>} : vector<8x64xf32>, vector<64x256xf32>, vector<8x256xf32> -> vector<8x256xf32>
    %402 = arith.addf %400, %401 : vector<8x256xf32>
    %403 = vector.extract_strided_slice %402 {offsets = [0, 0], sizes = [8, 192], strides = [1, 1]} : vector<8x256xf32> to vector<8x192xf32>
    %404 = arith.negf %403 : vector<8x192xf32>
    %405 = math.exp %404 : vector<8x192xf32>
    %cst_158 = arith.constant 1.000000e+00 : f32
    %406 = vector.broadcast %cst_158 : f32 to vector<8x192xf32>
    %407 = arith.addf %406, %405 : vector<8x192xf32>
    %408 = arith.divf %406, %407 : vector<8x192xf32>
    %409 = vector.extract_strided_slice %408 {offsets = [0, 0], sizes = [8, 64], strides = [1, 1]} : vector<8x192xf32> to vector<8x64xf32>
    %410 = vector.extract_strided_slice %408 {offsets = [0, 64], sizes = [8, 64], strides = [1, 1]} : vector<8x192xf32> to vector<8x64xf32>
    %411 = vector.extract_strided_slice %408 {offsets = [0, 128], sizes = [8, 64], strides = [1, 1]} : vector<8x192xf32> to vector<8x64xf32>
    %412 = vector.extract_strided_slice %402 {offsets = [0, 192], sizes = [8, 64], strides = [1, 1]} : vector<8x256xf32> to vector<8x64xf32>
    %413 = math.tanh %412 : vector<8x64xf32>
    %414 = arith.mulf %410, %395 : vector<8x64xf32>
    %415 = arith.mulf %409, %413 : vector<8x64xf32>
    %416 = arith.addf %414, %415 : vector<8x64xf32>
    %417 = math.tanh %416 : vector<8x64xf32>
    %418 = arith.mulf %411, %417 : vector<8x64xf32>
    %cst_159 = arith.constant 3.000000e+00 : f32
    %cst_160 = arith.constant 4.000000e+00 : f32
    %419 = vector.broadcast %cst_159 : f32 to vector<8x64xf32>
    %420 = vector.broadcast %cst_160 : f32 to vector<8x64xf32>
    %421 = arith.select %21, %419, %420 : vector<8x64xi1>, vector<8x64xf32>
    %422 = arith.cmpf olt, %421, %24 : vector<8x64xf32>
    %423 = arith.select %422, %418, %394 : vector<8x64xi1>, vector<8x64xf32>
    %424 = arith.select %422, %416, %395 : vector<8x64xi1>, vector<8x64xf32>
    %425 = arith.cmpf oeq, %421, %26 : vector<8x64xf32>
    %426 = arith.select %425, %418, %397 : vector<8x64xi1>, vector<8x64xf32>
    %c32_161 = arith.constant 32 : index
    %c0_162 = arith.constant 0 : index
    %427 = vector.load %arg11[%c32_161, %c0_162] : memref<64x256xf32, #tpu.memory_space<vmem>>, vector<8x256xf32>
    %c24_163 = arith.constant 24 : index
    %c0_164 = arith.constant 0 : index
    %428 = vector.load %arg11[%c24_163, %c0_164] : memref<64x256xf32, #tpu.memory_space<vmem>>, vector<8x256xf32>
    %429 = arith.select %18, %427, %428 : vector<8x256xi1>, vector<8x256xf32>
    %cst_165 = arith.constant dense<0.000000e+00> : vector<8x256xf32>
    %430 = tpu.matmul %423, %308, %cst_165 {dimension_numbers = #tpu.dot_dimension_numbers<[1], [0], [0], [1], [0, 0, 1, 1], [], []>} : vector<8x64xf32>, vector<64x256xf32>, vector<8x256xf32> -> vector<8x256xf32>
    %431 = arith.addf %429, %430 : vector<8x256xf32>
    %432 = vector.extract_strided_slice %431 {offsets = [0, 0], sizes = [8, 192], strides = [1, 1]} : vector<8x256xf32> to vector<8x192xf32>
    %433 = arith.negf %432 : vector<8x192xf32>
    %434 = math.exp %433 : vector<8x192xf32>
    %cst_166 = arith.constant 1.000000e+00 : f32
    %435 = vector.broadcast %cst_166 : f32 to vector<8x192xf32>
    %436 = arith.addf %435, %434 : vector<8x192xf32>
    %437 = arith.divf %435, %436 : vector<8x192xf32>
    %438 = vector.extract_strided_slice %437 {offsets = [0, 0], sizes = [8, 64], strides = [1, 1]} : vector<8x192xf32> to vector<8x64xf32>
    %439 = vector.extract_strided_slice %437 {offsets = [0, 64], sizes = [8, 64], strides = [1, 1]} : vector<8x192xf32> to vector<8x64xf32>
    %440 = vector.extract_strided_slice %437 {offsets = [0, 128], sizes = [8, 64], strides = [1, 1]} : vector<8x192xf32> to vector<8x64xf32>
    %441 = vector.extract_strided_slice %431 {offsets = [0, 192], sizes = [8, 64], strides = [1, 1]} : vector<8x256xf32> to vector<8x64xf32>
    %442 = math.tanh %441 : vector<8x64xf32>
    %443 = arith.mulf %439, %424 : vector<8x64xf32>
    %444 = arith.mulf %438, %442 : vector<8x64xf32>
    %445 = arith.addf %443, %444 : vector<8x64xf32>
    %446 = math.tanh %445 : vector<8x64xf32>
    %447 = arith.mulf %440, %446 : vector<8x64xf32>
    %cst_167 = arith.constant 4.000000e+00 : f32
    %cst_168 = arith.constant 3.000000e+00 : f32
    %448 = vector.broadcast %cst_167 : f32 to vector<8x64xf32>
    %449 = vector.broadcast %cst_168 : f32 to vector<8x64xf32>
    %450 = arith.select %21, %448, %449 : vector<8x64xi1>, vector<8x64xf32>
    %451 = arith.cmpf olt, %450, %24 : vector<8x64xf32>
    %452 = arith.select %451, %447, %423 : vector<8x64xi1>, vector<8x64xf32>
    %453 = arith.select %451, %445, %424 : vector<8x64xi1>, vector<8x64xf32>
    %454 = arith.cmpf oeq, %450, %26 : vector<8x64xf32>
    %455 = arith.select %454, %447, %426 : vector<8x64xi1>, vector<8x64xf32>
    %c40_169 = arith.constant 40 : index
    %c0_170 = arith.constant 0 : index
    %456 = vector.load %arg11[%c40_169, %c0_170] : memref<64x256xf32, #tpu.memory_space<vmem>>, vector<8x256xf32>
    %c16_171 = arith.constant 16 : index
    %c0_172 = arith.constant 0 : index
    %457 = vector.load %arg11[%c16_171, %c0_172] : memref<64x256xf32, #tpu.memory_space<vmem>>, vector<8x256xf32>
    %458 = arith.select %18, %456, %457 : vector<8x256xi1>, vector<8x256xf32>
    %cst_173 = arith.constant dense<0.000000e+00> : vector<8x256xf32>
    %459 = tpu.matmul %452, %308, %cst_173 {dimension_numbers = #tpu.dot_dimension_numbers<[1], [0], [0], [1], [0, 0, 1, 1], [], []>} : vector<8x64xf32>, vector<64x256xf32>, vector<8x256xf32> -> vector<8x256xf32>
    %460 = arith.addf %458, %459 : vector<8x256xf32>
    %461 = vector.extract_strided_slice %460 {offsets = [0, 0], sizes = [8, 192], strides = [1, 1]} : vector<8x256xf32> to vector<8x192xf32>
    %462 = arith.negf %461 : vector<8x192xf32>
    %463 = math.exp %462 : vector<8x192xf32>
    %cst_174 = arith.constant 1.000000e+00 : f32
    %464 = vector.broadcast %cst_174 : f32 to vector<8x192xf32>
    %465 = arith.addf %464, %463 : vector<8x192xf32>
    %466 = arith.divf %464, %465 : vector<8x192xf32>
    %467 = vector.extract_strided_slice %466 {offsets = [0, 0], sizes = [8, 64], strides = [1, 1]} : vector<8x192xf32> to vector<8x64xf32>
    %468 = vector.extract_strided_slice %466 {offsets = [0, 64], sizes = [8, 64], strides = [1, 1]} : vector<8x192xf32> to vector<8x64xf32>
    %469 = vector.extract_strided_slice %466 {offsets = [0, 128], sizes = [8, 64], strides = [1, 1]} : vector<8x192xf32> to vector<8x64xf32>
    %470 = vector.extract_strided_slice %460 {offsets = [0, 192], sizes = [8, 64], strides = [1, 1]} : vector<8x256xf32> to vector<8x64xf32>
    %471 = math.tanh %470 : vector<8x64xf32>
    %472 = arith.mulf %468, %453 : vector<8x64xf32>
    %473 = arith.mulf %467, %471 : vector<8x64xf32>
    %474 = arith.addf %472, %473 : vector<8x64xf32>
    %475 = math.tanh %474 : vector<8x64xf32>
    %476 = arith.mulf %469, %475 : vector<8x64xf32>
    %cst_175 = arith.constant 5.000000e+00 : f32
    %cst_176 = arith.constant 2.000000e+00 : f32
    %477 = vector.broadcast %cst_175 : f32 to vector<8x64xf32>
    %478 = vector.broadcast %cst_176 : f32 to vector<8x64xf32>
    %479 = arith.select %21, %477, %478 : vector<8x64xi1>, vector<8x64xf32>
    %480 = arith.cmpf olt, %479, %24 : vector<8x64xf32>
    %481 = arith.select %480, %476, %452 : vector<8x64xi1>, vector<8x64xf32>
    %482 = arith.select %480, %474, %453 : vector<8x64xi1>, vector<8x64xf32>
    %483 = arith.cmpf oeq, %479, %26 : vector<8x64xf32>
    %484 = arith.select %483, %476, %455 : vector<8x64xi1>, vector<8x64xf32>
    %c48_177 = arith.constant 48 : index
    %c0_178 = arith.constant 0 : index
    %485 = vector.load %arg11[%c48_177, %c0_178] : memref<64x256xf32, #tpu.memory_space<vmem>>, vector<8x256xf32>
    %c8_179 = arith.constant 8 : index
    %c0_180 = arith.constant 0 : index
    %486 = vector.load %arg11[%c8_179, %c0_180] : memref<64x256xf32, #tpu.memory_space<vmem>>, vector<8x256xf32>
    %487 = arith.select %18, %485, %486 : vector<8x256xi1>, vector<8x256xf32>
    %cst_181 = arith.constant dense<0.000000e+00> : vector<8x256xf32>
    %488 = tpu.matmul %481, %308, %cst_181 {dimension_numbers = #tpu.dot_dimension_numbers<[1], [0], [0], [1], [0, 0, 1, 1], [], []>} : vector<8x64xf32>, vector<64x256xf32>, vector<8x256xf32> -> vector<8x256xf32>
    %489 = arith.addf %487, %488 : vector<8x256xf32>
    %490 = vector.extract_strided_slice %489 {offsets = [0, 0], sizes = [8, 192], strides = [1, 1]} : vector<8x256xf32> to vector<8x192xf32>
    %491 = arith.negf %490 : vector<8x192xf32>
    %492 = math.exp %491 : vector<8x192xf32>
    %cst_182 = arith.constant 1.000000e+00 : f32
    %493 = vector.broadcast %cst_182 : f32 to vector<8x192xf32>
    %494 = arith.addf %493, %492 : vector<8x192xf32>
    %495 = arith.divf %493, %494 : vector<8x192xf32>
    %496 = vector.extract_strided_slice %495 {offsets = [0, 0], sizes = [8, 64], strides = [1, 1]} : vector<8x192xf32> to vector<8x64xf32>
    %497 = vector.extract_strided_slice %495 {offsets = [0, 64], sizes = [8, 64], strides = [1, 1]} : vector<8x192xf32> to vector<8x64xf32>
    %498 = vector.extract_strided_slice %495 {offsets = [0, 128], sizes = [8, 64], strides = [1, 1]} : vector<8x192xf32> to vector<8x64xf32>
    %499 = vector.extract_strided_slice %489 {offsets = [0, 192], sizes = [8, 64], strides = [1, 1]} : vector<8x256xf32> to vector<8x64xf32>
    %500 = math.tanh %499 : vector<8x64xf32>
    %501 = arith.mulf %497, %482 : vector<8x64xf32>
    %502 = arith.mulf %496, %500 : vector<8x64xf32>
    %503 = arith.addf %501, %502 : vector<8x64xf32>
    %504 = math.tanh %503 : vector<8x64xf32>
    %505 = arith.mulf %498, %504 : vector<8x64xf32>
    %cst_183 = arith.constant 6.000000e+00 : f32
    %cst_184 = arith.constant 1.000000e+00 : f32
    %506 = vector.broadcast %cst_183 : f32 to vector<8x64xf32>
    %507 = vector.broadcast %cst_184 : f32 to vector<8x64xf32>
    %508 = arith.select %21, %506, %507 : vector<8x64xi1>, vector<8x64xf32>
    %509 = arith.cmpf olt, %508, %24 : vector<8x64xf32>
    %510 = arith.select %509, %505, %481 : vector<8x64xi1>, vector<8x64xf32>
    %511 = arith.select %509, %503, %482 : vector<8x64xi1>, vector<8x64xf32>
    %512 = arith.cmpf oeq, %508, %26 : vector<8x64xf32>
    %513 = arith.select %512, %505, %484 : vector<8x64xi1>, vector<8x64xf32>
    %c56_185 = arith.constant 56 : index
    %c0_186 = arith.constant 0 : index
    %514 = vector.load %arg11[%c56_185, %c0_186] : memref<64x256xf32, #tpu.memory_space<vmem>>, vector<8x256xf32>
    %c0_187 = arith.constant 0 : index
    %c0_188 = arith.constant 0 : index
    %515 = vector.load %arg11[%c0_187, %c0_188] : memref<64x256xf32, #tpu.memory_space<vmem>>, vector<8x256xf32>
    %516 = arith.select %18, %514, %515 : vector<8x256xi1>, vector<8x256xf32>
    %cst_189 = arith.constant dense<0.000000e+00> : vector<8x256xf32>
    %517 = tpu.matmul %510, %308, %cst_189 {dimension_numbers = #tpu.dot_dimension_numbers<[1], [0], [0], [1], [0, 0, 1, 1], [], []>} : vector<8x64xf32>, vector<64x256xf32>, vector<8x256xf32> -> vector<8x256xf32>
    %518 = arith.addf %516, %517 : vector<8x256xf32>
    %519 = vector.extract_strided_slice %518 {offsets = [0, 0], sizes = [8, 192], strides = [1, 1]} : vector<8x256xf32> to vector<8x192xf32>
    %520 = arith.negf %519 : vector<8x192xf32>
    %521 = math.exp %520 : vector<8x192xf32>
    %cst_190 = arith.constant 1.000000e+00 : f32
    %522 = vector.broadcast %cst_190 : f32 to vector<8x192xf32>
    %523 = arith.addf %522, %521 : vector<8x192xf32>
    %524 = arith.divf %522, %523 : vector<8x192xf32>
    %525 = vector.extract_strided_slice %524 {offsets = [0, 0], sizes = [8, 64], strides = [1, 1]} : vector<8x192xf32> to vector<8x64xf32>
    %526 = vector.extract_strided_slice %524 {offsets = [0, 64], sizes = [8, 64], strides = [1, 1]} : vector<8x192xf32> to vector<8x64xf32>
    %527 = vector.extract_strided_slice %524 {offsets = [0, 128], sizes = [8, 64], strides = [1, 1]} : vector<8x192xf32> to vector<8x64xf32>
    %528 = vector.extract_strided_slice %518 {offsets = [0, 192], sizes = [8, 64], strides = [1, 1]} : vector<8x256xf32> to vector<8x64xf32>
    %529 = math.tanh %528 : vector<8x64xf32>
    %530 = arith.mulf %526, %511 : vector<8x64xf32>
    %531 = arith.mulf %525, %529 : vector<8x64xf32>
    %532 = arith.addf %530, %531 : vector<8x64xf32>
    %533 = math.tanh %532 : vector<8x64xf32>
    %534 = arith.mulf %527, %533 : vector<8x64xf32>
    %cst_191 = arith.constant 7.000000e+00 : f32
    %cst_192 = arith.constant 0.000000e+00 : f32
    %535 = vector.broadcast %cst_191 : f32 to vector<8x64xf32>
    %536 = vector.broadcast %cst_192 : f32 to vector<8x64xf32>
    %537 = arith.select %21, %535, %536 : vector<8x64xi1>, vector<8x64xf32>
    %538 = arith.cmpf oeq, %537, %26 : vector<8x64xf32>
    %539 = arith.select %538, %534, %513 : vector<8x64xi1>, vector<8x64xf32>
    %c0_193 = arith.constant 0 : index
    %c0_194 = arith.constant 0 : index
    %540 = vector.load %arg8[%c0_193, %c0_194] : memref<64x2xf32, #tpu.memory_space<vmem>>, vector<64x2xf32>
    %cst_195 = arith.constant dense<0.000000e+00> : vector<8x2xf32>
    %541 = tpu.matmul %539, %540, %cst_195 {dimension_numbers = #tpu.dot_dimension_numbers<[1], [0], [0], [1], [0, 0, 1, 1], [], []>} : vector<8x64xf32>, vector<64x2xf32>, vector<8x2xf32> -> vector<8x2xf32>
    %c0_196 = arith.constant 0 : index
    %c0_197 = arith.constant 0 : index
    %542 = vector.load %arg9[%c0_196, %c0_197] : memref<1x2xf32, #tpu.memory_space<vmem>>, vector<1x2xf32>
    %543 = vector.broadcast %542 : vector<1x2xf32> to vector<8x2xf32>
    %544 = arith.addf %541, %543 : vector<8x2xf32>
    %c0_198 = arith.constant 0 : index
    %c0_199 = arith.constant 0 : index
    %545 = vector.load %arg10[%c0_198, %c0_199] : memref<8x2xf32, #tpu.memory_space<vmem>>, vector<8x2xf32>
    tpu.vector_store %arg10[%c0_198, %c0_199], %544 {strides = array<i32>} : memref<8x2xf32, #tpu.memory_space<vmem>>, vector<8x2xf32>,
    return
  }
}

</mosaic_0001>

<llo_original>
// kernel: tpu_custom_call.1
$region0: #{tpu_custom_call.1}
  #allocation0 [shape = 'u32[]', space=smem, size = 0x4, offset = 0x4, fixed_abs, tag = 'smem constant byte address 0x4 - core index']
  #allocation1 [shape = 'u32[144,128]{1,0:T(1,128)}', space=vmem, size = 0x12000, scoped, tag = 'internal scratch']
  #allocation2 [shape = 'f32[64,256]{1,0:T(8,128)}', space=vmem, size = 0x10000, scoped, tag = 'scratch operand']
  #allocation3 [shape = 'f32[64,64]{1,0:T(8,128)}', space=vmem, size = 0x8000, scoped, tag = 'scratch operand']
  #allocation4 [shape = 'f32[64,64]{1,0:T(8,128)}', space=vmem, size = 0x8000, scoped, tag = 'scratch operand']
  %s0 = inlined_call_operand.vmem [shape: bf16[64,16], index: 0, kind: input, shape index: {}]
  %s1 = inlined_call_operand.vmem [shape: f32[8,1], index: 1, kind: input, shape index: {}]
  %s2 = inlined_call_operand.hbm [shape: bf16[16,256], index: 2, kind: input, shape index: {}]
  %s3 = inlined_call_operand.hbm [shape: f32[64,256], index: 3, kind: input, shape index: {}]
  %s4 = inlined_call_operand.vmem [shape: f32[1,256], index: 4, kind: input, shape index: {}]
  %s5 = inlined_call_operand.hbm [shape: bf16[64,256], index: 5, kind: input, shape index: {}]
  %s6 = inlined_call_operand.vmem [shape: f32[64,256], index: 6, kind: input, shape index: {}]
  %s7 = inlined_call_operand.vmem [shape: f32[1,256], index: 7, kind: input, shape index: {}]
  %s8 = inlined_call_operand.vmem [shape: f32[64,2], index: 8, kind: input, shape index: {}]
  %s9 = inlined_call_operand.vmem [shape: f32[1,2], index: 9, kind: input, shape index: {}]
  %s10 = inlined_call_operand.vmem [shape: f32[8,2], index: 10, kind: output, shape index: {}]
  %s11 = sld [smem:[#allocation0]]
  $region62: #{tpu_custom_call.1} parent=0
    _
  %s13 = ssub.s32 1, %s11
  %s14 = scalar_select 0, %s13, %s11
  $region1: #{tpu_custom_call.1} parent=0
    #allocation5 [shape = 'u8[8192]{0}', space=vmem, size = 0x2000, scoped, tag = 'input window, operand 2, single buffered']
    #allocation6 [shape = 's32[1]{0}', space=sflag, size = 0x4, scoped, tag = 'scoped memory for tpu_custom_call.1']
    #allocation7 [shape = 'u8[65536]{0}', space=vmem, size = 0x10000, scoped, tag = 'input window, operand 3, single buffered']
    #allocation8 [shape = 's32[1]{0}', space=sflag, size = 0x4, scoped, tag = 'scoped memory for tpu_custom_call.1']
    #allocation9 [shape = 'u8[32768]{0}', space=vmem, size = 0x8000, scoped, tag = 'input window, operand 5, single buffered']
    %15 = vsyncpa [#allocation6], 0
    %16 = vsyncpa [#allocation8], 0
    // Predicated region
    $region2: #{tpu_custom_call.1} parent=1 // pred_check
      _
    $region3: #{tpu_custom_call.1} parent=1 // pred_check_branch
      %18 = sbr.rel (0) target = $region5
    $region4: #{tpu_custom_call.1} parent=1 // pred_region
      _
    $region5: #{tpu_custom_call.1} parent=1 // pred_fallthru
      _
    // Predicated region
    $region6: #{tpu_custom_call.1} parent=1 // pred_check
      _
    $region7: #{tpu_custom_call.1} parent=1 // pred_check_branch
      %20 = sbr.rel (0) target = $region9
    $region8: #{tpu_custom_call.1} parent=1 // pred_region
      _
    $region9: #{tpu_custom_call.1} parent=1 // pred_fallthru
      _
    // Predicated region
    $region10: #{tpu_custom_call.1} parent=1 // pred_check
      _
    $region11: #{tpu_custom_call.1} parent=1 // pred_check_branch
      %22 = sbr.rel (0) target = $region13
    $region12: #{tpu_custom_call.1} parent=1 // pred_region
      %s24 = ssub.s32 256, 256
      %25 = vsyncadd [#allocation6], %s24
      %s26 = sshll.u32 [#allocation5], 4
      %s27 = int_to_ptr.vmem [resolvable:$true] %s26
      %32 = dma.hbm_to_vmem [thread:$0]  %s2, 256, %s27, [#allocation6], 128, 128, 8
    $region13: #{tpu_custom_call.1} parent=1 // pred_fallthru
      _
    // Predicated region
    $region14: #{tpu_custom_call.1} parent=1 // pred_check
      _
    $region15: #{tpu_custom_call.1} parent=1 // pred_check_branch
      %34 = sbr.rel (0) target = $region17
    $region16: #{tpu_custom_call.1} parent=1 // pred_region
      %s36 = ssub.s32 2048, 2048
      %37 = vsyncadd [#allocation8], %s36
      %s38 = sshll.u32 [#allocation7], 4
      %s39 = int_to_ptr.vmem [resolvable:$true] %s38
      %44 = dma.hbm_to_vmem [thread:$0]  %s3, 2048, %s39, [#allocation8], 256, 256, 16
    $region17: #{tpu_custom_call.1} parent=1 // pred_fallthru
      _
    // Predicated region
    $region18: #{tpu_custom_call.1} parent=1 // pred_check
      _
    $region19: #{tpu_custom_call.1} parent=1 // pred_check_branch
      %46 = sbr.rel (0) target = $region21
    $region20: #{tpu_custom_call.1} parent=1 // pred_region
      _
    $region21: #{tpu_custom_call.1} parent=1 // pred_fallthru
      _
    // Predicated region
    $region22: #{tpu_custom_call.1} parent=1 // pred_check
      _
    $region23: #{tpu_custom_call.1} parent=1 // pred_check_branch
      %48 = sbr.rel (0) target = $region25
    $region24: #{tpu_custom_call.1} parent=1 // pred_region
      %s50 = ssub.s32 1024, 1024
      %51 = vsyncadd [#allocation8], %s50
      %s52 = sshll.u32 [#allocation9], 4
      %s53 = int_to_ptr.vmem [resolvable:$true] %s52
      %58 = dma.hbm_to_vmem [thread:$0]  %s5, 1024, %s53, [#allocation8], 128, 128, 8
    $region25: #{tpu_custom_call.1} parent=1 // pred_fallthru
      _
    // Predicated region
    $region26: #{tpu_custom_call.1} parent=1 // pred_check
      _
    $region27: #{tpu_custom_call.1} parent=1 // pred_check_branch
      %60 = sbr.rel (0) target = $region29
    $region28: #{tpu_custom_call.1} parent=1 // pred_region
      _
    $region29: #{tpu_custom_call.1} parent=1 // pred_fallthru
      _
    // Predicated region
    $region30: #{tpu_custom_call.1} parent=1 // pred_check
      _
    $region31: #{tpu_custom_call.1} parent=1 // pred_check_branch
      %62 = sbr.rel (0) target = $region33
    $region32: #{tpu_custom_call.1} parent=1 // pred_region
      _
    $region33: #{tpu_custom_call.1} parent=1 // pred_fallthru
      _
    // Predicated region
    $region34: #{tpu_custom_call.1} parent=1 // pred_check
      _
    $region35: #{tpu_custom_call.1} parent=1 // pred_check_branch
      %64 = sbr.rel (0) target = $region37
    $region36: #{tpu_custom_call.1} parent=1 // pred_region
      _
    $region37: #{tpu_custom_call.1} parent=1 // pred_fallthru
      _
    // Predicated region
    $region38: #{tpu_custom_call.1} parent=1 // pred_check
      _
    $region39: #{tpu_custom_call.1} parent=1 // pred_check_branch
      %66 = sbr.rel (0) target = $region41
    $region40: #{tpu_custom_call.1} parent=1 // pred_region
      _
    $region41: #{tpu_custom_call.1} parent=1 // pred_fallthru
      _
    // Predicated region
    $region42: #{tpu_custom_call.1} parent=1 // pred_check
      _
    $region43: #{tpu_custom_call.1} parent=1 // pred_check_branch
      %68 = sbr.rel (0) target = $region45
    $region44: #{tpu_custom_call.1} parent=1 // pred_region
      %69 = dma.done [#allocation6], 256
    $region45: #{tpu_custom_call.1} parent=1 // pred_fallthru
      _
    // Predicated region
    $region46: #{tpu_custom_call.1} parent=1 // pred_check
      _
    $region47: #{tpu_custom_call.1} parent=1 // pred_check_branch
      %71 = sbr.rel (0) target = $region49
    $region48: #{tpu_custom_call.1} parent=1 // pred_region
      %72 = dma.done [#allocation8], 2048
    $region49: #{tpu_custom_call.1} parent=1 // pred_fallthru
      _
    // Predicated region
    $region50: #{tpu_custom_call.1} parent=1 // pred_check
      _
    $region51: #{tpu_custom_call.1} parent=1 // pred_check_branch
      %74 = sbr.rel (0) target = $region53
    $region52: #{tpu_custom_call.1} parent=1 // pred_region
      %75 = dma.done [#allocation8], 1024
    $region53: #{tpu_custom_call.1} parent=1 // pred_fallthru
      _
    %v77 = vlaneseq
    %v78 = vand.u32 %v77, 127
    %v79 = vadd.s32 %v78, 128
    %vm80 = vcmp.lt.s32.totalorder %v78, 0
    %v81 = vsub.s32 0, %v78
    %v82 = vsel %vm80, %v81, %v78
    %v83 = vshrl.u32 %v82, 6
    %v84 = vand.u32 %v82, 63
    %v85 = vsub.s32 0, %v84
    %v86 = vsel %vm80, %v85, %v84
    %vm87 = vcmp.lt.s32.totalorder %v79, 0
    %v88 = vsub.s32 0, %v79
    %v89 = vsel %vm87, %v88, %v79
    %v90 = vshrl.u32 %v89, 6
    %v91 = vand.u32 %v89, 63
    %v92 = vsub.s32 0, %v91
    %v93 = vsel %vm87, %v92, %v91
    %vm94 = vcmp.ne.s32.totalorder %v86, 0
    %vm95 = vcmp.ne.s32.totalorder %v93, 0
    %vm96 = vcmp.lt.s32.totalorder %v86, 0
    %vm97 = vcmp.lt.s32.totalorder %v93, 0
    %vm98 = vmand %vm96, %vm94
    %vm99 = vmand %vm97, %vm95
    %v100 = vadd.s32 %v86, 64
    %v101 = vadd.s32 %v93, 64
    %v102 = vsel %vm98, %v100, %v86
    %v103 = vsel %vm99, %v101, %v93
    %vm104 = vcmp.lt.s32.totalorder %v102, 32
    %vm105 = vcmp.lt.s32.totalorder %v103, 32
    %vm106 = vcmp.lt.s32.totalorder %v78, 32
    %v107 = vld [vmem:[%s1] sm:$0xff]
    %109 = vset.pattern.permute.xlu0 0
    %110 = vperm.xlu0 %109, %v107
    %v111 = vpop.permute.xlu0 %110
    %v113 = vsub.f32 %v111, 1.0
    %v114 = vld [vmem:[%s0] sm:$0xf]
    %v115 = vld [vmem:[%s0 + $0x4] sm:$0xf]
    %v116 = vld [vmem:[%s0 + $0x8] sm:$0xf]
    %v117 = vld [vmem:[%s0 + $0xc] sm:$0xf]
    %v118 = vld [vmem:[%s0 + $0x10] sm:$0xf]
    %v119 = vld [vmem:[%s0 + $0x14] sm:$0xf]
    %v120 = vld [vmem:[%s0 + $0x18] sm:$0xf]
    %v121 = vld [vmem:[%s0 + $0x1c] sm:$0xf]
    %v122 = vld [vmem:[#allocation5] sm:$0xff]
    %v123 = vld [vmem:[#allocation5 + $0x8] sm:$0xff]
    %v124 = vld [vmem:[%s4] sm:$0x3]
    %v126 = vlaneseq
    %v127 = vshrl.u32 %v126, 7
    %v128 = vsub.s32 0, %v127
    %v129 = vrot.slane %v124, %v128
    %v130 = vlaneseq
    %v131 = vshrl.u32 %v130, 7
    %v132 = vsub.s32 1, %v131
    %v133 = vrot.slane %v124, %v132
    %v144 = vunpack.c.l.b16 %v114
    %v145 = vunpack.c.l.b16 %v115
    %v146 = vunpack.c.l.b16 %v116
    %v147 = vunpack.c.l.b16 %v117
    %v148 = vunpack.c.l.b16 %v118
    %v149 = vunpack.c.l.b16 %v119
    %v150 = vunpack.c.l.b16 %v120
    %v151 = vunpack.c.l.b16 %v121
    %v152 = vpack.c.b16 %v145, %v144
    %v153 = vpack.c.b16 %v147, %v146
    %v154 = vpack.c.b16 %v149, %v148
    %v155 = vpack.c.b16 %v151, %v150
    %v158 = vunpack.c.l.b16 %v122
    %v159 = vunpack.c.h.b16 %v122
    %v160 = vunpack.c.l.b16 %v123
    %v161 = vunpack.c.h.b16 %v123
    %v162 = vpack.c.b16 %v160, %v158
    %v163 = vpack.c.b16 %v161, %v159
    %vm166 = vcmask 130048
    %v168 = vsel %vm166, %v152, 0
    %v171 = vsel %vm166, %v153, 0
    %v174 = vsel %vm166, %v154, 0
    %v177 = vsel %vm166, %v155, 0
    %179 = vmatprep.subr.bf16.mxu0 %v163
    %180 = vmatpush1.bf16.msra.mxu0 %v162
    %181 = vmatprep.subr.bf16.mxu0 0
    %182 = vmatpush1.bf16.msra.mxu0 0
    %183 = vmatprep.subr.bf16.mxu0 0
    %184 = vmatpush1.bf16.msra.mxu0 0
    %185 = vmatprep.subr.bf16.mxu0 0
    %186 = vmatpush1.bf16.msra.mxu0 0
    %187 = vmatprep.subr.bf16.mxu0 0
    %188 = vmatpush1.bf16.msra.mxu0 0
    %189 = vmatprep.subr.bf16.mxu0 0
    %190 = vmatpush1.bf16.msra.mxu0 0
    %191 = vmatprep.subr.bf16.mxu0 0
    %192 = vmatpush1.bf16.msra.mxu0 0
    %193 = vmatprep.subr.bf16.mxu0 0
    %194 = vmatpush1.bf16.msra.mxu0 0
    %195 = vmatprep.subr.bf16.mxu0 0
    %196 = vmatpush1.bf16.msra.mxu0 0
    %197 = vmatprep.subr.bf16.mxu0 0
    %198 = vmatpush1.bf16.msra.mxu0 0
    %199 = vmatprep.subr.bf16.mxu0 0
    %200 = vmatpush1.bf16.msra.mxu0 0
    %201 = vmatprep.subr.bf16.mxu0 0
    %202 = vmatpush1.bf16.msra.mxu0 0
    %203 = vmatprep.subr.bf16.mxu0 0
    %204 = vmatpush1.bf16.msra.mxu0 0
    %205 = vmatprep.subr.bf16.mxu0 0
    %206 = vmatpush1.bf16.msra.mxu0 0
    %207 = vmatprep.subr.bf16.mxu0 0
    %208 = vmatpush1.bf16.msra.mxu0 0
    %209 = vmatprep.subr.bf16.mxu0 0
    %210 = vmatpush1.bf16.msra.mxu0 0
    %211 = vmatprep.mubr.bf16.mxu0 0
    %212 = vmatmul.mubr.bf16.gmra.mrb[0].mxu0 %v168
    %v213 = vpop.f32.mrb[0].mxu0
    %v214 = vadd.f32 %v129, %v213
    %v215 = vpop.f32.mrb[0].mxu0
    %v216 = vadd.f32 %v133, %v215
    %v217 = vpop.f32.mrb[0].mxu0
    %v218 = vadd.f32 %v129, %v217
    %v219 = vpop.f32.mrb[0].mxu0
    %v220 = vadd.f32 %v133, %v219
    %221 = vmatprep.mubr.bf16.mxu0 0
    %222 = vmatmul.mubr.bf16.gmra.mrb[0].mxu0 %v171
    %v223 = vpop.f32.mrb[0].mxu0
    %v224 = vadd.f32 %v129, %v223
    %v225 = vpop.f32.mrb[0].mxu0
    %v226 = vadd.f32 %v133, %v225
    %v227 = vpop.f32.mrb[0].mxu0
    %v228 = vadd.f32 %v129, %v227
    %v229 = vpop.f32.mrb[0].mxu0
    %v230 = vadd.f32 %v133, %v229
    %231 = vmatprep.mubr.bf16.mxu0 0
    %232 = vmatmul.mubr.bf16.gmra.mrb[0].mxu0 %v174
    %v233 = vpop.f32.mrb[0].mxu0
    %v234 = vadd.f32 %v129, %v233
    %v235 = vpop.f32.mrb[0].mxu0
    %v236 = vadd.f32 %v133, %v235
    %v237 = vpop.f32.mrb[0].mxu0
    %v238 = vadd.f32 %v129, %v237
    %v239 = vpop.f32.mrb[0].mxu0
    %v240 = vadd.f32 %v133, %v239
    %241 = vmatprep.mubr.bf16.mxu0 0
    %242 = vmatmul.mubr.bf16.gmra.mrb[0].mxu0 %v177
    %v243 = vpop.f32.mrb[0].mxu0
    %v244 = vadd.f32 %v129, %v243
    %v245 = vpop.f32.mrb[0].mxu0
    %v246 = vadd.f32 %v133, %v245
    %v247 = vpop.f32.mrb[0].mxu0
    %v248 = vadd.f32 %v129, %v247
    %v249 = vpop.f32.mrb[0].mxu0
    %v250 = vadd.f32 %v133, %v249
    %251 = vdwg.mxu0
    %252 = vst [vmem:[#allocation2] sm:$0xff] %v214
    %253 = vst [vmem:[#allocation2 + $0x8] sm:$0xff] %v216
    %254 = vst [vmem:[#allocation2 + $0x10] sm:$0xff] %v218
    %255 = vst [vmem:[#allocation2 + $0x18] sm:$0xff] %v220
    %256 = vst [vmem:[#allocation2 + $0x20] sm:$0xff] %v224
    %257 = vst [vmem:[#allocation2 + $0x28] sm:$0xff] %v226
    %258 = vst [vmem:[#allocation2 + $0x30] sm:$0xff] %v228
    %259 = vst [vmem:[#allocation2 + $0x38] sm:$0xff] %v230
    %260 = vst [vmem:[#allocation2 + $0x40] sm:$0xff] %v234
    %261 = vst [vmem:[#allocation2 + $0x48] sm:$0xff] %v236
    %262 = vst [vmem:[#allocation2 + $0x50] sm:$0xff] %v238
    %263 = vst [vmem:[#allocation2 + $0x58] sm:$0xff] %v240
    %264 = vst [vmem:[#allocation2 + $0x60] sm:$0xff] %v244
    %265 = vst [vmem:[#allocation2 + $0x68] sm:$0xff] %v246
    %266 = vst [vmem:[#allocation2 + $0x70] sm:$0xff] %v248
    %267 = vst [vmem:[#allocation2 + $0x78] sm:$0xff] %v250
    %v268 = vld [vmem:[#allocation7] sm:$0xff]
    %v269 = vld [vmem:[#allocation7 + $0x8] sm:$0xff]
    %v270 = vld [vmem:[#allocation7 + $0x10] sm:$0xff]
    %v271 = vld [vmem:[#allocation7 + $0x18] sm:$0xff]
    %v272 = vld [vmem:[#allocation7 + $0x20] sm:$0xff]
    %v273 = vld [vmem:[#allocation7 + $0x28] sm:$0xff]
    %v274 = vld [vmem:[#allocation7 + $0x30] sm:$0xff]
    %v275 = vld [vmem:[#allocation7 + $0x38] sm:$0xff]
    %v276 = vld [vmem:[#allocation7 + $0x40] sm:$0xff]
    %v277 = vld [vmem:[#allocation7 + $0x48] sm:$0xff]
    %v278 = vld [vmem:[#allocation7 + $0x50] sm:$0xff]
    %v279 = vld [vmem:[#allocation7 + $0x58] sm:$0xff]
    %v280 = vld [vmem:[#allocation7 + $0x60] sm:$0xff]
    %v281 = vld [vmem:[#allocation7 + $0x68] sm:$0xff]
    %v282 = vld [vmem:[#allocation7 + $0x70] sm:$0xff]
    %v283 = vld [vmem:[#allocation7 + $0x78] sm:$0xff]
    %v284 = vld [vmem:[#allocation2] sm:$0xff]
    %v285 = vld [vmem:[#allocation2 + $0x8] sm:$0xff]
    %v286 = vld [vmem:[#allocation2 + $0x70] sm:$0xff]
    %v287 = vld [vmem:[#allocation2 + $0x78] sm:$0xff]
    %v288 = vsel %vm104, %v284, %v286
    %v289 = vsel %vm105, %v285, %v287
    %vm290 = vcmask 523264
    %v292 = vsel %vm290, 0.0, 0
    %294 = vmatprep.subr.mxu0 %v269
    %295 = vmatpush1.msra.mxu0 %v268
    %296 = vmatprep.subr.mxu0 %v271
    %297 = vmatpush1.msra.mxu0 %v270
    %298 = vmatprep.subr.mxu0 %v273
    %299 = vmatpush1.msra.mxu0 %v272
    %300 = vmatprep.subr.mxu0 %v275
    %301 = vmatpush1.msra.mxu0 %v274
    %302 = vmatprep.subr.mxu0 %v277
    %303 = vmatpush1.msra.mxu0 %v276
    %304 = vmatprep.subr.mxu0 %v279
    %305 = vmatpush1.msra.mxu0 %v278
    %306 = vmatprep.subr.mxu0 %v281
    %307 = vmatpush1.msra.mxu0 %v280
    %308 = vmatprep.subr.mxu0 %v283
    %309 = vmatpush1.msra.mxu0 %v282
    %310 = vmatprep.subr.mxu0 0.0
    %311 = vmatpush1.msra.mxu0 0.0
    %312 = vmatprep.subr.mxu0 0.0
    %313 = vmatpush1.msra.mxu0 0.0
    %314 = vmatprep.subr.mxu0 0.0
    %315 = vmatpush1.msra.mxu0 0.0
    %316 = vmatprep.subr.mxu0 0.0
    %317 = vmatpush1.msra.mxu0 0.0
    %318 = vmatprep.subr.mxu0 0.0
    %319 = vmatpush1.msra.mxu0 0.0
    %320 = vmatprep.subr.mxu0 0.0
    %321 = vmatpush1.msra.mxu0 0.0
    %322 = vmatprep.subr.mxu0 0.0
    %323 = vmatpush1.msra.mxu0 0.0
    %324 = vmatprep.subr.mxu0 0.0
    %325 = vmatpush1.msra.mxu0 0.0
    %326 = vmatprep.subr.mxu0 0.0
    %327 = vmatpush1.msra.mxu0 0.0
    %328 = vmatprep.subr.mxu0 0.0
    %329 = vmatpush1.msra.mxu0 0.0
    %330 = vmatprep.subr.mxu0 0.0
    %331 = vmatpush1.msra.mxu0 0.0
    %332 = vmatprep.subr.mxu0 0.0
    %333 = vmatpush1.msra.mxu0 0.0
    %334 = vmatprep.subr.mxu0 0.0
    %335 = vmatpush1.msra.mxu0 0.0
    %336 = vmatprep.subr.mxu0 0.0
    %337 = vmatpush1.msra.mxu0 0.0
    %338 = vmatprep.subr.mxu0 0.0
    %339 = vmatpush1.msra.mxu0 0.0
    %340 = vmatprep.subr.mxu0 0.0
    %341 = vmatpush1.msra.mxu0 0.0
    %342 = vmatprep.subr.mxu0 0.0
    %343 = vmatpush1.msra.mxu0 0.0
    %344 = vmatprep.subr.mxu0 0.0
    %345 = vmatpush1.msra.mxu0 0.0
    %346 = vmatprep.subr.mxu0 0.0
    %347 = vmatpush1.msra.mxu0 0.0
    %348 = vmatprep.subr.mxu0 0.0
    %349 = vmatpush1.msra.mxu0 0.0
    %350 = vmatprep.subr.mxu0 0.0
    %351 = vmatpush1.msra.mxu0 0.0
    %352 = vmatprep.subr.mxu0 0.0
    %353 = vmatpush1.msra.mxu0 0.0
    %354 = vmatprep.subr.mxu0 0.0
    %355 = vmatpush1.msra.mxu0 0.0
    %356 = vmatprep.subr.mxu0 0.0
    %357 = vmatpush1.msra.mxu0 0.0
    %358 = vmatprep.mubr.f32.mxu0 0.0
    %359 = vmatmul.mubr.f32.gmra.mrb[0].mxu0 %v292
    %v360 = vpop.f32.mrb[0].mxu0
    %v361 = vadd.f32 0.0, %v360
    %v362 = vpop.f32.mrb[0].mxu0
    %v363 = vadd.f32 0.0, %v362
    %364 = vdwg.mxu0
    %v365 = vadd.f32 %v288, %v361
    %v366 = vadd.f32 %v289, %v363
    %v367 = vxor.u32 %v365, 2147483648
    %v368 = vxor.u32 %v366, 2147483648
    %v369 = vmul.f32 %v367, 1.442695
    %v370 = vpow.pop %v369
    %v371 = vmul.f32 %v368, 1.442695
    %v372 = vpow.pop %v371
    %v373 = vadd.f32 %v370, 1.0
    %v374 = vadd.f32 %v372, 1.0
    %v375 = vrcp.pop %v373
    %v376 = vmul.f32 1.0, %v375
    %v377 = vrcp.pop %v374
    %v378 = vmul.f32 1.0, %v377
    %v379 = vtanh.pop %v366
    %v380 = vmul.f32 %v376, 0.0
    %382 = vrot.lane.b32.xlu0 %v379, 64
    %v383 = vpop.permute.xlu0 %382
    %v385 = vmul.f32 %v376, %v383
    %387 = vrot.lane.b32.xlu0 %v385, 64
    %v388 = vpop.permute.xlu0 %387
    %v390 = vadd.f32 %v380, %v388
    %v391 = vtanh.pop %v390
    %393 = vrot.lane.b32.xlu0 %v391, 64
    %v394 = vpop.permute.xlu0 %393
    %v396 = vmul.f32 %v378, %v394
    %v397 = vsel %vm106, 0.0, 7.0
    %vm398 = vcmp.lt.f32.partialorder %v397, %v111
    %v399 = vsel %vm398, %v396, 0.0
    %401 = vrot.lane.b32.xlu0 %v390, 64
    %v402 = vpop.permute.xlu0 %401
    %v404 = vsel %vm398, %v402, 0.0
    %vm405 = vcmask 261120
    %406 = vst.msk [vmem:[#allocation3] sm:$0xff] %vm405, %v399
    %vm407 = vcmask 523520
    %408 = vst.msk [vmem:[#allocation3 + $0x38] sm:$0xff] %vm407, %v399
    %v409 = vld [vmem:[#allocation2 + $0x10] sm:$0xff]
    %v410 = vld [vmem:[#allocation2 + $0x18] sm:$0xff]
    %v411 = vld [vmem:[#allocation2 + $0x60] sm:$0xff]
    %v412 = vld [vmem:[#allocation2 + $0x68] sm:$0xff]
    %v413 = vsel %vm104, %v409, %v411
    %v414 = vsel %vm105, %v410, %v412
    %v416 = vsel %vm290, %v399, 0
    %418 = vmatprep.subr.mxu0 %v269
    %419 = vmatpush1.msra.mxu0 %v268
    %420 = vmatprep.subr.mxu0 %v271
    %421 = vmatpush1.msra.mxu0 %v270
    %422 = vmatprep.subr.mxu0 %v273
    %423 = vmatpush1.msra.mxu0 %v272
    %424 = vmatprep.subr.mxu0 %v275
    %425 = vmatpush1.msra.mxu0 %v274
    %426 = vmatprep.subr.mxu0 %v277
    %427 = vmatpush1.msra.mxu0 %v276
    %428 = vmatprep.subr.mxu0 %v279
    %429 = vmatpush1.msra.mxu0 %v278
    %430 = vmatprep.subr.mxu0 %v281
    %431 = vmatpush1.msra.mxu0 %v280
    %432 = vmatprep.subr.mxu0 %v283
    %433 = vmatpush1.msra.mxu0 %v282
    %434 = vmatprep.subr.mxu0 0.0
    %435 = vmatpush1.msra.mxu0 0.0
    %436 = vmatprep.subr.mxu0 0.0
    %437 = vmatpush1.msra.mxu0 0.0
    %438 = vmatprep.subr.mxu0 0.0
    %439 = vmatpush1.msra.mxu0 0.0
    %440 = vmatprep.subr.mxu0 0.0
    %441 = vmatpush1.msra.mxu0 0.0
    %442 = vmatprep.subr.mxu0 0.0
    %443 = vmatpush1.msra.mxu0 0.0
    %444 = vmatprep.subr.mxu0 0.0
    %445 = vmatpush1.msra.mxu0 0.0
    %446 = vmatprep.subr.mxu0 0.0
    %447 = vmatpush1.msra.mxu0 0.0
    %448 = vmatprep.subr.mxu0 0.0
    %449 = vmatpush1.msra.mxu0 0.0
    %450 = vmatprep.subr.mxu0 0.0
    %451 = vmatpush1.msra.mxu0 0.0
    %452 = vmatprep.subr.mxu0 0.0
    %453 = vmatpush1.msra.mxu0 0.0
    %454 = vmatprep.subr.mxu0 0.0
    %455 = vmatpush1.msra.mxu0 0.0
    %456 = vmatprep.subr.mxu0 0.0
    %457 = vmatpush1.msra.mxu0 0.0
    %458 = vmatprep.subr.mxu0 0.0
    %459 = vmatpush1.msra.mxu0 0.0
    %460 = vmatprep.subr.mxu0 0.0
    %461 = vmatpush1.msra.mxu0 0.0
    %462 = vmatprep.subr.mxu0 0.0
    %463 = vmatpush1.msra.mxu0 0.0
    %464 = vmatprep.subr.mxu0 0.0
    %465 = vmatpush1.msra.mxu0 0.0
    %466 = vmatprep.subr.mxu0 0.0
    %467 = vmatpush1.msra.mxu0 0.0
    %468 = vmatprep.subr.mxu0 0.0
    %469 = vmatpush1.msra.mxu0 0.0
    %470 = vmatprep.subr.mxu0 0.0
    %471 = vmatpush1.msra.mxu0 0.0
    %472 = vmatprep.subr.mxu0 0.0
    %473 = vmatpush1.msra.mxu0 0.0
    %474 = vmatprep.subr.mxu0 0.0
    %475 = vmatpush1.msra.mxu0 0.0
    %476 = vmatprep.subr.mxu0 0.0
    %477 = vmatpush1.msra.mxu0 0.0
    %478 = vmatprep.subr.mxu0 0.0
    %479 = vmatpush1.msra.mxu0 0.0
    %480 = vmatprep.subr.mxu0 0.0
    %481 = vmatpush1.msra.mxu0 0.0
    %482 = vmatprep.mubr.f32.mxu0 0.0
    %483 = vmatmul.mubr.f32.gmra.mrb[0].mxu0 %v416
    %v484 = vpop.f32.mrb[0].mxu0
    %v485 = vadd.f32 0.0, %v484
    %v486 = vpop.f32.mrb[0].mxu0
    %v487 = vadd.f32 0.0, %v486
    %488 = vdwg.mxu0
    %v489 = vadd.f32 %v413, %v485
    %v490 = vadd.f32 %v414, %v487
    %v491 = vxor.u32 %v489, 2147483648
    %v492 = vxor.u32 %v490, 2147483648
    %v493 = vmul.f32 %v491, 1.442695
    %v494 = vpow.pop %v493
    %v495 = vmul.f32 %v492, 1.442695
    %v496 = vpow.pop %v495
    %v497 = vadd.f32 %v494, 1.0
    %v498 = vadd.f32 %v496, 1.0
    %v499 = vrcp.pop %v497
    %v500 = vmul.f32 1.0, %v499
    %v501 = vrcp.pop %v498
    %v502 = vmul.f32 1.0, %v501
    %v503 = vtanh.pop %v490
    %505 = vrot.lane.b32.xlu0 %v404, 64
    %v506 = vpop.permute.xlu0 %505
    %v508 = vmul.f32 %v500, %v506
    %510 = vrot.lane.b32.xlu0 %v503, 64
    %v511 = vpop.permute.xlu0 %510
    %v513 = vmul.f32 %v500, %v511
    %515 = vrot.lane.b32.xlu0 %v513, 64
    %v516 = vpop.permute.xlu0 %515
    %v518 = vadd.f32 %v508, %v516
    %v519 = vtanh.pop %v518
    %521 = vrot.lane.b32.xlu0 %v519, 64
    %v522 = vpop.permute.xlu0 %521
    %v524 = vmul.f32 %v502, %v522
    %v525 = vsel %vm106, 1.0, 6.0
    %vm526 = vcmp.lt.f32.partialorder %v525, %v111
    %v527 = vsel %vm526, %v524, %v399
    %529 = vrot.lane.b32.xlu0 %v518, 64
    %v530 = vpop.permute.xlu0 %529
    %v532 = vsel %vm526, %v530, %v404
    %v533 = vsel %vm526, %v524, 0.0
    %534 = vst.msk [vmem:[#allocation3 + $0x8] sm:$0xff] %vm405, %v533
    %535 = vst.msk [vmem:[#allocation3 + $0x30] sm:$0xff] %vm407, %v533
    %v536 = vld [vmem:[#allocation2 + $0x20] sm:$0xff]
    %v537 = vld [vmem:[#allocation2 + $0x28] sm:$0xff]
    %v538 = vld [vmem:[#allocation2 + $0x50] sm:$0xff]
    %v539 = vld [vmem:[#allocation2 + $0x58] sm:$0xff]
    %v540 = vsel %vm104, %v536, %v538
    %v541 = vsel %vm105, %v537, %v539
    %v543 = vsel %vm290, %v527, 0
    %545 = vmatprep.subr.mxu0 %v269
    %546 = vmatpush1.msra.mxu0 %v268
    %547 = vmatprep.subr.mxu0 %v271
    %548 = vmatpush1.msra.mxu0 %v270
    %549 = vmatprep.subr.mxu0 %v273
    %550 = vmatpush1.msra.mxu0 %v272
    %551 = vmatprep.subr.mxu0 %v275
    %552 = vmatpush1.msra.mxu0 %v274
    %553 = vmatprep.subr.mxu0 %v277
    %554 = vmatpush1.msra.mxu0 %v276
    %555 = vmatprep.subr.mxu0 %v279
    %556 = vmatpush1.msra.mxu0 %v278
    %557 = vmatprep.subr.mxu0 %v281
    %558 = vmatpush1.msra.mxu0 %v280
    %559 = vmatprep.subr.mxu0 %v283
    %560 = vmatpush1.msra.mxu0 %v282
    %561 = vmatprep.subr.mxu0 0.0
    %562 = vmatpush1.msra.mxu0 0.0
    %563 = vmatprep.subr.mxu0 0.0
    %564 = vmatpush1.msra.mxu0 0.0
    %565 = vmatprep.subr.mxu0 0.0
    %566 = vmatpush1.msra.mxu0 0.0
    %567 = vmatprep.subr.mxu0 0.0
    %568 = vmatpush1.msra.mxu0 0.0
    %569 = vmatprep.subr.mxu0 0.0
    %570 = vmatpush1.msra.mxu0 0.0
    %571 = vmatprep.subr.mxu0 0.0
    %572 = vmatpush1.msra.mxu0 0.0
    %573 = vmatprep.subr.mxu0 0.0
    %574 = vmatpush1.msra.mxu0 0.0
    %575 = vmatprep.subr.mxu0 0.0
    %576 = vmatpush1.msra.mxu0 0.0
    %577 = vmatprep.subr.mxu0 0.0
    %578 = vmatpush1.msra.mxu0 0.0
    %579 = vmatprep.subr.mxu0 0.0
    %580 = vmatpush1.msra.mxu0 0.0
    %581 = vmatprep.subr.mxu0 0.0
    %582 = vmatpush1.msra.mxu0 0.0
    %583 = vmatprep.subr.mxu0 0.0
    %584 = vmatpush1.msra.mxu0 0.0
    %585 = vmatprep.subr.mxu0 0.0
    %586 = vmatpush1.msra.mxu0 0.0
    %587 = vmatprep.subr.mxu0 0.0
    %588 = vmatpush1.msra.mxu0 0.0
    %589 = vmatprep.subr.mxu0 0.0
    %590 = vmatpush1.msra.mxu0 0.0
    %591 = vmatprep.subr.mxu0 0.0
    %592 = vmatpush1.msra.mxu0 0.0
    %593 = vmatprep.subr.mxu0 0.0
    %594 = vmatpush1.msra.mxu0 0.0
    %595 = vmatprep.subr.mxu0 0.0
    %596 = vmatpush1.msra.mxu0 0.0
    %597 = vmatprep.subr.mxu0 0.0
    %598 = vmatpush1.msra.mxu0 0.0
    %599 = vmatprep.subr.mxu0 0.0
    %600 = vmatpush1.msra.mxu0 0.0
    %601 = vmatprep.subr.mxu0 0.0
    %602 = vmatpush1.msra.mxu0 0.0
    %603 = vmatprep.subr.mxu0 0.0
    %604 = vmatpush1.msra.mxu0 0.0
    %605 = vmatprep.subr.mxu0 0.0
    %606 = vmatpush1.msra.mxu0 0.0
    %607 = vmatprep.subr.mxu0 0.0
    %608 = vmatpush1.msra.mxu0 0.0
    %609 = vmatprep.mubr.f32.mxu0 0.0
    %610 = vmatmul.mubr.f32.gmra.mrb[0].mxu0 %v543
    %v611 = vpop.f32.mrb[0].mxu0
    %v612 = vadd.f32 0.0, %v611
    %v613 = vpop.f32.mrb[0].mxu0
    %v614 = vadd.f32 0.0, %v613
    %615 = vdwg.mxu0
    %v616 = vadd.f32 %v540, %v612
    %v617 = vadd.f32 %v541, %v614
    %v618 = vxor.u32 %v616, 2147483648
    %v619 = vxor.u32 %v617, 2147483648
    %v620 = vmul.f32 %v618, 1.442695
    %v621 = vpow.pop %v620
    %v622 = vmul.f32 %v619, 1.442695
    %v623 = vpow.pop %v622
    %v624 = vadd.f32 %v621, 1.0
    %v625 = vadd.f32 %v623, 1.0
    %v626 = vrcp.pop %v624
    %v627 = vmul.f32 1.0, %v626
    %v628 = vrcp.pop %v625
    %v629 = vmul.f32 1.0, %v628
    %v630 = vtanh.pop %v617
    %632 = vrot.lane.b32.xlu0 %v532, 64
    %v633 = vpop.permute.xlu0 %632
    %v635 = vmul.f32 %v627, %v633
    %637 = vrot.lane.b32.xlu0 %v630, 64
    %v638 = vpop.permute.xlu0 %637
    %v640 = vmul.f32 %v627, %v638
    %642 = vrot.lane.b32.xlu0 %v640, 64
    %v643 = vpop.permute.xlu0 %642
    %v645 = vadd.f32 %v635, %v643
    %v646 = vtanh.pop %v645
    %648 = vrot.lane.b32.xlu0 %v646, 64
    %v649 = vpop.permute.xlu0 %648
    %v651 = vmul.f32 %v629, %v649
    %v652 = vsel %vm106, 2.0, 5.0
    %vm653 = vcmp.lt.f32.partialorder %v652, %v111
    %v654 = vsel %vm653, %v651, %v527
    %656 = vrot.lane.b32.xlu0 %v645, 64
    %v657 = vpop.permute.xlu0 %656
    %v659 = vsel %vm653, %v657, %v532
    %v660 = vsel %vm653, %v651, 0.0
    %661 = vst.msk [vmem:[#allocation3 + $0x10] sm:$0xff] %vm405, %v660
    %662 = vst.msk [vmem:[#allocation3 + $0x28] sm:$0xff] %vm407, %v660
    %v663 = vld [vmem:[#allocation2 + $0x30] sm:$0xff]
    %v664 = vld [vmem:[#allocation2 + $0x38] sm:$0xff]
    %v665 = vld [vmem:[#allocation2 + $0x40] sm:$0xff]
    %v666 = vld [vmem:[#allocation2 + $0x48] sm:$0xff]
    %v667 = vsel %vm104, %v663, %v665
    %v668 = vsel %vm105, %v664, %v666
    %v670 = vsel %vm290, %v654, 0
    %672 = vmatprep.subr.mxu0 %v269
    %673 = vmatpush1.msra.mxu0 %v268
    %674 = vmatprep.subr.mxu0 %v271
    %675 = vmatpush1.msra.mxu0 %v270
    %676 = vmatprep.subr.mxu0 %v273
    %677 = vmatpush1.msra.mxu0 %v272
    %678 = vmatprep.subr.mxu0 %v275
    %679 = vmatpush1.msra.mxu0 %v274
    %680 = vmatprep.subr.mxu0 %v277
    %681 = vmatpush1.msra.mxu0 %v276
    %682 = vmatprep.subr.mxu0 %v279
    %683 = vmatpush1.msra.mxu0 %v278
    %684 = vmatprep.subr.mxu0 %v281
    %685 = vmatpush1.msra.mxu0 %v280
    %686 = vmatprep.subr.mxu0 %v283
    %687 = vmatpush1.msra.mxu0 %v282
    %688 = vmatprep.subr.mxu0 0.0
    %689 = vmatpush1.msra.mxu0 0.0
    %690 = vmatprep.subr.mxu0 0.0
    %691 = vmatpush1.msra.mxu0 0.0
    %692 = vmatprep.subr.mxu0 0.0
    %693 = vmatpush1.msra.mxu0 0.0
    %694 = vmatprep.subr.mxu0 0.0
    %695 = vmatpush1.msra.mxu0 0.0
    %696 = vmatprep.subr.mxu0 0.0
    %697 = vmatpush1.msra.mxu0 0.0
    %698 = vmatprep.subr.mxu0 0.0
    %699 = vmatpush1.msra.mxu0 0.0
    %700 = vmatprep.subr.mxu0 0.0
    %701 = vmatpush1.msra.mxu0 0.0
    %702 = vmatprep.subr.mxu0 0.0
    %703 = vmatpush1.msra.mxu0 0.0
    %704 = vmatprep.subr.mxu0 0.0
    %705 = vmatpush1.msra.mxu0 0.0
    %706 = vmatprep.subr.mxu0 0.0
    %707 = vmatpush1.msra.mxu0 0.0
    %708 = vmatprep.subr.mxu0 0.0
    %709 = vmatpush1.msra.mxu0 0.0
    %710 = vmatprep.subr.mxu0 0.0
    %711 = vmatpush1.msra.mxu0 0.0
    %712 = vmatprep.subr.mxu0 0.0
    %713 = vmatpush1.msra.mxu0 0.0
    %714 = vmatprep.subr.mxu0 0.0
    %715 = vmatpush1.msra.mxu0 0.0
    %716 = vmatprep.subr.mxu0 0.0
    %717 = vmatpush1.msra.mxu0 0.0
    %718 = vmatprep.subr.mxu0 0.0
    %719 = vmatpush1.msra.mxu0 0.0
    %720 = vmatprep.subr.mxu0 0.0
    %721 = vmatpush1.msra.mxu0 0.0
    %722 = vmatprep.subr.mxu0 0.0
    %723 = vmatpush1.msra.mxu0 0.0
    %724 = vmatprep.subr.mxu0 0.0
    %725 = vmatpush1.msra.mxu0 0.0
    %726 = vmatprep.subr.mxu0 0.0
    %727 = vmatpush1.msra.mxu0 0.0
    %728 = vmatprep.subr.mxu0 0.0
    %729 = vmatpush1.msra.mxu0 0.0
    %730 = vmatprep.subr.mxu0 0.0
    %731 = vmatpush1.msra.mxu0 0.0
    %732 = vmatprep.subr.mxu0 0.0
    %733 = vmatpush1.msra.mxu0 0.0
    %734 = vmatprep.subr.mxu0 0.0
    %735 = vmatpush1.msra.mxu0 0.0
    %736 = vmatprep.mubr.f32.mxu0 0.0
    %737 = vmatmul.mubr.f32.gmra.mrb[0].mxu0 %v670
    %v738 = vpop.f32.mrb[0].mxu0
    %v739 = vadd.f32 0.0, %v738
    %v740 = vpop.f32.mrb[0].mxu0
    %v741 = vadd.f32 0.0, %v740
    %742 = vdwg.mxu0
    %v743 = vadd.f32 %v667, %v739
    %v744 = vadd.f32 %v668, %v741
    %v745 = vxor.u32 %v743, 2147483648
    %v746 = vxor.u32 %v744, 2147483648
    %v747 = vmul.f32 %v745, 1.442695
    %v748 = vpow.pop %v747
    %v749 = vmul.f32 %v746, 1.442695
    %v750 = vpow.pop %v749
    %v751 = vadd.f32 %v748, 1.0
    %v752 = vadd.f32 %v750, 1.0
    %v753 = vrcp.pop %v751
    %v754 = vmul.f32 1.0, %v753
    %v755 = vrcp.pop %v752
    %v756 = vmul.f32 1.0, %v755
    %v757 = vtanh.pop %v744
    %759 = vrot.lane.b32.xlu0 %v659, 64
    %v760 = vpop.permute.xlu0 %759
    %v762 = vmul.f32 %v754, %v760
    %764 = vrot.lane.b32.xlu0 %v757, 64
    %v765 = vpop.permute.xlu0 %764
    %v767 = vmul.f32 %v754, %v765
    %769 = vrot.lane.b32.xlu0 %v767, 64
    %v770 = vpop.permute.xlu0 %769
    %v772 = vadd.f32 %v762, %v770
    %v773 = vtanh.pop %v772
    %775 = vrot.lane.b32.xlu0 %v773, 64
    %v776 = vpop.permute.xlu0 %775
    %v778 = vmul.f32 %v756, %v776
    %v779 = vsel %vm106, 3.0, 4.0
    %vm780 = vcmp.lt.f32.partialorder %v779, %v111
    %v781 = vsel %vm780, %v778, %v654
    %783 = vrot.lane.b32.xlu0 %v772, 64
    %v784 = vpop.permute.xlu0 %783
    %v786 = vsel %vm780, %v784, %v659
    %v787 = vsel %vm780, %v778, 0.0
    %788 = vst.msk [vmem:[#allocation3 + $0x18] sm:$0xff] %vm405, %v787
    %789 = vst.msk [vmem:[#allocation3 + $0x20] sm:$0xff] %vm407, %v787
    %v790 = vld [vmem:[#allocation2 + $0x40] sm:$0xff]
    %v791 = vld [vmem:[#allocation2 + $0x48] sm:$0xff]
    %v792 = vld [vmem:[#allocation2 + $0x30] sm:$0xff]
    %v793 = vld [vmem:[#allocation2 + $0x38] sm:$0xff]
    %v794 = vsel %vm104, %v790, %v792
    %v795 = vsel %vm105, %v791, %v793
    %v797 = vsel %vm290, %v781, 0
    %799 = vmatprep.subr.mxu0 %v269
    %800 = vmatpush1.msra.mxu0 %v268
    %801 = vmatprep.subr.mxu0 %v271
    %802 = vmatpush1.msra.mxu0 %v270
    %803 = vmatprep.subr.mxu0 %v273
    %804 = vmatpush1.msra.mxu0 %v272
    %805 = vmatprep.subr.mxu0 %v275
    %806 = vmatpush1.msra.mxu0 %v274
    %807 = vmatprep.subr.mxu0 %v277
    %808 = vmatpush1.msra.mxu0 %v276
    %809 = vmatprep.subr.mxu0 %v279
    %810 = vmatpush1.msra.mxu0 %v278
    %811 = vmatprep.subr.mxu0 %v281
    %812 = vmatpush1.msra.mxu0 %v280
    %813 = vmatprep.subr.mxu0 %v283
    %814 = vmatpush1.msra.mxu0 %v282
    %815 = vmatprep.subr.mxu0 0.0
    %816 = vmatpush1.msra.mxu0 0.0
    %817 = vmatprep.subr.mxu0 0.0
    %818 = vmatpush1.msra.mxu0 0.0
    %819 = vmatprep.subr.mxu0 0.0
    %820 = vmatpush1.msra.mxu0 0.0
    %821 = vmatprep.subr.mxu0 0.0
    %822 = vmatpush1.msra.mxu0 0.0
    %823 = vmatprep.subr.mxu0 0.0
    %824 = vmatpush1.msra.mxu0 0.0
    %825 = vmatprep.subr.mxu0 0.0
    %826 = vmatpush1.msra.mxu0 0.0
    %827 = vmatprep.subr.mxu0 0.0
    %828 = vmatpush1.msra.mxu0 0.0
    %829 = vmatprep.subr.mxu0 0.0
    %830 = vmatpush1.msra.mxu0 0.0
    %831 = vmatprep.subr.mxu0 0.0
    %832 = vmatpush1.msra.mxu0 0.0
    %833 = vmatprep.subr.mxu0 0.0
    %834 = vmatpush1.msra.mxu0 0.0
    %835 = vmatprep.subr.mxu0 0.0
    %836 = vmatpush1.msra.mxu0 0.0
    %837 = vmatprep.subr.mxu0 0.0
    %838 = vmatpush1.msra.mxu0 0.0
    %839 = vmatprep.subr.mxu0 0.0
    %840 = vmatpush1.msra.mxu0 0.0
    %841 = vmatprep.subr.mxu0 0.0
    %842 = vmatpush1.msra.mxu0 0.0
    %843 = vmatprep.subr.mxu0 0.0
    %844 = vmatpush1.msra.mxu0 0.0
    %845 = vmatprep.subr.mxu0 0.0
    %846 = vmatpush1.msra.mxu0 0.0
    %847 = vmatprep.subr.mxu0 0.0
    %848 = vmatpush1.msra.mxu0 0.0
    %849 = vmatprep.subr.mxu0 0.0
    %850 = vmatpush1.msra.mxu0 0.0
    %851 = vmatprep.subr.mxu0 0.0
    %852 = vmatpush1.msra.mxu0 0.0
    %853 = vmatprep.subr.mxu0 0.0
    %854 = vmatpush1.msra.mxu0 0.0
    %855 = vmatprep.subr.mxu0 0.0
    %856 = vmatpush1.msra.mxu0 0.0
    %857 = vmatprep.subr.mxu0 0.0
    %858 = vmatpush1.msra.mxu0 0.0
    %859 = vmatprep.subr.mxu0 0.0
    %860 = vmatpush1.msra.mxu0 0.0
    %861 = vmatprep.subr.mxu0 0.0
    %862 = vmatpush1.msra.mxu0 0.0
    %863 = vmatprep.mubr.f32.mxu0 0.0
    %864 = vmatmul.mubr.f32.gmra.mrb[0].mxu0 %v797
    %v865 = vpop.f32.mrb[0].mxu0
    %v866 = vadd.f32 0.0, %v865
    %v867 = vpop.f32.mrb[0].mxu0
    %v868 = vadd.f32 0.0, %v867
    %869 = vdwg.mxu0
    %v870 = vadd.f32 %v794, %v866
    %v871 = vadd.f32 %v795, %v868
    %v872 = vxor.u32 %v870, 2147483648
    %v873 = vxor.u32 %v871, 2147483648
    %v874 = vmul.f32 %v872, 1.442695
    %v875 = vpow.pop %v874
    %v876 = vmul.f32 %v873, 1.442695
    %v877 = vpow.pop %v876
    %v878 = vadd.f32 %v875, 1.0
    %v879 = vadd.f32 %v877, 1.0
    %v880 = vrcp.pop %v878
    %v881 = vmul.f32 1.0, %v880
    %v882 = vrcp.pop %v879
    %v883 = vmul.f32 1.0, %v882
    %v884 = vtanh.pop %v871
    %886 = vrot.lane.b32.xlu0 %v786, 64
    %v887 = vpop.permute.xlu0 %886
    %v889 = vmul.f32 %v881, %v887
    %891 = vrot.lane.b32.xlu0 %v884, 64
    %v892 = vpop.permute.xlu0 %891
    %v894 = vmul.f32 %v881, %v892
    %896 = vrot.lane.b32.xlu0 %v894, 64
    %v897 = vpop.permute.xlu0 %896
    %v899 = vadd.f32 %v889, %v897
    %v900 = vtanh.pop %v899
    %902 = vrot.lane.b32.xlu0 %v900, 64
    %v903 = vpop.permute.xlu0 %902
    %v905 = vmul.f32 %v883, %v903
    %v906 = vsel %vm106, 4.0, 3.0
    %vm907 = vcmp.lt.f32.partialorder %v906, %v111
    %v908 = vsel %vm907, %v905, %v781
    %910 = vrot.lane.b32.xlu0 %v899, 64
    %v911 = vpop.permute.xlu0 %910
    %v913 = vsel %vm907, %v911, %v786
    %v914 = vsel %vm907, %v905, 0.0
    %915 = vst.msk [vmem:[#allocation3 + $0x20] sm:$0xff] %vm405, %v914
    %916 = vst.msk [vmem:[#allocation3 + $0x18] sm:$0xff] %vm407, %v914
    %v917 = vld [vmem:[#allocation2 + $0x50] sm:$0xff]
    %v918 = vld [vmem:[#allocation2 + $0x58] sm:$0xff]
    %v919 = vld [vmem:[#allocation2 + $0x20] sm:$0xff]
    %v920 = vld [vmem:[#allocation2 + $0x28] sm:$0xff]
    %v921 = vsel %vm104, %v917, %v919
    %v922 = vsel %vm105, %v918, %v920
    %v924 = vsel %vm290, %v908, 0
    %926 = vmatprep.subr.mxu0 %v269
    %927 = vmatpush1.msra.mxu0 %v268
    %928 = vmatprep.subr.mxu0 %v271
    %929 = vmatpush1.msra.mxu0 %v270
    %930 = vmatprep.subr.mxu0 %v273
    %931 = vmatpush1.msra.mxu0 %v272
    %932 = vmatprep.subr.mxu0 %v275
    %933 = vmatpush1.msra.mxu0 %v274
    %934 = vmatprep.subr.mxu0 %v277
    %935 = vmatpush1.msra.mxu0 %v276
    %936 = vmatprep.subr.mxu0 %v279
    %937 = vmatpush1.msra.mxu0 %v278
    %938 = vmatprep.subr.mxu0 %v281
    %939 = vmatpush1.msra.mxu0 %v280
    %940 = vmatprep.subr.mxu0 %v283
    %941 = vmatpush1.msra.mxu0 %v282
    %942 = vmatprep.subr.mxu0 0.0
    %943 = vmatpush1.msra.mxu0 0.0
    %944 = vmatprep.subr.mxu0 0.0
    %945 = vmatpush1.msra.mxu0 0.0
    %946 = vmatprep.subr.mxu0 0.0
    %947 = vmatpush1.msra.mxu0 0.0
    %948 = vmatprep.subr.mxu0 0.0
    %949 = vmatpush1.msra.mxu0 0.0
    %950 = vmatprep.subr.mxu0 0.0
    %951 = vmatpush1.msra.mxu0 0.0
    %952 = vmatprep.subr.mxu0 0.0
    %953 = vmatpush1.msra.mxu0 0.0
    %954 = vmatprep.subr.mxu0 0.0
    %955 = vmatpush1.msra.mxu0 0.0
    %956 = vmatprep.subr.mxu0 0.0
    %957 = vmatpush1.msra.mxu0 0.0
    %958 = vmatprep.subr.mxu0 0.0
    %959 = vmatpush1.msra.mxu0 0.0
    %960 = vmatprep.subr.mxu0 0.0
    %961 = vmatpush1.msra.mxu0 0.0
    %962 = vmatprep.subr.mxu0 0.0
    %963 = vmatpush1.msra.mxu0 0.0
    %964 = vmatprep.subr.mxu0 0.0
    %965 = vmatpush1.msra.mxu0 0.0
    %966 = vmatprep.subr.mxu0 0.0
    %967 = vmatpush1.msra.mxu0 0.0
    %968 = vmatprep.subr.mxu0 0.0
    %969 = vmatpush1.msra.mxu0 0.0
    %970 = vmatprep.subr.mxu0 0.0
    %971 = vmatpush1.msra.mxu0 0.0
    %972 = vmatprep.subr.mxu0 0.0
    %973 = vmatpush1.msra.mxu0 0.0
    %974 = vmatprep.subr.mxu0 0.0
    %975 = vmatpush1.msra.mxu0 0.0
    %976 = vmatprep.subr.mxu0 0.0
    %977 = vmatpush1.msra.mxu0 0.0
    %978 = vmatprep.subr.mxu0 0.0
    %979 = vmatpush1.msra.mxu0 0.0
    %980 = vmatprep.subr.mxu0 0.0
    %981 = vmatpush1.msra.mxu0 0.0
    %982 = vmatprep.subr.mxu0 0.0
    %983 = vmatpush1.msra.mxu0 0.0
    %984 = vmatprep.subr.mxu0 0.0
    %985 = vmatpush1.msra.mxu0 0.0
    %986 = vmatprep.subr.mxu0 0.0
    %987 = vmatpush1.msra.mxu0 0.0
    %988 = vmatprep.subr.mxu0 0.0
    %989 = vmatpush1.msra.mxu0 0.0
    %990 = vmatprep.mubr.f32.mxu0 0.0
    %991 = vmatmul.mubr.f32.gmra.mrb[0].mxu0 %v924
    %v992 = vpop.f32.mrb[0].mxu0
    %v993 = vadd.f32 0.0, %v992
    %v994 = vpop.f32.mrb[0].mxu0
    %v995 = vadd.f32 0.0, %v994
    %996 = vdwg.mxu0
    %v997 = vadd.f32 %v921, %v993
    %v998 = vadd.f32 %v922, %v995
    %v999 = vxor.u32 %v997, 2147483648
    %v1000 = vxor.u32 %v998, 2147483648
    %v1001 = vmul.f32 %v999, 1.442695
    %v1002 = vpow.pop %v1001
    %v1003 = vmul.f32 %v1000, 1.442695
    %v1004 = vpow.pop %v1003
    %v1005 = vadd.f32 %v1002, 1.0
    %v1006 = vadd.f32 %v1004, 1.0
    %v1007 = vrcp.pop %v1005
    %v1008 = vmul.f32 1.0, %v1007
    %v1009 = vrcp.pop %v1006
    %v1010 = vmul.f32 1.0, %v1009
    %v1011 = vtanh.pop %v998
    %1013 = vrot.lane.b32.xlu0 %v913, 64
    %v1014 = vpop.permute.xlu0 %1013
    %v1016 = vmul.f32 %v1008, %v1014
    %1018 = vrot.lane.b32.xlu0 %v1011, 64
    %v1019 = vpop.permute.xlu0 %1018
    %v1021 = vmul.f32 %v1008, %v1019
    %1023 = vrot.lane.b32.xlu0 %v1021, 64
    %v1024 = vpop.permute.xlu0 %1023
    %v1026 = vadd.f32 %v1016, %v1024
    %v1027 = vtanh.pop %v1026
    %1029 = vrot.lane.b32.xlu0 %v1027, 64
    %v1030 = vpop.permute.xlu0 %1029
    %v1032 = vmul.f32 %v1010, %v1030
    %v1033 = vsel %vm106, 5.0, 2.0
    %vm1034 = vcmp.lt.f32.partialorder %v1033, %v111
    %v1035 = vsel %vm1034, %v1032, %v908
    %1037 = vrot.lane.b32.xlu0 %v1026, 64
    %v1038 = vpop.permute.xlu0 %1037
    %v1040 = vsel %vm1034, %v1038, %v913
    %v1041 = vsel %vm1034, %v1032, 0.0
    %1042 = vst.msk [vmem:[#allocation3 + $0x28] sm:$0xff] %vm405, %v1041
    %1043 = vst.msk [vmem:[#allocation3 + $0x10] sm:$0xff] %vm407, %v1041
    %v1044 = vld [vmem:[#allocation2 + $0x60] sm:$0xff]
    %v1045 = vld [vmem:[#allocation2 + $0x68] sm:$0xff]
    %v1046 = vld [vmem:[#allocation2 + $0x10] sm:$0xff]
    %v1047 = vld [vmem:[#allocation2 + $0x18] sm:$0xff]
    %v1048 = vsel %vm104, %v1044, %v1046
    %v1049 = vsel %vm105, %v1045, %v1047
    %v1051 = vsel %vm290, %v1035, 0
    %1053 = vmatprep.subr.mxu0 %v269
    %1054 = vmatpush1.msra.mxu0 %v268
    %1055 = vmatprep.subr.mxu0 %v271
    %1056 = vmatpush1.msra.mxu0 %v270
    %1057 = vmatprep.subr.mxu0 %v273
    %1058 = vmatpush1.msra.mxu0 %v272
    %1059 = vmatprep.subr.mxu0 %v275
    %1060 = vmatpush1.msra.mxu0 %v274
    %1061 = vmatprep.subr.mxu0 %v277
    %1062 = vmatpush1.msra.mxu0 %v276
    %1063 = vmatprep.subr.mxu0 %v279
    %1064 = vmatpush1.msra.mxu0 %v278
    %1065 = vmatprep.subr.mxu0 %v281
    %1066 = vmatpush1.msra.mxu0 %v280
    %1067 = vmatprep.subr.mxu0 %v283
    %1068 = vmatpush1.msra.mxu0 %v282
    %1069 = vmatprep.subr.mxu0 0.0
    %1070 = vmatpush1.msra.mxu0 0.0
    %1071 = vmatprep.subr.mxu0 0.0
    %1072 = vmatpush1.msra.mxu0 0.0
    %1073 = vmatprep.subr.mxu0 0.0
    %1074 = vmatpush1.msra.mxu0 0.0
    %1075 = vmatprep.subr.mxu0 0.0
    %1076 = vmatpush1.msra.mxu0 0.0
    %1077 = vmatprep.subr.mxu0 0.0
    %1078 = vmatpush1.msra.mxu0 0.0
    %1079 = vmatprep.subr.mxu0 0.0
    %1080 = vmatpush1.msra.mxu0 0.0
    %1081 = vmatprep.subr.mxu0 0.0
    %1082 = vmatpush1.msra.mxu0 0.0
    %1083 = vmatprep.subr.mxu0 0.0
    %1084 = vmatpush1.msra.mxu0 0.0
    %1085 = vmatprep.subr.mxu0 0.0
    %1086 = vmatpush1.msra.mxu0 0.0
    %1087 = vmatprep.subr.mxu0 0.0
    %1088 = vmatpush1.msra.mxu0 0.0
    %1089 = vmatprep.subr.mxu0 0.0
    %1090 = vmatpush1.msra.mxu0 0.0
    %1091 = vmatprep.subr.mxu0 0.0
    %1092 = vmatpush1.msra.mxu0 0.0
    %1093 = vmatprep.subr.mxu0 0.0
    %1094 = vmatpush1.msra.mxu0 0.0
    %1095 = vmatprep.subr.mxu0 0.0
    %1096 = vmatpush1.msra.mxu0 0.0
    %1097 = vmatprep.subr.mxu0 0.0
    %1098 = vmatpush1.msra.mxu0 0.0
    %1099 = vmatprep.subr.mxu0 0.0
    %1100 = vmatpush1.msra.mxu0 0.0
    %1101 = vmatprep.subr.mxu0 0.0
    %1102 = vmatpush1.msra.mxu0 0.0
    %1103 = vmatprep.subr.mxu0 0.0
    %1104 = vmatpush1.msra.mxu0 0.0
    %1105 = vmatprep.subr.mxu0 0.0
    %1106 = vmatpush1.msra.mxu0 0.0
    %1107 = vmatprep.subr.mxu0 0.0
    %1108 = vmatpush1.msra.mxu0 0.0
    %1109 = vmatprep.subr.mxu0 0.0
    %1110 = vmatpush1.msra.mxu0 0.0
    %1111 = vmatprep.subr.mxu0 0.0
    %1112 = vmatpush1.msra.mxu0 0.0
    %1113 = vmatprep.subr.mxu0 0.0
    %1114 = vmatpush1.msra.mxu0 0.0
    %1115 = vmatprep.subr.mxu0 0.0
    %1116 = vmatpush1.msra.mxu0 0.0
    %1117 = vmatprep.mubr.f32.mxu0 0.0
    %1118 = vmatmul.mubr.f32.gmra.mrb[0].mxu0 %v1051
    %v1119 = vpop.f32.mrb[0].mxu0
    %v1120 = vadd.f32 0.0, %v1119
    %v1121 = vpop.f32.mrb[0].mxu0
    %v1122 = vadd.f32 0.0, %v1121
    %1123 = vdwg.mxu0
    %v1124 = vadd.f32 %v1048, %v1120
    %v1125 = vadd.f32 %v1049, %v1122
    %v1126 = vxor.u32 %v1124, 2147483648
    %v1127 = vxor.u32 %v1125, 2147483648
    %v1128 = vmul.f32 %v1126, 1.442695
    %v1129 = vpow.pop %v1128
    %v1130 = vmul.f32 %v1127, 1.442695
    %v1131 = vpow.pop %v1130
    %v1132 = vadd.f32 %v1129, 1.0
    %v1133 = vadd.f32 %v1131, 1.0
    %v1134 = vrcp.pop %v1132
    %v1135 = vmul.f32 1.0, %v1134
    %v1136 = vrcp.pop %v1133
    %v1137 = vmul.f32 1.0, %v1136
    %v1138 = vtanh.pop %v1125
    %1140 = vrot.lane.b32.xlu0 %v1040, 64
    %v1141 = vpop.permute.xlu0 %1140
    %v1143 = vmul.f32 %v1135, %v1141
    %1145 = vrot.lane.b32.xlu0 %v1138, 64
    %v1146 = vpop.permute.xlu0 %1145
    %v1148 = vmul.f32 %v1135, %v1146
    %1150 = vrot.lane.b32.xlu0 %v1148, 64
    %v1151 = vpop.permute.xlu0 %1150
    %v1153 = vadd.f32 %v1143, %v1151
    %v1154 = vtanh.pop %v1153
    %1156 = vrot.lane.b32.xlu0 %v1154, 64
    %v1157 = vpop.permute.xlu0 %1156
    %v1159 = vmul.f32 %v1137, %v1157
    %v1160 = vsel %vm106, 6.0, 1.0
    %vm1161 = vcmp.lt.f32.partialorder %v1160, %v111
    %v1162 = vsel %vm1161, %v1159, %v1035
    %1164 = vrot.lane.b32.xlu0 %v1153, 64
    %v1165 = vpop.permute.xlu0 %1164
    %v1167 = vsel %vm1161, %v1165, %v1040
    %v1168 = vsel %vm1161, %v1159, 0.0
    %1169 = vst.msk [vmem:[#allocation3 + $0x30] sm:$0xff] %vm405, %v1168
    %1170 = vst.msk [vmem:[#allocation3 + $0x8] sm:$0xff] %vm407, %v1168
    %v1171 = vld [vmem:[#allocation2 + $0x70] sm:$0xff]
    %v1172 = vld [vmem:[#allocation2 + $0x78] sm:$0xff]
    %v1173 = vld [vmem:[#allocation2] sm:$0xff]
    %v1174 = vld [vmem:[#allocation2 + $0x8] sm:$0xff]
    %v1175 = vsel %vm104, %v1171, %v1173
    %v1176 = vsel %vm105, %v1172, %v1174
    %v1178 = vsel %vm290, %v1162, 0
    %1180 = vmatprep.subr.mxu0 %v269
    %1181 = vmatpush1.msra.mxu0 %v268
    %1182 = vmatprep.subr.mxu0 %v271
    %1183 = vmatpush1.msra.mxu0 %v270
    %1184 = vmatprep.subr.mxu0 %v273
    %1185 = vmatpush1.msra.mxu0 %v272
    %1186 = vmatprep.subr.mxu0 %v275
    %1187 = vmatpush1.msra.mxu0 %v274
    %1188 = vmatprep.subr.mxu0 %v277
    %1189 = vmatpush1.msra.mxu0 %v276
    %1190 = vmatprep.subr.mxu0 %v279
    %1191 = vmatpush1.msra.mxu0 %v278
    %1192 = vmatprep.subr.mxu0 %v281
    %1193 = vmatpush1.msra.mxu0 %v280
    %1194 = vmatprep.subr.mxu0 %v283
    %1195 = vmatpush1.msra.mxu0 %v282
    %1196 = vmatprep.subr.mxu0 0.0
    %1197 = vmatpush1.msra.mxu0 0.0
    %1198 = vmatprep.subr.mxu0 0.0
    %1199 = vmatpush1.msra.mxu0 0.0
    %1200 = vmatprep.subr.mxu0 0.0
    %1201 = vmatpush1.msra.mxu0 0.0
    %1202 = vmatprep.subr.mxu0 0.0
    %1203 = vmatpush1.msra.mxu0 0.0
    %1204 = vmatprep.subr.mxu0 0.0
    %1205 = vmatpush1.msra.mxu0 0.0
    %1206 = vmatprep.subr.mxu0 0.0
    %1207 = vmatpush1.msra.mxu0 0.0
    %1208 = vmatprep.subr.mxu0 0.0
    %1209 = vmatpush1.msra.mxu0 0.0
    %1210 = vmatprep.subr.mxu0 0.0
    %1211 = vmatpush1.msra.mxu0 0.0
    %1212 = vmatprep.subr.mxu0 0.0
    %1213 = vmatpush1.msra.mxu0 0.0
    %1214 = vmatprep.subr.mxu0 0.0
    %1215 = vmatpush1.msra.mxu0 0.0
    %1216 = vmatprep.subr.mxu0 0.0
    %1217 = vmatpush1.msra.mxu0 0.0
    %1218 = vmatprep.subr.mxu0 0.0
    %1219 = vmatpush1.msra.mxu0 0.0
    %1220 = vmatprep.subr.mxu0 0.0
    %1221 = vmatpush1.msra.mxu0 0.0
    %1222 = vmatprep.subr.mxu0 0.0
    %1223 = vmatpush1.msra.mxu0 0.0
    %1224 = vmatprep.subr.mxu0 0.0
    %1225 = vmatpush1.msra.mxu0 0.0
    %1226 = vmatprep.subr.mxu0 0.0
    %1227 = vmatpush1.msra.mxu0 0.0
    %1228 = vmatprep.subr.mxu0 0.0
    %1229 = vmatpush1.msra.mxu0 0.0
    %1230 = vmatprep.subr.mxu0 0.0
    %1231 = vmatpush1.msra.mxu0 0.0
    %1232 = vmatprep.subr.mxu0 0.0
    %1233 = vmatpush1.msra.mxu0 0.0
    %1234 = vmatprep.subr.mxu0 0.0
    %1235 = vmatpush1.msra.mxu0 0.0
    %1236 = vmatprep.subr.mxu0 0.0
    %1237 = vmatpush1.msra.mxu0 0.0
    %1238 = vmatprep.subr.mxu0 0.0
    %1239 = vmatpush1.msra.mxu0 0.0
    %1240 = vmatprep.subr.mxu0 0.0
    %1241 = vmatpush1.msra.mxu0 0.0
    %1242 = vmatprep.subr.mxu0 0.0
    %1243 = vmatpush1.msra.mxu0 0.0
    %1244 = vmatprep.mubr.f32.mxu0 0.0
    %1245 = vmatmul.mubr.f32.gmra.mrb[0].mxu0 %v1178
    %v1246 = vpop.f32.mrb[0].mxu0
    %v1247 = vadd.f32 0.0, %v1246
    %v1248 = vpop.f32.mrb[0].mxu0
    %v1249 = vadd.f32 0.0, %v1248
    %1250 = vdwg.mxu0
    %v1251 = vadd.f32 %v1175, %v1247
    %v1252 = vadd.f32 %v1176, %v1249
    %v1253 = vxor.u32 %v1251, 2147483648
    %v1254 = vxor.u32 %v1252, 2147483648
    %v1255 = vmul.f32 %v1253, 1.442695
    %v1256 = vpow.pop %v1255
    %v1257 = vmul.f32 %v1254, 1.442695
    %v1258 = vpow.pop %v1257
    %v1259 = vadd.f32 %v1256, 1.0
    %v1260 = vadd.f32 %v1258, 1.0
    %v1261 = vrcp.pop %v1259
    %v1262 = vmul.f32 1.0, %v1261
    %v1263 = vrcp.pop %v1260
    %v1264 = vmul.f32 1.0, %v1263
    %v1265 = vtanh.pop %v1252
    %1267 = vrot.lane.b32.xlu0 %v1167, 64
    %v1268 = vpop.permute.xlu0 %1267
    %v1270 = vmul.f32 %v1262, %v1268
    %1272 = vrot.lane.b32.xlu0 %v1265, 64
    %v1273 = vpop.permute.xlu0 %1272
    %v1275 = vmul.f32 %v1262, %v1273
    %1277 = vrot.lane.b32.xlu0 %v1275, 64
    %v1278 = vpop.permute.xlu0 %1277
    %v1280 = vadd.f32 %v1270, %v1278
    %v1281 = vtanh.pop %v1280
    %1283 = vrot.lane.b32.xlu0 %v1281, 64
    %v1284 = vpop.permute.xlu0 %1283
    %v1286 = vmul.f32 %v1264, %v1284
    %v1287 = vsel %vm106, 7.0, 0.0
    %vm1288 = vcmp.lt.f32.partialorder %v1287, %v111
    %v1289 = vsel %vm1288, %v1286, 0.0
    %1290 = vst.msk [vmem:[#allocation3 + $0x38] sm:$0xff] %vm405, %v1289
    %1291 = vst.msk [vmem:[#allocation3] sm:$0xff] %vm407, %v1289
    %v1292 = vld [vmem:[#allocation3] sm:$0xff]
    %v1293 = vld [vmem:[#allocation3 + $0x8] sm:$0xff]
    %v1294 = vld [vmem:[#allocation3 + $0x10] sm:$0xff]
    %v1295 = vld [vmem:[#allocation3 + $0x18] sm:$0xff]
    %v1296 = vld [vmem:[#allocation3 + $0x20] sm:$0xff]
    %v1297 = vld [vmem:[#allocation3 + $0x28] sm:$0xff]
    %v1298 = vld [vmem:[#allocation3 + $0x30] sm:$0xff]
    %v1299 = vld [vmem:[#allocation3 + $0x38] sm:$0xff]
    %v1300 = vpack.c.bf16 %v1293, %v1292
    %v1301 = vpack.c.bf16 %v1295, %v1294
    %v1302 = vpack.c.bf16 %v1297, %v1296
    %v1303 = vpack.c.bf16 %v1299, %v1298
    %v1304 = vld [vmem:[#allocation9] sm:$0xff]
    %v1305 = vld [vmem:[#allocation9 + $0x8] sm:$0xff]
    %v1306 = vld [vmem:[#allocation9 + $0x10] sm:$0xff]
    %v1307 = vld [vmem:[#allocation9 + $0x18] sm:$0xff]
    %v1308 = vld [vmem:[#allocation9 + $0x20] sm:$0xff]
    %v1309 = vld [vmem:[#allocation9 + $0x28] sm:$0xff]
    %v1310 = vld [vmem:[#allocation9 + $0x30] sm:$0xff]
    %v1311 = vld [vmem:[#allocation9 + $0x38] sm:$0xff]
    %v1312 = vld [vmem:[%s7] sm:$0x3]
    %v1314 = vlaneseq
    %v1315 = vshrl.u32 %v1314, 7
    %v1316 = vsub.s32 0, %v1315
    %v1317 = vrot.slane %v1312, %v1316
    %v1318 = vlaneseq
    %v1319 = vshrl.u32 %v1318, 7
    %v1320 = vsub.s32 1, %v1319
    %v1321 = vrot.slane %v1312, %v1320
    %v1332 = vunpack.c.l.b16 %v1304
    %v1333 = vunpack.c.h.b16 %v1304
    %v1334 = vunpack.c.l.b16 %v1305
    %v1335 = vunpack.c.h.b16 %v1305
    %v1336 = vunpack.c.l.b16 %v1306
    %v1337 = vunpack.c.h.b16 %v1306
    %v1338 = vunpack.c.l.b16 %v1307
    %v1339 = vunpack.c.h.b16 %v1307
    %v1340 = vunpack.c.l.b16 %v1308
    %v1341 = vunpack.c.h.b16 %v1308
    %v1342 = vunpack.c.l.b16 %v1309
    %v1343 = vunpack.c.h.b16 %v1309
    %v1344 = vunpack.c.l.b16 %v1310
    %v1345 = vunpack.c.h.b16 %v1310
    %v1346 = vunpack.c.l.b16 %v1311
    %v1347 = vunpack.c.h.b16 %v1311
    %v1348 = vpack.c.b16 %v1334, %v1332
    %v1349 = vpack.c.b16 %v1335, %v1333
    %v1350 = vpack.c.b16 %v1338, %v1336
    %v1351 = vpack.c.b16 %v1339, %v1337
    %v1352 = vpack.c.b16 %v1342, %v1340
    %v1353 = vpack.c.b16 %v1343, %v1341
    %v1354 = vpack.c.b16 %v1346, %v1344
    %v1355 = vpack.c.b16 %v1347, %v1345
    %v1365 = vsel %vm290, %v1300, 0
    %v1368 = vsel %vm290, %v1301, 0
    %v1371 = vsel %vm290, %v1302, 0
    %v1374 = vsel %vm290, %v1303, 0
    %1376 = vmatprep.subr.bf16.mxu0 %v1349
    %1377 = vmatpush1.bf16.msra.mxu0 %v1348
    %1378 = vmatprep.subr.bf16.mxu0 %v1351
    %1379 = vmatpush1.bf16.msra.mxu0 %v1350
    %1380 = vmatprep.subr.bf16.mxu0 %v1353
    %1381 = vmatpush1.bf16.msra.mxu0 %v1352
    %1382 = vmatprep.subr.bf16.mxu0 %v1355
    %1383 = vmatpush1.bf16.msra.mxu0 %v1354
    %1384 = vmatprep.subr.bf16.mxu0 0
    %1385 = vmatpush1.bf16.msra.mxu0 0
    %1386 = vmatprep.subr.bf16.mxu0 0
    %1387 = vmatpush1.bf16.msra.mxu0 0
    %1388 = vmatprep.subr.bf16.mxu0 0
    %1389 = vmatpush1.bf16.msra.mxu0 0
    %1390 = vmatprep.subr.bf16.mxu0 0
    %1391 = vmatpush1.bf16.msra.mxu0 0
    %1392 = vmatprep.subr.bf16.mxu0 0
    %1393 = vmatpush1.bf16.msra.mxu0 0
    %1394 = vmatprep.subr.bf16.mxu0 0
    %1395 = vmatpush1.bf16.msra.mxu0 0
    %1396 = vmatprep.subr.bf16.mxu0 0
    %1397 = vmatpush1.bf16.msra.mxu0 0
    %1398 = vmatprep.subr.bf16.mxu0 0
    %1399 = vmatpush1.bf16.msra.mxu0 0
    %1400 = vmatprep.subr.bf16.mxu0 0
    %1401 = vmatpush1.bf16.msra.mxu0 0
    %1402 = vmatprep.subr.bf16.mxu0 0
    %1403 = vmatpush1.bf16.msra.mxu0 0
    %1404 = vmatprep.subr.bf16.mxu0 0
    %1405 = vmatpush1.bf16.msra.mxu0 0
    %1406 = vmatprep.subr.bf16.mxu0 0
    %1407 = vmatpush1.bf16.msra.mxu0 0
    %1408 = vmatprep.mubr.bf16.mxu0 0
    %1409 = vmatmul.mubr.bf16.gmra.mrb[0].mxu0 %v1365
    %v1410 = vpop.f32.mrb[0].mxu0
    %v1411 = vadd.f32 %v1317, %v1410
    %v1412 = vpop.f32.mrb[0].mxu0
    %v1413 = vadd.f32 %v1321, %v1412
    %v1414 = vpop.f32.mrb[0].mxu0
    %v1415 = vadd.f32 %v1317, %v1414
    %v1416 = vpop.f32.mrb[0].mxu0
    %v1417 = vadd.f32 %v1321, %v1416
    %1418 = vmatprep.mubr.bf16.mxu0 0
    %1419 = vmatmul.mubr.bf16.gmra.mrb[0].mxu0 %v1368
    %v1420 = vpop.f32.mrb[0].mxu0
    %v1421 = vadd.f32 %v1317, %v1420
    %v1422 = vpop.f32.mrb[0].mxu0
    %v1423 = vadd.f32 %v1321, %v1422
    %v1424 = vpop.f32.mrb[0].mxu0
    %v1425 = vadd.f32 %v1317, %v1424
    %v1426 = vpop.f32.mrb[0].mxu0
    %v1427 = vadd.f32 %v1321, %v1426
    %1428 = vmatprep.mubr.bf16.mxu0 0
    %1429 = vmatmul.mubr.bf16.gmra.mrb[0].mxu0 %v1371
    %v1430 = vpop.f32.mrb[0].mxu0
    %v1431 = vadd.f32 %v1317, %v1430
    %v1432 = vpop.f32.mrb[0].mxu0
    %v1433 = vadd.f32 %v1321, %v1432
    %v1434 = vpop.f32.mrb[0].mxu0
    %v1435 = vadd.f32 %v1317, %v1434
    %v1436 = vpop.f32.mrb[0].mxu0
    %v1437 = vadd.f32 %v1321, %v1436
    %1438 = vmatprep.mubr.bf16.mxu0 0
    %1439 = vmatmul.mubr.bf16.gmra.mrb[0].mxu0 %v1374
    %v1440 = vpop.f32.mrb[0].mxu0
    %v1441 = vadd.f32 %v1317, %v1440
    %v1442 = vpop.f32.mrb[0].mxu0
    %v1443 = vadd.f32 %v1321, %v1442
    %v1444 = vpop.f32.mrb[0].mxu0
    %v1445 = vadd.f32 %v1317, %v1444
    %v1446 = vpop.f32.mrb[0].mxu0
    %v1447 = vadd.f32 %v1321, %v1446
    %1448 = vdwg.mxu0
    %1449 = vst [vmem:[#allocation2] sm:$0xff] %v1411
    %1450 = vst [vmem:[#allocation2 + $0x8] sm:$0xff] %v1413
    %1451 = vst [vmem:[#allocation2 + $0x10] sm:$0xff] %v1415
    %1452 = vst [vmem:[#allocation2 + $0x18] sm:$0xff] %v1417
    %1453 = vst [vmem:[#allocation2 + $0x20] sm:$0xff] %v1421
    %1454 = vst [vmem:[#allocation2 + $0x28] sm:$0xff] %v1423
    %1455 = vst [vmem:[#allocation2 + $0x30] sm:$0xff] %v1425
    %1456 = vst [vmem:[#allocation2 + $0x38] sm:$0xff] %v1427
    %1457 = vst [vmem:[#allocation2 + $0x40] sm:$0xff] %v1431
    %1458 = vst [vmem:[#allocation2 + $0x48] sm:$0xff] %v1433
    %1459 = vst [vmem:[#allocation2 + $0x50] sm:$0xff] %v1435
    %1460 = vst [vmem:[#allocation2 + $0x58] sm:$0xff] %v1437
    %1461 = vst [vmem:[#allocation2 + $0x60] sm:$0xff] %v1441
    %1462 = vst [vmem:[#allocation2 + $0x68] sm:$0xff] %v1443
    %1463 = vst [vmem:[#allocation2 + $0x70] sm:$0xff] %v1445
    %1464 = vst [vmem:[#allocation2 + $0x78] sm:$0xff] %v1447
    %v1465 = vld [vmem:[%s6] sm:$0xff]
    %v1466 = vld [vmem:[%s6 + $0x8] sm:$0xff]
    %v1467 = vld [vmem:[%s6 + $0x10] sm:$0xff]
    %v1468 = vld [vmem:[%s6 + $0x18] sm:$0xff]
    %v1469 = vld [vmem:[%s6 + $0x20] sm:$0xff]
    %v1470 = vld [vmem:[%s6 + $0x28] sm:$0xff]
    %v1471 = vld [vmem:[%s6 + $0x30] sm:$0xff]
    %v1472 = vld [vmem:[%s6 + $0x38] sm:$0xff]
    %v1473 = vld [vmem:[%s6 + $0x40] sm:$0xff]
    %v1474 = vld [vmem:[%s6 + $0x48] sm:$0xff]
    %v1475 = vld [vmem:[%s6 + $0x50] sm:$0xff]
    %v1476 = vld [vmem:[%s6 + $0x58] sm:$0xff]
    %v1477 = vld [vmem:[%s6 + $0x60] sm:$0xff]
    %v1478 = vld [vmem:[%s6 + $0x68] sm:$0xff]
    %v1479 = vld [vmem:[%s6 + $0x70] sm:$0xff]
    %v1480 = vld [vmem:[%s6 + $0x78] sm:$0xff]
    %v1481 = vld [vmem:[#allocation2] sm:$0xff]
    %v1482 = vld [vmem:[#allocation2 + $0x8] sm:$0xff]
    %v1483 = vld [vmem:[#allocation2 + $0x70] sm:$0xff]
    %v1484 = vld [vmem:[#allocation2 + $0x78] sm:$0xff]
    %v1485 = vsel %vm104, %v1481, %v1483
    %v1486 = vsel %vm105, %v1482, %v1484
    %1487 = vmatprep.subr.mxu0 %v1466
    %1488 = vmatpush1.msra.mxu0 %v1465
    %1489 = vmatprep.subr.mxu0 %v1468
    %1490 = vmatpush1.msra.mxu0 %v1467
    %1491 = vmatprep.subr.mxu0 %v1470
    %1492 = vmatpush1.msra.mxu0 %v1469
    %1493 = vmatprep.subr.mxu0 %v1472
    %1494 = vmatpush1.msra.mxu0 %v1471
    %1495 = vmatprep.subr.mxu0 %v1474
    %1496 = vmatpush1.msra.mxu0 %v1473
    %1497 = vmatprep.subr.mxu0 %v1476
    %1498 = vmatpush1.msra.mxu0 %v1475
    %1499 = vmatprep.subr.mxu0 %v1478
    %1500 = vmatpush1.msra.mxu0 %v1477
    %1501 = vmatprep.subr.mxu0 %v1480
    %1502 = vmatpush1.msra.mxu0 %v1479
    %1503 = vmatprep.subr.mxu0 0.0
    %1504 = vmatpush1.msra.mxu0 0.0
    %1505 = vmatprep.subr.mxu0 0.0
    %1506 = vmatpush1.msra.mxu0 0.0
    %1507 = vmatprep.subr.mxu0 0.0
    %1508 = vmatpush1.msra.mxu0 0.0
    %1509 = vmatprep.subr.mxu0 0.0
    %1510 = vmatpush1.msra.mxu0 0.0
    %1511 = vmatprep.subr.mxu0 0.0
    %1512 = vmatpush1.msra.mxu0 0.0
    %1513 = vmatprep.subr.mxu0 0.0
    %1514 = vmatpush1.msra.mxu0 0.0
    %1515 = vmatprep.subr.mxu0 0.0
    %1516 = vmatpush1.msra.mxu0 0.0
    %1517 = vmatprep.subr.mxu0 0.0
    %1518 = vmatpush1.msra.mxu0 0.0
    %1519 = vmatprep.subr.mxu0 0.0
    %1520 = vmatpush1.msra.mxu0 0.0
    %1521 = vmatprep.subr.mxu0 0.0
    %1522 = vmatpush1.msra.mxu0 0.0
    %1523 = vmatprep.subr.mxu0 0.0
    %1524 = vmatpush1.msra.mxu0 0.0
    %1525 = vmatprep.subr.mxu0 0.0
    %1526 = vmatpush1.msra.mxu0 0.0
    %1527 = vmatprep.subr.mxu0 0.0
    %1528 = vmatpush1.msra.mxu0 0.0
    %1529 = vmatprep.subr.mxu0 0.0
    %1530 = vmatpush1.msra.mxu0 0.0
    %1531 = vmatprep.subr.mxu0 0.0
    %1532 = vmatpush1.msra.mxu0 0.0
    %1533 = vmatprep.subr.mxu0 0.0
    %1534 = vmatpush1.msra.mxu0 0.0
    %1535 = vmatprep.subr.mxu0 0.0
    %1536 = vmatpush1.msra.mxu0 0.0
    %1537 = vmatprep.subr.mxu0 0.0
    %1538 = vmatpush1.msra.mxu0 0.0
    %1539 = vmatprep.subr.mxu0 0.0
    %1540 = vmatpush1.msra.mxu0 0.0
    %1541 = vmatprep.subr.mxu0 0.0
    %1542 = vmatpush1.msra.mxu0 0.0
    %1543 = vmatprep.subr.mxu0 0.0
    %1544 = vmatpush1.msra.mxu0 0.0
    %1545 = vmatprep.subr.mxu0 0.0
    %1546 = vmatpush1.msra.mxu0 0.0
    %1547 = vmatprep.subr.mxu0 0.0
    %1548 = vmatpush1.msra.mxu0 0.0
    %1549 = vmatprep.subr.mxu0 0.0
    %1550 = vmatpush1.msra.mxu0 0.0
    %1551 = vmatprep.mubr.f32.mxu0 0.0
    %1552 = vmatmul.mubr.f32.gmra.mrb[0].mxu0 %v292
    %v1553 = vpop.f32.mrb[0].mxu0
    %v1554 = vadd.f32 0.0, %v1553
    %v1555 = vpop.f32.mrb[0].mxu0
    %v1556 = vadd.f32 0.0, %v1555
    %1557 = vdwg.mxu0
    %v1558 = vadd.f32 %v1485, %v1554
    %v1559 = vadd.f32 %v1486, %v1556
    %v1560 = vxor.u32 %v1558, 2147483648
    %v1561 = vxor.u32 %v1559, 2147483648
    %v1562 = vmul.f32 %v1560, 1.442695
    %v1563 = vpow.pop %v1562
    %v1564 = vmul.f32 %v1561, 1.442695
    %v1565 = vpow.pop %v1564
    %v1566 = vadd.f32 %v1563, 1.0
    %v1567 = vadd.f32 %v1565, 1.0
    %v1568 = vrcp.pop %v1566
    %v1569 = vmul.f32 1.0, %v1568
    %v1570 = vrcp.pop %v1567
    %v1571 = vmul.f32 1.0, %v1570
    %v1572 = vtanh.pop %v1559
    %v1573 = vmul.f32 %v1569, 0.0
    %1575 = vrot.lane.b32.xlu0 %v1572, 64
    %v1576 = vpop.permute.xlu0 %1575
    %v1578 = vmul.f32 %v1569, %v1576
    %1580 = vrot.lane.b32.xlu0 %v1578, 64
    %v1581 = vpop.permute.xlu0 %1580
    %v1583 = vadd.f32 %v1573, %v1581
    %v1584 = vtanh.pop %v1583
    %1586 = vrot.lane.b32.xlu0 %v1584, 64
    %v1587 = vpop.permute.xlu0 %1586
    %v1589 = vmul.f32 %v1571, %v1587
    %v1590 = vsel %vm398, %v1589, 0.0
    %1592 = vrot.lane.b32.xlu0 %v1583, 64
    %v1593 = vpop.permute.xlu0 %1592
    %v1595 = vsel %vm398, %v1593, 0.0
    %vm1596 = vcmp.eq.f32.partialorder %v397, %v113
    %v1597 = vsel %vm1596, %v1589, 0.0
    %v1598 = vld [vmem:[#allocation2 + $0x10] sm:$0xff]
    %v1599 = vld [vmem:[#allocation2 + $0x18] sm:$0xff]
    %v1600 = vld [vmem:[#allocation2 + $0x60] sm:$0xff]
    %v1601 = vld [vmem:[#allocation2 + $0x68] sm:$0xff]
    %v1602 = vsel %vm104, %v1598, %v1600
    %v1603 = vsel %vm105, %v1599, %v1601
    %v1605 = vsel %vm290, %v1590, 0
    %1607 = vmatprep.subr.mxu0 %v1466
    %1608 = vmatpush1.msra.mxu0 %v1465
    %1609 = vmatprep.subr.mxu0 %v1468
    %1610 = vmatpush1.msra.mxu0 %v1467
    %1611 = vmatprep.subr.mxu0 %v1470
    %1612 = vmatpush1.msra.mxu0 %v1469
    %1613 = vmatprep.subr.mxu0 %v1472
    %1614 = vmatpush1.msra.mxu0 %v1471
    %1615 = vmatprep.subr.mxu0 %v1474
    %1616 = vmatpush1.msra.mxu0 %v1473
    %1617 = vmatprep.subr.mxu0 %v1476
    %1618 = vmatpush1.msra.mxu0 %v1475
    %1619 = vmatprep.subr.mxu0 %v1478
    %1620 = vmatpush1.msra.mxu0 %v1477
    %1621 = vmatprep.subr.mxu0 %v1480
    %1622 = vmatpush1.msra.mxu0 %v1479
    %1623 = vmatprep.subr.mxu0 0.0
    %1624 = vmatpush1.msra.mxu0 0.0
    %1625 = vmatprep.subr.mxu0 0.0
    %1626 = vmatpush1.msra.mxu0 0.0
    %1627 = vmatprep.subr.mxu0 0.0
    %1628 = vmatpush1.msra.mxu0 0.0
    %1629 = vmatprep.subr.mxu0 0.0
    %1630 = vmatpush1.msra.mxu0 0.0
    %1631 = vmatprep.subr.mxu0 0.0
    %1632 = vmatpush1.msra.mxu0 0.0
    %1633 = vmatprep.subr.mxu0 0.0
    %1634 = vmatpush1.msra.mxu0 0.0
    %1635 = vmatprep.subr.mxu0 0.0
    %1636 = vmatpush1.msra.mxu0 0.0
    %1637 = vmatprep.subr.mxu0 0.0
    %1638 = vmatpush1.msra.mxu0 0.0
    %1639 = vmatprep.subr.mxu0 0.0
    %1640 = vmatpush1.msra.mxu0 0.0
    %1641 = vmatprep.subr.mxu0 0.0
    %1642 = vmatpush1.msra.mxu0 0.0
    %1643 = vmatprep.subr.mxu0 0.0
    %1644 = vmatpush1.msra.mxu0 0.0
    %1645 = vmatprep.subr.mxu0 0.0
    %1646 = vmatpush1.msra.mxu0 0.0
    %1647 = vmatprep.subr.mxu0 0.0
    %1648 = vmatpush1.msra.mxu0 0.0
    %1649 = vmatprep.subr.mxu0 0.0
    %1650 = vmatpush1.msra.mxu0 0.0
    %1651 = vmatprep.subr.mxu0 0.0
    %1652 = vmatpush1.msra.mxu0 0.0
    %1653 = vmatprep.subr.mxu0 0.0
    %1654 = vmatpush1.msra.mxu0 0.0
    %1655 = vmatprep.subr.mxu0 0.0
    %1656 = vmatpush1.msra.mxu0 0.0
    %1657 = vmatprep.subr.mxu0 0.0
    %1658 = vmatpush1.msra.mxu0 0.0
    %1659 = vmatprep.subr.mxu0 0.0
    %1660 = vmatpush1.msra.mxu0 0.0
    %1661 = vmatprep.subr.mxu0 0.0
    %1662 = vmatpush1.msra.mxu0 0.0
    %1663 = vmatprep.subr.mxu0 0.0
    %1664 = vmatpush1.msra.mxu0 0.0
    %1665 = vmatprep.subr.mxu0 0.0
    %1666 = vmatpush1.msra.mxu0 0.0
    %1667 = vmatprep.subr.mxu0 0.0
    %1668 = vmatpush1.msra.mxu0 0.0
    %1669 = vmatprep.subr.mxu0 0.0
    %1670 = vmatpush1.msra.mxu0 0.0
    %1671 = vmatprep.mubr.f32.mxu0 0.0
    %1672 = vmatmul.mubr.f32.gmra.mrb[0].mxu0 %v1605
    %v1673 = vpop.f32.mrb[0].mxu0
    %v1674 = vadd.f32 0.0, %v1673
    %v1675 = vpop.f32.mrb[0].mxu0
    %v1676 = vadd.f32 0.0, %v1675
    %1677 = vdwg.mxu0
    %v1678 = vadd.f32 %v1602, %v1674
    %v1679 = vadd.f32 %v1603, %v1676
    %v1680 = vxor.u32 %v1678, 2147483648
    %v1681 = vxor.u32 %v1679, 2147483648
    %v1682 = vmul.f32 %v1680, 1.442695
    %v1683 = vpow.pop %v1682
    %v1684 = vmul.f32 %v1681, 1.442695
    %v1685 = vpow.pop %v1684
    %v1686 = vadd.f32 %v1683, 1.0
    %v1687 = vadd.f32 %v1685, 1.0
    %v1688 = vrcp.pop %v1686
    %v1689 = vmul.f32 1.0, %v1688
    %v1690 = vrcp.pop %v1687
    %v1691 = vmul.f32 1.0, %v1690
    %v1692 = vtanh.pop %v1679
    %1694 = vrot.lane.b32.xlu0 %v1595, 64
    %v1695 = vpop.permute.xlu0 %1694
    %v1697 = vmul.f32 %v1689, %v1695
    %1699 = vrot.lane.b32.xlu0 %v1692, 64
    %v1700 = vpop.permute.xlu0 %1699
    %v1702 = vmul.f32 %v1689, %v1700
    %1704 = vrot.lane.b32.xlu0 %v1702, 64
    %v1705 = vpop.permute.xlu0 %1704
    %v1707 = vadd.f32 %v1697, %v1705
    %v1708 = vtanh.pop %v1707
    %1710 = vrot.lane.b32.xlu0 %v1708, 64
    %v1711 = vpop.permute.xlu0 %1710
    %v1713 = vmul.f32 %v1691, %v1711
    %v1714 = vsel %vm526, %v1713, %v1590
    %1716 = vrot.lane.b32.xlu0 %v1707, 64
    %v1717 = vpop.permute.xlu0 %1716
    %v1719 = vsel %vm526, %v1717, %v1595
    %vm1720 = vcmp.eq.f32.partialorder %v525, %v113
    %v1721 = vsel %vm1720, %v1713, %v1597
    %v1722 = vld [vmem:[#allocation2 + $0x20] sm:$0xff]
    %v1723 = vld [vmem:[#allocation2 + $0x28] sm:$0xff]
    %v1724 = vld [vmem:[#allocation2 + $0x50] sm:$0xff]
    %v1725 = vld [vmem:[#allocation2 + $0x58] sm:$0xff]
    %v1726 = vsel %vm104, %v1722, %v1724
    %v1727 = vsel %vm105, %v1723, %v1725
    %v1729 = vsel %vm290, %v1714, 0
    %1731 = vmatprep.subr.mxu0 %v1466
    %1732 = vmatpush1.msra.mxu0 %v1465
    %1733 = vmatprep.subr.mxu0 %v1468
    %1734 = vmatpush1.msra.mxu0 %v1467
    %1735 = vmatprep.subr.mxu0 %v1470
    %1736 = vmatpush1.msra.mxu0 %v1469
    %1737 = vmatprep.subr.mxu0 %v1472
    %1738 = vmatpush1.msra.mxu0 %v1471
    %1739 = vmatprep.subr.mxu0 %v1474
    %1740 = vmatpush1.msra.mxu0 %v1473
    %1741 = vmatprep.subr.mxu0 %v1476
    %1742 = vmatpush1.msra.mxu0 %v1475
    %1743 = vmatprep.subr.mxu0 %v1478
    %1744 = vmatpush1.msra.mxu0 %v1477
    %1745 = vmatprep.subr.mxu0 %v1480
    %1746 = vmatpush1.msra.mxu0 %v1479
    %1747 = vmatprep.subr.mxu0 0.0
    %1748 = vmatpush1.msra.mxu0 0.0
    %1749 = vmatprep.subr.mxu0 0.0
    %1750 = vmatpush1.msra.mxu0 0.0
    %1751 = vmatprep.subr.mxu0 0.0
    %1752 = vmatpush1.msra.mxu0 0.0
    %1753 = vmatprep.subr.mxu0 0.0
    %1754 = vmatpush1.msra.mxu0 0.0
    %1755 = vmatprep.subr.mxu0 0.0
    %1756 = vmatpush1.msra.mxu0 0.0
    %1757 = vmatprep.subr.mxu0 0.0
    %1758 = vmatpush1.msra.mxu0 0.0
    %1759 = vmatprep.subr.mxu0 0.0
    %1760 = vmatpush1.msra.mxu0 0.0
    %1761 = vmatprep.subr.mxu0 0.0
    %1762 = vmatpush1.msra.mxu0 0.0
    %1763 = vmatprep.subr.mxu0 0.0
    %1764 = vmatpush1.msra.mxu0 0.0
    %1765 = vmatprep.subr.mxu0 0.0
    %1766 = vmatpush1.msra.mxu0 0.0
    %1767 = vmatprep.subr.mxu0 0.0
    %1768 = vmatpush1.msra.mxu0 0.0
    %1769 = vmatprep.subr.mxu0 0.0
    %1770 = vmatpush1.msra.mxu0 0.0
    %1771 = vmatprep.subr.mxu0 0.0
    %1772 = vmatpush1.msra.mxu0 0.0
    %1773 = vmatprep.subr.mxu0 0.0
    %1774 = vmatpush1.msra.mxu0 0.0
    %1775 = vmatprep.subr.mxu0 0.0
    %1776 = vmatpush1.msra.mxu0 0.0
    %1777 = vmatprep.subr.mxu0 0.0
    %1778 = vmatpush1.msra.mxu0 0.0
    %1779 = vmatprep.subr.mxu0 0.0
    %1780 = vmatpush1.msra.mxu0 0.0
    %1781 = vmatprep.subr.mxu0 0.0
    %1782 = vmatpush1.msra.mxu0 0.0
    %1783 = vmatprep.subr.mxu0 0.0
    %1784 = vmatpush1.msra.mxu0 0.0
    %1785 = vmatprep.subr.mxu0 0.0
    %1786 = vmatpush1.msra.mxu0 0.0
    %1787 = vmatprep.subr.mxu0 0.0
    %1788 = vmatpush1.msra.mxu0 0.0
    %1789 = vmatprep.subr.mxu0 0.0
    %1790 = vmatpush1.msra.mxu0 0.0
    %1791 = vmatprep.subr.mxu0 0.0
    %1792 = vmatpush1.msra.mxu0 0.0
    %1793 = vmatprep.subr.mxu0 0.0
    %1794 = vmatpush1.msra.mxu0 0.0
    %1795 = vmatprep.mubr.f32.mxu0 0.0
    %1796 = vmatmul.mubr.f32.gmra.mrb[0].mxu0 %v1729
    %v1797 = vpop.f32.mrb[0].mxu0
    %v1798 = vadd.f32 0.0, %v1797
    %v1799 = vpop.f32.mrb[0].mxu0
    %v1800 = vadd.f32 0.0, %v1799
    %1801 = vdwg.mxu0
    %v1802 = vadd.f32 %v1726, %v1798
    %v1803 = vadd.f32 %v1727, %v1800
    %v1804 = vxor.u32 %v1802, 2147483648
    %v1805 = vxor.u32 %v1803, 2147483648
    %v1806 = vmul.f32 %v1804, 1.442695
    %v1807 = vpow.pop %v1806
    %v1808 = vmul.f32 %v1805, 1.442695
    %v1809 = vpow.pop %v1808
    %v1810 = vadd.f32 %v1807, 1.0
    %v1811 = vadd.f32 %v1809, 1.0
    %v1812 = vrcp.pop %v1810
    %v1813 = vmul.f32 1.0, %v1812
    %v1814 = vrcp.pop %v1811
    %v1815 = vmul.f32 1.0, %v1814
    %v1816 = vtanh.pop %v1803
    %1818 = vrot.lane.b32.xlu0 %v1719, 64
    %v1819 = vpop.permute.xlu0 %1818
    %v1821 = vmul.f32 %v1813, %v1819
    %1823 = vrot.lane.b32.xlu0 %v1816, 64
    %v1824 = vpop.permute.xlu0 %1823
    %v1826 = vmul.f32 %v1813, %v1824
    %1828 = vrot.lane.b32.xlu0 %v1826, 64
    %v1829 = vpop.permute.xlu0 %1828
    %v1831 = vadd.f32 %v1821, %v1829
    %v1832 = vtanh.pop %v1831
    %1834 = vrot.lane.b32.xlu0 %v1832, 64
    %v1835 = vpop.permute.xlu0 %1834
    %v1837 = vmul.f32 %v1815, %v1835
    %v1838 = vsel %vm653, %v1837, %v1714
    %1840 = vrot.lane.b32.xlu0 %v1831, 64
    %v1841 = vpop.permute.xlu0 %1840
    %v1843 = vsel %vm653, %v1841, %v1719
    %vm1844 = vcmp.eq.f32.partialorder %v652, %v113
    %v1845 = vsel %vm1844, %v1837, %v1721
    %v1846 = vld [vmem:[#allocation2 + $0x30] sm:$0xff]
    %v1847 = vld [vmem:[#allocation2 + $0x38] sm:$0xff]
    %v1848 = vld [vmem:[#allocation2 + $0x40] sm:$0xff]
    %v1849 = vld [vmem:[#allocation2 + $0x48] sm:$0xff]
    %v1850 = vsel %vm104, %v1846, %v1848
    %v1851 = vsel %vm105, %v1847, %v1849
    %v1853 = vsel %vm290, %v1838, 0
    %1855 = vmatprep.subr.mxu0 %v1466
    %1856 = vmatpush1.msra.mxu0 %v1465
    %1857 = vmatprep.subr.mxu0 %v1468
    %1858 = vmatpush1.msra.mxu0 %v1467
    %1859 = vmatprep.subr.mxu0 %v1470
    %1860 = vmatpush1.msra.mxu0 %v1469
    %1861 = vmatprep.subr.mxu0 %v1472
    %1862 = vmatpush1.msra.mxu0 %v1471
    %1863 = vmatprep.subr.mxu0 %v1474
    %1864 = vmatpush1.msra.mxu0 %v1473
    %1865 = vmatprep.subr.mxu0 %v1476
    %1866 = vmatpush1.msra.mxu0 %v1475
    %1867 = vmatprep.subr.mxu0 %v1478
    %1868 = vmatpush1.msra.mxu0 %v1477
    %1869 = vmatprep.subr.mxu0 %v1480
    %1870 = vmatpush1.msra.mxu0 %v1479
    %1871 = vmatprep.subr.mxu0 0.0
    %1872 = vmatpush1.msra.mxu0 0.0
    %1873 = vmatprep.subr.mxu0 0.0
    %1874 = vmatpush1.msra.mxu0 0.0
    %1875 = vmatprep.subr.mxu0 0.0
    %1876 = vmatpush1.msra.mxu0 0.0
    %1877 = vmatprep.subr.mxu0 0.0
    %1878 = vmatpush1.msra.mxu0 0.0
    %1879 = vmatprep.subr.mxu0 0.0
    %1880 = vmatpush1.msra.mxu0 0.0
    %1881 = vmatprep.subr.mxu0 0.0
    %1882 = vmatpush1.msra.mxu0 0.0
    %1883 = vmatprep.subr.mxu0 0.0
    %1884 = vmatpush1.msra.mxu0 0.0
    %1885 = vmatprep.subr.mxu0 0.0
    %1886 = vmatpush1.msra.mxu0 0.0
    %1887 = vmatprep.subr.mxu0 0.0
    %1888 = vmatpush1.msra.mxu0 0.0
    %1889 = vmatprep.subr.mxu0 0.0
    %1890 = vmatpush1.msra.mxu0 0.0
    %1891 = vmatprep.subr.mxu0 0.0
    %1892 = vmatpush1.msra.mxu0 0.0
    %1893 = vmatprep.subr.mxu0 0.0
    %1894 = vmatpush1.msra.mxu0 0.0
    %1895 = vmatprep.subr.mxu0 0.0
    %1896 = vmatpush1.msra.mxu0 0.0
    %1897 = vmatprep.subr.mxu0 0.0
    %1898 = vmatpush1.msra.mxu0 0.0
    %1899 = vmatprep.subr.mxu0 0.0
    %1900 = vmatpush1.msra.mxu0 0.0
    %1901 = vmatprep.subr.mxu0 0.0
    %1902 = vmatpush1.msra.mxu0 0.0
    %1903 = vmatprep.subr.mxu0 0.0
    %1904 = vmatpush1.msra.mxu0 0.0
    %1905 = vmatprep.subr.mxu0 0.0
    %1906 = vmatpush1.msra.mxu0 0.0
    %1907 = vmatprep.subr.mxu0 0.0
    %1908 = vmatpush1.msra.mxu0 0.0
    %1909 = vmatprep.subr.mxu0 0.0
    %1910 = vmatpush1.msra.mxu0 0.0
    %1911 = vmatprep.subr.mxu0 0.0
    %1912 = vmatpush1.msra.mxu0 0.0
    %1913 = vmatprep.subr.mxu0 0.0
    %1914 = vmatpush1.msra.mxu0 0.0
    %1915 = vmatprep.subr.mxu0 0.0
    %1916 = vmatpush1.msra.mxu0 0.0
    %1917 = vmatprep.subr.mxu0 0.0
    %1918 = vmatpush1.msra.mxu0 0.0
    %1919 = vmatprep.mubr.f32.mxu0 0.0
    %1920 = vmatmul.mubr.f32.gmra.mrb[0].mxu0 %v1853
    %v1921 = vpop.f32.mrb[0].mxu0
    %v1922 = vadd.f32 0.0, %v1921
    %v1923 = vpop.f32.mrb[0].mxu0
    %v1924 = vadd.f32 0.0, %v1923
    %1925 = vdwg.mxu0
    %v1926 = vadd.f32 %v1850, %v1922
    %v1927 = vadd.f32 %v1851, %v1924
    %v1928 = vxor.u32 %v1926, 2147483648
    %v1929 = vxor.u32 %v1927, 2147483648
    %v1930 = vmul.f32 %v1928, 1.442695
    %v1931 = vpow.pop %v1930
    %v1932 = vmul.f32 %v1929, 1.442695
    %v1933 = vpow.pop %v1932
    %v1934 = vadd.f32 %v1931, 1.0
    %v1935 = vadd.f32 %v1933, 1.0
    %v1936 = vrcp.pop %v1934
    %v1937 = vmul.f32 1.0, %v1936
    %v1938 = vrcp.pop %v1935
    %v1939 = vmul.f32 1.0, %v1938
    %v1940 = vtanh.pop %v1927
    %1942 = vrot.lane.b32.xlu0 %v1843, 64
    %v1943 = vpop.permute.xlu0 %1942
    %v1945 = vmul.f32 %v1937, %v1943
    %1947 = vrot.lane.b32.xlu0 %v1940, 64
    %v1948 = vpop.permute.xlu0 %1947
    %v1950 = vmul.f32 %v1937, %v1948
    %1952 = vrot.lane.b32.xlu0 %v1950, 64
    %v1953 = vpop.permute.xlu0 %1952
    %v1955 = vadd.f32 %v1945, %v1953
    %v1956 = vtanh.pop %v1955
    %1958 = vrot.lane.b32.xlu0 %v1956, 64
    %v1959 = vpop.permute.xlu0 %1958
    %v1961 = vmul.f32 %v1939, %v1959
    %v1962 = vsel %vm780, %v1961, %v1838
    %1964 = vrot.lane.b32.xlu0 %v1955, 64
    %v1965 = vpop.permute.xlu0 %1964
    %v1967 = vsel %vm780, %v1965, %v1843
    %vm1968 = vcmp.eq.f32.partialorder %v779, %v113
    %v1969 = vsel %vm1968, %v1961, %v1845
    %v1970 = vsel %vm104, %v1848, %v1846
    %v1971 = vsel %vm105, %v1849, %v1847
    %v1973 = vsel %vm290, %v1962, 0
    %1975 = vmatprep.subr.mxu0 %v1466
    %1976 = vmatpush1.msra.mxu0 %v1465
    %1977 = vmatprep.subr.mxu0 %v1468
    %1978 = vmatpush1.msra.mxu0 %v1467
    %1979 = vmatprep.subr.mxu0 %v1470
    %1980 = vmatpush1.msra.mxu0 %v1469
    %1981 = vmatprep.subr.mxu0 %v1472
    %1982 = vmatpush1.msra.mxu0 %v1471
    %1983 = vmatprep.subr.mxu0 %v1474
    %1984 = vmatpush1.msra.mxu0 %v1473
    %1985 = vmatprep.subr.mxu0 %v1476
    %1986 = vmatpush1.msra.mxu0 %v1475
    %1987 = vmatprep.subr.mxu0 %v1478
    %1988 = vmatpush1.msra.mxu0 %v1477
    %1989 = vmatprep.subr.mxu0 %v1480
    %1990 = vmatpush1.msra.mxu0 %v1479
    %1991 = vmatprep.subr.mxu0 0.0
    %1992 = vmatpush1.msra.mxu0 0.0
    %1993 = vmatprep.subr.mxu0 0.0
    %1994 = vmatpush1.msra.mxu0 0.0
    %1995 = vmatprep.subr.mxu0 0.0
    %1996 = vmatpush1.msra.mxu0 0.0
    %1997 = vmatprep.subr.mxu0 0.0
    %1998 = vmatpush1.msra.mxu0 0.0
    %1999 = vmatprep.subr.mxu0 0.0
    %2000 = vmatpush1.msra.mxu0 0.0
    %2001 = vmatprep.subr.mxu0 0.0
    %2002 = vmatpush1.msra.mxu0 0.0
    %2003 = vmatprep.subr.mxu0 0.0
    %2004 = vmatpush1.msra.mxu0 0.0
    %2005 = vmatprep.subr.mxu0 0.0
    %2006 = vmatpush1.msra.mxu0 0.0
    %2007 = vmatprep.subr.mxu0 0.0
    %2008 = vmatpush1.msra.mxu0 0.0
    %2009 = vmatprep.subr.mxu0 0.0
    %2010 = vmatpush1.msra.mxu0 0.0
    %2011 = vmatprep.subr.mxu0 0.0
    %2012 = vmatpush1.msra.mxu0 0.0
    %2013 = vmatprep.subr.mxu0 0.0
    %2014 = vmatpush1.msra.mxu0 0.0
    %2015 = vmatprep.subr.mxu0 0.0
    %2016 = vmatpush1.msra.mxu0 0.0
    %2017 = vmatprep.subr.mxu0 0.0
    %2018 = vmatpush1.msra.mxu0 0.0
    %2019 = vmatprep.subr.mxu0 0.0
    %2020 = vmatpush1.msra.mxu0 0.0
    %2021 = vmatprep.subr.mxu0 0.0
    %2022 = vmatpush1.msra.mxu0 0.0
    %2023 = vmatprep.subr.mxu0 0.0
    %2024 = vmatpush1.msra.mxu0 0.0
    %2025 = vmatprep.subr.mxu0 0.0
    %2026 = vmatpush1.msra.mxu0 0.0
    %2027 = vmatprep.subr.mxu0 0.0
    %2028 = vmatpush1.msra.mxu0 0.0
    %2029 = vmatprep.subr.mxu0 0.0
    %2030 = vmatpush1.msra.mxu0 0.0
    %2031 = vmatprep.subr.mxu0 0.0
    %2032 = vmatpush1.msra.mxu0 0.0
    %2033 = vmatprep.subr.mxu0 0.0
    %2034 = vmatpush1.msra.mxu0 0.0
    %2035 = vmatprep.subr.mxu0 0.0
    %2036 = vmatpush1.msra.mxu0 0.0
    %2037 = vmatprep.subr.mxu0 0.0
    %2038 = vmatpush1.msra.mxu0 0.0
    %2039 = vmatprep.mubr.f32.mxu0 0.0
    %2040 = vmatmul.mubr.f32.gmra.mrb[0].mxu0 %v1973
    %v2041 = vpop.f32.mrb[0].mxu0
    %v2042 = vadd.f32 0.0, %v2041
    %v2043 = vpop.f32.mrb[0].mxu0
    %v2044 = vadd.f32 0.0, %v2043
    %2045 = vdwg.mxu0
    %v2046 = vadd.f32 %v1970, %v2042
    %v2047 = vadd.f32 %v1971, %v2044
    %v2048 = vxor.u32 %v2046, 2147483648
    %v2049 = vxor.u32 %v2047, 2147483648
    %v2050 = vmul.f32 %v2048, 1.442695
    %v2051 = vpow.pop %v2050
    %v2052 = vmul.f32 %v2049, 1.442695
    %v2053 = vpow.pop %v2052
    %v2054 = vadd.f32 %v2051, 1.0
    %v2055 = vadd.f32 %v2053, 1.0
    %v2056 = vrcp.pop %v2054
    %v2057 = vmul.f32 1.0, %v2056
    %v2058 = vrcp.pop %v2055
    %v2059 = vmul.f32 1.0, %v2058
    %v2060 = vtanh.pop %v2047
    %2062 = vrot.lane.b32.xlu0 %v1967, 64
    %v2063 = vpop.permute.xlu0 %2062
    %v2065 = vmul.f32 %v2057, %v2063
    %2067 = vrot.lane.b32.xlu0 %v2060, 64
    %v2068 = vpop.permute.xlu0 %2067
    %v2070 = vmul.f32 %v2057, %v2068
    %2072 = vrot.lane.b32.xlu0 %v2070, 64
    %v2073 = vpop.permute.xlu0 %2072
    %v2075 = vadd.f32 %v2065, %v2073
    %v2076 = vtanh.pop %v2075
    %2078 = vrot.lane.b32.xlu0 %v2076, 64
    %v2079 = vpop.permute.xlu0 %2078
    %v2081 = vmul.f32 %v2059, %v2079
    %v2082 = vsel %vm907, %v2081, %v1962
    %2084 = vrot.lane.b32.xlu0 %v2075, 64
    %v2085 = vpop.permute.xlu0 %2084
    %v2087 = vsel %vm907, %v2085, %v1967
    %vm2088 = vcmp.eq.f32.partialorder %v906, %v113
    %v2089 = vsel %vm2088, %v2081, %v1969
    %v2090 = vsel %vm104, %v1724, %v1722
    %v2091 = vsel %vm105, %v1725, %v1723
    %v2093 = vsel %vm290, %v2082, 0
    %2095 = vmatprep.subr.mxu0 %v1466
    %2096 = vmatpush1.msra.mxu0 %v1465
    %2097 = vmatprep.subr.mxu0 %v1468
    %2098 = vmatpush1.msra.mxu0 %v1467
    %2099 = vmatprep.subr.mxu0 %v1470
    %2100 = vmatpush1.msra.mxu0 %v1469
    %2101 = vmatprep.subr.mxu0 %v1472
    %2102 = vmatpush1.msra.mxu0 %v1471
    %2103 = vmatprep.subr.mxu0 %v1474
    %2104 = vmatpush1.msra.mxu0 %v1473
    %2105 = vmatprep.subr.mxu0 %v1476
    %2106 = vmatpush1.msra.mxu0 %v1475
    %2107 = vmatprep.subr.mxu0 %v1478
    %2108 = vmatpush1.msra.mxu0 %v1477
    %2109 = vmatprep.subr.mxu0 %v1480
    %2110 = vmatpush1.msra.mxu0 %v1479
    %2111 = vmatprep.subr.mxu0 0.0
    %2112 = vmatpush1.msra.mxu0 0.0
    %2113 = vmatprep.subr.mxu0 0.0
    %2114 = vmatpush1.msra.mxu0 0.0
    %2115 = vmatprep.subr.mxu0 0.0
    %2116 = vmatpush1.msra.mxu0 0.0
    %2117 = vmatprep.subr.mxu0 0.0
    %2118 = vmatpush1.msra.mxu0 0.0
    %2119 = vmatprep.subr.mxu0 0.0
    %2120 = vmatpush1.msra.mxu0 0.0
    %2121 = vmatprep.subr.mxu0 0.0
    %2122 = vmatpush1.msra.mxu0 0.0
    %2123 = vmatprep.subr.mxu0 0.0
    %2124 = vmatpush1.msra.mxu0 0.0
    %2125 = vmatprep.subr.mxu0 0.0
    %2126 = vmatpush1.msra.mxu0 0.0
    %2127 = vmatprep.subr.mxu0 0.0
    %2128 = vmatpush1.msra.mxu0 0.0
    %2129 = vmatprep.subr.mxu0 0.0
    %2130 = vmatpush1.msra.mxu0 0.0
    %2131 = vmatprep.subr.mxu0 0.0
    %2132 = vmatpush1.msra.mxu0 0.0
    %2133 = vmatprep.subr.mxu0 0.0
    %2134 = vmatpush1.msra.mxu0 0.0
    %2135 = vmatprep.subr.mxu0 0.0
    %2136 = vmatpush1.msra.mxu0 0.0
    %2137 = vmatprep.subr.mxu0 0.0
    %2138 = vmatpush1.msra.mxu0 0.0
    %2139 = vmatprep.subr.mxu0 0.0
    %2140 = vmatpush1.msra.mxu0 0.0
    %2141 = vmatprep.subr.mxu0 0.0
    %2142 = vmatpush1.msra.mxu0 0.0
    %2143 = vmatprep.subr.mxu0 0.0
    %2144 = vmatpush1.msra.mxu0 0.0
    %2145 = vmatprep.subr.mxu0 0.0
    %2146 = vmatpush1.msra.mxu0 0.0
    %2147 = vmatprep.subr.mxu0 0.0
    %2148 = vmatpush1.msra.mxu0 0.0
    %2149 = vmatprep.subr.mxu0 0.0
    %2150 = vmatpush1.msra.mxu0 0.0
    %2151 = vmatprep.subr.mxu0 0.0
    %2152 = vmatpush1.msra.mxu0 0.0
    %2153 = vmatprep.subr.mxu0 0.0
    %2154 = vmatpush1.msra.mxu0 0.0
    %2155 = vmatprep.subr.mxu0 0.0
    %2156 = vmatpush1.msra.mxu0 0.0
    %2157 = vmatprep.subr.mxu0 0.0
    %2158 = vmatpush1.msra.mxu0 0.0
    %2159 = vmatprep.mubr.f32.mxu0 0.0
    %2160 = vmatmul.mubr.f32.gmra.mrb[0].mxu0 %v2093
    %v2161 = vpop.f32.mrb[0].mxu0
    %v2162 = vadd.f32 0.0, %v2161
    %v2163 = vpop.f32.mrb[0].mxu0
    %v2164 = vadd.f32 0.0, %v2163
    %2165 = vdwg.mxu0
    %v2166 = vadd.f32 %v2090, %v2162
    %v2167 = vadd.f32 %v2091, %v2164
    %v2168 = vxor.u32 %v2166, 2147483648
    %v2169 = vxor.u32 %v2167, 2147483648
    %v2170 = vmul.f32 %v2168, 1.442695
    %v2171 = vpow.pop %v2170
    %v2172 = vmul.f32 %v2169, 1.442695
    %v2173 = vpow.pop %v2172
    %v2174 = vadd.f32 %v2171, 1.0
    %v2175 = vadd.f32 %v2173, 1.0
    %v2176 = vrcp.pop %v2174
    %v2177 = vmul.f32 1.0, %v2176
    %v2178 = vrcp.pop %v2175
    %v2179 = vmul.f32 1.0, %v2178
    %v2180 = vtanh.pop %v2167
    %2182 = vrot.lane.b32.xlu0 %v2087, 64
    %v2183 = vpop.permute.xlu0 %2182
    %v2185 = vmul.f32 %v2177, %v2183
    %2187 = vrot.lane.b32.xlu0 %v2180, 64
    %v2188 = vpop.permute.xlu0 %2187
    %v2190 = vmul.f32 %v2177, %v2188
    %2192 = vrot.lane.b32.xlu0 %v2190, 64
    %v2193 = vpop.permute.xlu0 %2192
    %v2195 = vadd.f32 %v2185, %v2193
    %v2196 = vtanh.pop %v2195
    %2198 = vrot.lane.b32.xlu0 %v2196, 64
    %v2199 = vpop.permute.xlu0 %2198
    %v2201 = vmul.f32 %v2179, %v2199
    %v2202 = vsel %vm1034, %v2201, %v2082
    %2204 = vrot.lane.b32.xlu0 %v2195, 64
    %v2205 = vpop.permute.xlu0 %2204
    %v2207 = vsel %vm1034, %v2205, %v2087
    %vm2208 = vcmp.eq.f32.partialorder %v1033, %v113
    %v2209 = vsel %vm2208, %v2201, %v2089
    %v2210 = vsel %vm104, %v1600, %v1598
    %v2211 = vsel %vm105, %v1601, %v1599
    %v2213 = vsel %vm290, %v2202, 0
    %2215 = vmatprep.subr.mxu0 %v1466
    %2216 = vmatpush1.msra.mxu0 %v1465
    %2217 = vmatprep.subr.mxu0 %v1468
    %2218 = vmatpush1.msra.mxu0 %v1467
    %2219 = vmatprep.subr.mxu0 %v1470
    %2220 = vmatpush1.msra.mxu0 %v1469
    %2221 = vmatprep.subr.mxu0 %v1472
    %2222 = vmatpush1.msra.mxu0 %v1471
    %2223 = vmatprep.subr.mxu0 %v1474
    %2224 = vmatpush1.msra.mxu0 %v1473
    %2225 = vmatprep.subr.mxu0 %v1476
    %2226 = vmatpush1.msra.mxu0 %v1475
    %2227 = vmatprep.subr.mxu0 %v1478
    %2228 = vmatpush1.msra.mxu0 %v1477
    %2229 = vmatprep.subr.mxu0 %v1480
    %2230 = vmatpush1.msra.mxu0 %v1479
    %2231 = vmatprep.subr.mxu0 0.0
    %2232 = vmatpush1.msra.mxu0 0.0
    %2233 = vmatprep.subr.mxu0 0.0
    %2234 = vmatpush1.msra.mxu0 0.0
    %2235 = vmatprep.subr.mxu0 0.0
    %2236 = vmatpush1.msra.mxu0 0.0
    %2237 = vmatprep.subr.mxu0 0.0
    %2238 = vmatpush1.msra.mxu0 0.0
    %2239 = vmatprep.subr.mxu0 0.0
    %2240 = vmatpush1.msra.mxu0 0.0
    %2241 = vmatprep.subr.mxu0 0.0
    %2242 = vmatpush1.msra.mxu0 0.0
    %2243 = vmatprep.subr.mxu0 0.0
    %2244 = vmatpush1.msra.mxu0 0.0
    %2245 = vmatprep.subr.mxu0 0.0
    %2246 = vmatpush1.msra.mxu0 0.0
    %2247 = vmatprep.subr.mxu0 0.0
    %2248 = vmatpush1.msra.mxu0 0.0
    %2249 = vmatprep.subr.mxu0 0.0
    %2250 = vmatpush1.msra.mxu0 0.0
    %2251 = vmatprep.subr.mxu0 0.0
    %2252 = vmatpush1.msra.mxu0 0.0
    %2253 = vmatprep.subr.mxu0 0.0
    %2254 = vmatpush1.msra.mxu0 0.0
    %2255 = vmatprep.subr.mxu0 0.0
    %2256 = vmatpush1.msra.mxu0 0.0
    %2257 = vmatprep.subr.mxu0 0.0
    %2258 = vmatpush1.msra.mxu0 0.0
    %2259 = vmatprep.subr.mxu0 0.0
    %2260 = vmatpush1.msra.mxu0 0.0
    %2261 = vmatprep.subr.mxu0 0.0
    %2262 = vmatpush1.msra.mxu0 0.0
    %2263 = vmatprep.subr.mxu0 0.0
    %2264 = vmatpush1.msra.mxu0 0.0
    %2265 = vmatprep.subr.mxu0 0.0
    %2266 = vmatpush1.msra.mxu0 0.0
    %2267 = vmatprep.subr.mxu0 0.0
    %2268 = vmatpush1.msra.mxu0 0.0
    %2269 = vmatprep.subr.mxu0 0.0
    %2270 = vmatpush1.msra.mxu0 0.0
    %2271 = vmatprep.subr.mxu0 0.0
    %2272 = vmatpush1.msra.mxu0 0.0
    %2273 = vmatprep.subr.mxu0 0.0
    %2274 = vmatpush1.msra.mxu0 0.0
    %2275 = vmatprep.subr.mxu0 0.0
    %2276 = vmatpush1.msra.mxu0 0.0
    %2277 = vmatprep.subr.mxu0 0.0
    %2278 = vmatpush1.msra.mxu0 0.0
    %2279 = vmatprep.mubr.f32.mxu0 0.0
    %2280 = vmatmul.mubr.f32.gmra.mrb[0].mxu0 %v2213
    %v2281 = vpop.f32.mrb[0].mxu0
    %v2282 = vadd.f32 0.0, %v2281
    %v2283 = vpop.f32.mrb[0].mxu0
    %v2284 = vadd.f32 0.0, %v2283
    %2285 = vdwg.mxu0
    %v2286 = vadd.f32 %v2210, %v2282
    %v2287 = vadd.f32 %v2211, %v2284
    %v2288 = vxor.u32 %v2286, 2147483648
    %v2289 = vxor.u32 %v2287, 2147483648
    %v2290 = vmul.f32 %v2288, 1.442695
    %v2291 = vpow.pop %v2290
    %v2292 = vmul.f32 %v2289, 1.442695
    %v2293 = vpow.pop %v2292
    %v2294 = vadd.f32 %v2291, 1.0
    %v2295 = vadd.f32 %v2293, 1.0
    %v2296 = vrcp.pop %v2294
    %v2297 = vmul.f32 1.0, %v2296
    %v2298 = vrcp.pop %v2295
    %v2299 = vmul.f32 1.0, %v2298
    %v2300 = vtanh.pop %v2287
    %2302 = vrot.lane.b32.xlu0 %v2207, 64
    %v2303 = vpop.permute.xlu0 %2302
    %v2305 = vmul.f32 %v2297, %v2303
    %2307 = vrot.lane.b32.xlu0 %v2300, 64
    %v2308 = vpop.permute.xlu0 %2307
    %v2310 = vmul.f32 %v2297, %v2308
    %2312 = vrot.lane.b32.xlu0 %v2310, 64
    %v2313 = vpop.permute.xlu0 %2312
    %v2315 = vadd.f32 %v2305, %v2313
    %v2316 = vtanh.pop %v2315
    %2318 = vrot.lane.b32.xlu0 %v2316, 64
    %v2319 = vpop.permute.xlu0 %2318
    %v2321 = vmul.f32 %v2299, %v2319
    %v2322 = vsel %vm1161, %v2321, %v2202
    %2324 = vrot.lane.b32.xlu0 %v2315, 64
    %v2325 = vpop.permute.xlu0 %2324
    %v2327 = vsel %vm1161, %v2325, %v2207
    %vm2328 = vcmp.eq.f32.partialorder %v1160, %v113
    %v2329 = vsel %vm2328, %v2321, %v2209
    %v2330 = vsel %vm104, %v1483, %v1481
    %v2331 = vsel %vm105, %v1484, %v1482
    %v2333 = vsel %vm290, %v2322, 0
    %2335 = vmatprep.subr.mxu0 %v1466
    %2336 = vmatpush1.msra.mxu0 %v1465
    %2337 = vmatprep.subr.mxu0 %v1468
    %2338 = vmatpush1.msra.mxu0 %v1467
    %2339 = vmatprep.subr.mxu0 %v1470
    %2340 = vmatpush1.msra.mxu0 %v1469
    %2341 = vmatprep.subr.mxu0 %v1472
    %2342 = vmatpush1.msra.mxu0 %v1471
    %2343 = vmatprep.subr.mxu0 %v1474
    %2344 = vmatpush1.msra.mxu0 %v1473
    %2345 = vmatprep.subr.mxu0 %v1476
    %2346 = vmatpush1.msra.mxu0 %v1475
    %2347 = vmatprep.subr.mxu0 %v1478
    %2348 = vmatpush1.msra.mxu0 %v1477
    %2349 = vmatprep.subr.mxu0 %v1480
    %2350 = vmatpush1.msra.mxu0 %v1479
    %2351 = vmatprep.subr.mxu0 0.0
    %2352 = vmatpush1.msra.mxu0 0.0
    %2353 = vmatprep.subr.mxu0 0.0
    %2354 = vmatpush1.msra.mxu0 0.0
    %2355 = vmatprep.subr.mxu0 0.0
    %2356 = vmatpush1.msra.mxu0 0.0
    %2357 = vmatprep.subr.mxu0 0.0
    %2358 = vmatpush1.msra.mxu0 0.0
    %2359 = vmatprep.subr.mxu0 0.0
    %2360 = vmatpush1.msra.mxu0 0.0
    %2361 = vmatprep.subr.mxu0 0.0
    %2362 = vmatpush1.msra.mxu0 0.0
    %2363 = vmatprep.subr.mxu0 0.0
    %2364 = vmatpush1.msra.mxu0 0.0
    %2365 = vmatprep.subr.mxu0 0.0
    %2366 = vmatpush1.msra.mxu0 0.0
    %2367 = vmatprep.subr.mxu0 0.0
    %2368 = vmatpush1.msra.mxu0 0.0
    %2369 = vmatprep.subr.mxu0 0.0
    %2370 = vmatpush1.msra.mxu0 0.0
    %2371 = vmatprep.subr.mxu0 0.0
    %2372 = vmatpush1.msra.mxu0 0.0
    %2373 = vmatprep.subr.mxu0 0.0
    %2374 = vmatpush1.msra.mxu0 0.0
    %2375 = vmatprep.subr.mxu0 0.0
    %2376 = vmatpush1.msra.mxu0 0.0
    %2377 = vmatprep.subr.mxu0 0.0
    %2378 = vmatpush1.msra.mxu0 0.0
    %2379 = vmatprep.subr.mxu0 0.0
    %2380 = vmatpush1.msra.mxu0 0.0
    %2381 = vmatprep.subr.mxu0 0.0
    %2382 = vmatpush1.msra.mxu0 0.0
    %2383 = vmatprep.subr.mxu0 0.0
    %2384 = vmatpush1.msra.mxu0 0.0
    %2385 = vmatprep.subr.mxu0 0.0
    %2386 = vmatpush1.msra.mxu0 0.0
    %2387 = vmatprep.subr.mxu0 0.0
    %2388 = vmatpush1.msra.mxu0 0.0
    %2389 = vmatprep.subr.mxu0 0.0
    %2390 = vmatpush1.msra.mxu0 0.0
    %2391 = vmatprep.subr.mxu0 0.0
    %2392 = vmatpush1.msra.mxu0 0.0
    %2393 = vmatprep.subr.mxu0 0.0
    %2394 = vmatpush1.msra.mxu0 0.0
    %2395 = vmatprep.subr.mxu0 0.0
    %2396 = vmatpush1.msra.mxu0 0.0
    %2397 = vmatprep.subr.mxu0 0.0
    %2398 = vmatpush1.msra.mxu0 0.0
    %2399 = vmatprep.mubr.f32.mxu0 0.0
    %2400 = vmatmul.mubr.f32.gmra.mrb[0].mxu0 %v2333
    %v2401 = vpop.f32.mrb[0].mxu0
    %v2402 = vadd.f32 0.0, %v2401
    %v2403 = vpop.f32.mrb[0].mxu0
    %v2404 = vadd.f32 0.0, %v2403
    %2405 = vdwg.mxu0
    %v2406 = vadd.f32 %v2330, %v2402
    %v2407 = vadd.f32 %v2331, %v2404
    %v2408 = vxor.u32 %v2406, 2147483648
    %v2409 = vxor.u32 %v2407, 2147483648
    %v2410 = vmul.f32 %v2408, 1.442695
    %v2411 = vpow.pop %v2410
    %v2412 = vmul.f32 %v2409, 1.442695
    %v2413 = vpow.pop %v2412
    %v2414 = vadd.f32 %v2411, 1.0
    %v2415 = vadd.f32 %v2413, 1.0
    %v2416 = vrcp.pop %v2414
    %v2417 = vmul.f32 1.0, %v2416
    %v2418 = vrcp.pop %v2415
    %v2419 = vmul.f32 1.0, %v2418
    %v2420 = vtanh.pop %v2407
    %2422 = vrot.lane.b32.xlu0 %v2327, 64
    %v2423 = vpop.permute.xlu0 %2422
    %v2425 = vmul.f32 %v2417, %v2423
    %2427 = vrot.lane.b32.xlu0 %v2420, 64
    %v2428 = vpop.permute.xlu0 %2427
    %v2430 = vmul.f32 %v2417, %v2428
    %2432 = vrot.lane.b32.xlu0 %v2430, 64
    %v2433 = vpop.permute.xlu0 %2432
    %v2435 = vadd.f32 %v2425, %v2433
    %v2436 = vtanh.pop %v2435
    %2438 = vrot.lane.b32.xlu0 %v2436, 64
    %v2439 = vpop.permute.xlu0 %2438
    %v2441 = vmul.f32 %v2419, %v2439
    %vm2442 = vcmp.eq.f32.partialorder %v1287, %v113
    %v2443 = vsel %vm2442, %v2441, %v2329
    %v2444 = vld [vmem:[%s8] sm:$0xff]
    %v2445 = vld [vmem:[%s8 + $0x8] sm:$0xff]
    %v2446 = vld [vmem:[%s8 + $0x10] sm:$0xff]
    %v2447 = vld [vmem:[%s8 + $0x18] sm:$0xff]
    %v2448 = vld [vmem:[%s8 + $0x20] sm:$0xff]
    %v2449 = vld [vmem:[%s8 + $0x28] sm:$0xff]
    %v2450 = vld [vmem:[%s8 + $0x30] sm:$0xff]
    %v2451 = vld [vmem:[%s8 + $0x38] sm:$0xff]
    %v2452 = vld [vmem:[%s9] sm:$0x1]
    %v2454 = vlaneseq
    %v2455 = vshrl.u32 %v2454, 7
    %v2456 = vsub.s32 0, %v2455
    %v2457 = vrot.slane %v2452, %v2456
    %v2460 = vsel %vm290, %v2443, 0
    %2462 = vmatprep.subr.mxu0 0.0
    %2463 = vmatpush1.msra.mxu0 %v2444
    %2464 = vmatprep.subr.mxu0 0.0
    %2465 = vmatpush1.msra.mxu0 %v2445
    %2466 = vmatprep.subr.mxu0 0.0
    %2467 = vmatpush1.msra.mxu0 %v2446
    %2468 = vmatprep.subr.mxu0 0.0
    %2469 = vmatpush1.msra.mxu0 %v2447
    %2470 = vmatprep.subr.mxu0 0.0
    %2471 = vmatpush1.msra.mxu0 %v2448
    %2472 = vmatprep.subr.mxu0 0.0
    %2473 = vmatpush1.msra.mxu0 %v2449
    %2474 = vmatprep.subr.mxu0 0.0
    %2475 = vmatpush1.msra.mxu0 %v2450
    %2476 = vmatprep.subr.mxu0 0.0
    %2477 = vmatpush1.msra.mxu0 %v2451
    %2478 = vmatprep.subr.mxu0 0.0
    %2479 = vmatpush1.msra.mxu0 0.0
    %2480 = vmatprep.subr.mxu0 0.0
    %2481 = vmatpush1.msra.mxu0 0.0
    %2482 = vmatprep.subr.mxu0 0.0
    %2483 = vmatpush1.msra.mxu0 0.0
    %2484 = vmatprep.subr.mxu0 0.0
    %2485 = vmatpush1.msra.mxu0 0.0
    %2486 = vmatprep.subr.mxu0 0.0
    %2487 = vmatpush1.msra.mxu0 0.0
    %2488 = vmatprep.subr.mxu0 0.0
    %2489 = vmatpush1.msra.mxu0 0.0
    %2490 = vmatprep.subr.mxu0 0.0
    %2491 = vmatpush1.msra.mxu0 0.0
    %2492 = vmatprep.subr.mxu0 0.0
    %2493 = vmatpush1.msra.mxu0 0.0
    %2494 = vmatprep.subr.mxu0 0.0
    %2495 = vmatpush1.msra.mxu0 0.0
    %2496 = vmatprep.subr.mxu0 0.0
    %2497 = vmatpush1.msra.mxu0 0.0
    %2498 = vmatprep.subr.mxu0 0.0
    %2499 = vmatpush1.msra.mxu0 0.0
    %2500 = vmatprep.subr.mxu0 0.0
    %2501 = vmatpush1.msra.mxu0 0.0
    %2502 = vmatprep.subr.mxu0 0.0
    %2503 = vmatpush1.msra.mxu0 0.0
    %2504 = vmatprep.subr.mxu0 0.0
    %2505 = vmatpush1.msra.mxu0 0.0
    %2506 = vmatprep.subr.mxu0 0.0
    %2507 = vmatpush1.msra.mxu0 0.0
    %2508 = vmatprep.subr.mxu0 0.0
    %2509 = vmatpush1.msra.mxu0 0.0
    %2510 = vmatprep.subr.mxu0 0.0
    %2511 = vmatpush1.msra.mxu0 0.0
    %2512 = vmatprep.subr.mxu0 0.0
    %2513 = vmatpush1.msra.mxu0 0.0
    %2514 = vmatprep.subr.mxu0 0.0
    %2515 = vmatpush1.msra.mxu0 0.0
    %2516 = vmatprep.subr.mxu0 0.0
    %2517 = vmatpush1.msra.mxu0 0.0
    %2518 = vmatprep.subr.mxu0 0.0
    %2519 = vmatpush1.msra.mxu0 0.0
    %2520 = vmatprep.subr.mxu0 0.0
    %2521 = vmatpush1.msra.mxu0 0.0
    %2522 = vmatprep.subr.mxu0 0.0
    %2523 = vmatpush1.msra.mxu0 0.0
    %2524 = vmatprep.subr.mxu0 0.0
    %2525 = vmatpush1.msra.mxu0 0.0
    %2526 = vmatprep.mubr.f32.mxu0 0.0
    %2527 = vmatmul.mubr.f32.gmra.mrb[0].mxu0 %v2460
    %v2528 = vpop.f32.mrb[0].mxu0
    %v2529 = vadd.f32 %v2457, %v2528
    %v2530 = vpop.f32.mrb[0].mxu0
    %2531 = vdwg.mxu0
    %vm2532 = vcmask 15360
    %2533 = vst.msk [vmem:[%s10] sm:$0xff] %vm2532, %v2529
    // Predicated region
    $region54: #{tpu_custom_call.1} parent=1 // pred_check
      _
    $region55: #{tpu_custom_call.1} parent=1 // pred_check_branch
      %2535 = sbr.rel (0) target = $region57
    $region56: #{tpu_custom_call.1} parent=1 // pred_region
      _
    $region57: #{tpu_custom_call.1} parent=1 // pred_fallthru
      _
    // Predicated region
    $region58: #{tpu_custom_call.1} parent=1 // pred_check
      _
    $region59: #{tpu_custom_call.1} parent=1 // pred_check_branch
      %2537 = sbr.rel (0) target = $region61
    $region60: #{tpu_custom_call.1} parent=1 // pred_region
      _
    $region61: #{tpu_custom_call.1} parent=1 // pred_fallthru
      _
    %2538 = vsyncpa [#allocation6], 1
    %2539 = vsyncpa [#allocation8], 1

</llo_original>
